<compile_context>
chip_gen: v7x
topology: tpu7x:2x2x1
jax: 0.10.0
libtpu: 0.0.40
codegen_flags: <defaults>
</compile_context>

<pallas_src>
import numpy as np

import jax
import jax.numpy as jnp
from jax.experimental import pallas as pl
from jax.experimental.pallas import tpu as pltpu


# --------------------------------------------------------------------------- #
#                                 kernel                                       #
# --------------------------------------------------------------------------- #
def _interleave_rows(x_even, x_odd):
    """Y[2i] = x_even[i], Y[2i+1] = x_odd[i], via tiny constant scatter matmuls."""
    h, n = x_even.shape
    rows = jax.lax.broadcasted_iota(jnp.int32, (2 * h, h), 0)
    cols = jax.lax.broadcasted_iota(jnp.int32, (2 * h, h), 1)
    e_even = (rows == 2 * cols).astype(jnp.float32)
    e_odd = (rows == 2 * cols + 1).astype(jnp.float32)
    return (jnp.dot(e_even, x_even, preferred_element_type=jnp.float32)
            + jnp.dot(e_odd, x_odd, preferred_element_type=jnp.float32))


def _decoder_kernel(x_ref, fcw_ref, fcb_ref,
                    m0_ref, b0_ref, m1_ref, b1_ref, m2_ref, b2_ref,
                    m3_ref, b3_ref, m4_ref, b4_ref, m5_ref, b5_ref,
                    o_ref,
                    s1, s2, s3, s4, s5):
    f32 = jnp.float32

    def dot(a, b):
        return jnp.dot(a, b, preferred_element_type=f32)

    # ---------------- FC + ReLU : (1,64) @ (64,128) ---------------- #
    h = jnp.maximum(dot(x_ref[0], fcw_ref[...]) + fcb_ref[...], 0.0)   # (1, 128)

    m_refs = (m0_ref, m1_ref, m2_ref, m3_ref, m4_ref, m5_ref)
    b_refs = (b0_ref, b1_ref, b2_ref, b3_ref, b4_ref, b5_ref)
    scratches = (None, s1, s2, s3, s4, s5)   # padded input scratch of layer li
    heights = (1, 2, 4, 8, 16, 32)           # spatial H (=W) of layer li's input

    for li in range(6):
        H = heights[li]
        m_ref = m_refs[li]
        b_row = b_refs[li][...]              # (1, 2W*Cout)

        if li == 0:
            # 1x1 input: the up/down shifted rows are the zero halo -> skip them.
            a_mid = h                                    # (1, 128)
            x0 = dot(a_mid, m_ref[1])                    # even output row
            x1 = dot(a_mid, m_ref[2])                    # odd output row
        else:
            s_in = scratches[li]                         # (H+2, 128), zero halo rows
            a_mid = s_in[1:H + 1, :]
            a_up = s_in[0:H, :]
            a_dn = s_in[2:H + 2, :]
            x0 = dot(a_mid, m_ref[1]) + dot(a_up, m_ref[3])   # even output rows
            x1 = dot(a_mid, m_ref[2]) + dot(a_dn, m_ref[0])   # odd output rows

        x0 = jnp.maximum(x0 + b_row, 0.0)
        x1 = jnp.maximum(x1 + b_row, 0.0)
        n_out = x0.shape[1]

        if li < 5:
            s_out = scratches[li + 1]                    # (2H+2, n_out)
            s_out[0:1, :] = jnp.zeros((1, n_out), f32)             # zero halo (top)
            s_out[2 * H + 1:2 * H + 2, :] = jnp.zeros((1, n_out), f32)  # halo (bottom)
            if H == 1:
                s_out[1:2, :] = x0
                s_out[2:3, :] = x1
            else:
                s_out[1:2 * H + 1, :] = _interleave_rows(x0, x1)
        else:
            # Final layer: Cout=1, so (2H, 2W*1) == the (64, 64) image itself.
            o_ref[0, 0, :, :] = _interleave_rows(x0, x1)


# --------------------------------------------------------------------------- #
#                               host wrapper                                   #
# --------------------------------------------------------------------------- #
def decoder_forward(packed, x):
    """x: (B, 64) -> NCHW (B, 1, 64, 64)."""
    B, in_dim = x.shape
    x3 = x.reshape(B, 1, in_dim)

    operands = [x3, packed["fc_w"], packed["fc_b"]]
    in_specs = [
        pl.BlockSpec((1, 1, in_dim), lambda i: (i, 0, 0)),
        pl.BlockSpec(packed["fc_w"].shape, lambda i: (0, 0)),
        pl.BlockSpec(packed["fc_b"].shape, lambda i: (0, 0)),
    ]
    for li in range(6):
        m = packed[f"M{li}"]
        b = packed[f"b{li}"]
        operands += [m, b]
        in_specs += [
            pl.BlockSpec(m.shape, lambda i: (0, 0, 0)),
            pl.BlockSpec(b.shape, lambda i: (0, 0)),
        ]

    return pl.pallas_call(
        _decoder_kernel,
        out_shape=jax.ShapeDtypeStruct((B, 1, 64, 64), jnp.float32),
        grid=(B,),
        in_specs=in_specs,
        out_specs=pl.BlockSpec((1, 1, 64, 64), lambda i: (i, 0, 0, 0)),
        scratch_shapes=[
            pltpu.VMEM((4, 128), jnp.float32),    # layer1 input (2+2, 2*1*64)
            pltpu.VMEM((6, 128), jnp.float32),    # layer2 input (4+2, 2*2*32)
            pltpu.VMEM((10, 128), jnp.float32),   # layer3 input (8+2, 2*4*16)
            pltpu.VMEM((18, 128), jnp.float32),   # layer4 input (16+2, 2*8*8)
            pltpu.VMEM((34, 128), jnp.float32),   # layer5 input (32+2, 2*16*4)
        ],
        compiler_params=pltpu.CompilerParams(dimension_semantics=("parallel",)),
    )(*operands)


# --------------------------------------------------------------------------- #
#                       parameters & weight repacking                          #
# --------------------------------------------------------------------------- #
_CHANS = [128, 64, 32, 16, 8, 4, 1]
_SPATIAL = [1, 2, 4, 8, 16, 32]


def init_params(key):
    """Deterministic synthetic init (kaiming-like scales, small random biases)."""
    params = {}
    k_fcw, k_fcb, key = jax.random.split(key, 3)
    params["fc_w"] = jax.random.normal(k_fcw, (64, 128), jnp.float32) * (2.0 / 64) ** 0.5
    params["fc_b"] = jax.random.normal(k_fcb, (1, 128), jnp.float32) * 0.05
    for li in range(6):
        cin, cout = _CHANS[li], _CHANS[li + 1]
        k_w, k_b, key = jax.random.split(key, 3)
        std = (2.0 / (cin * 16)) ** 0.5
        params[f"w{li}"] = jax.random.normal(k_w, (4, 4, cin, cout), jnp.float32) * std
        params[f"b{li}"] = jax.random.normal(k_b, (cout,), jnp.float32) * 0.05
    return params


def pack_params(params):
    """Fold each deconv's x-direction (taps + padding + interleave) into M_ky matrices."""
    packed = {"fc_w": params["fc_w"], "fc_b": params["fc_b"]}
    for li in range(6):
        w = params[f"w{li}"]                       # (4, 4, Cin, Cout)  HWIO
        b = params[f"b{li}"]                       # (Cout,)
        wi = _SPATIAL[li]
        cin, cout = _CHANS[li], _CHANS[li + 1]
        wo = 2 * wi
        j = np.arange(wi).reshape(1, wi, 1)
        n = np.arange(wo).reshape(1, 1, wo)
        k = np.arange(4).reshape(4, 1, 1)
        sel = (n == 2 * j - 1 + k).astype(np.float32)          # (4kw, wi, wo)
        m = jnp.einsum("kjn,ykio->yjino", jnp.asarray(sel), w)  # (4ky, wi, cin, wo, cout)
        packed[f"M{li}"] = m.reshape(4, wi * cin, wo * cout)
        packed[f"b{li}"] = jnp.tile(b, wo).reshape(1, wo * cout)
    return packed


# --------------------------------------------------------------------------- #
#              pure-JAX reference (validated sub-pixel decomposition)          #
# --------------------------------------------------------------------------- #
def _reference_forward(params, x):
    h = jnp.maximum(x @ params["fc_w"] + params["fc_b"], 0.0)     # (B, 128)
    B = x.shape[0]
    y = h.reshape(B, 1, 1, 128)                                   # NHWC
    for li in range(6):
        w = params[f"w{li}"]
        b = params[f"b{li}"]
        _, H, W, _ = y.shape
        cout = w.shape[-1]
        yp = jnp.pad(y, ((0, 0), (1, 1), (1, 1), (0, 0)))
        out = jnp.zeros((B, 2, 2, H, W, cout), jnp.float32)
        for py in range(2):
            for px in range(2):
                acc = jnp.zeros((B, H, W, cout), jnp.float32)
                for a in range(2):
                    for c in range(2):
                        ky, kx = 3 - 2 * a - py, 3 - 2 * c - px
                        patch = yp[:, a + py:a + py + H, c + px:c + px + W, :]
                        acc = acc + jnp.einsum("bhwi,io->bhwo", patch, w[ky, kx])
                out = out.at[:, py, px].set(jnp.maximum(acc + b, 0.0))
        y = out.transpose(0, 3, 1, 4, 2, 5).reshape(B, 2 * H, 2 * W, cout)
    return y.transpose(0, 3, 1, 2)                                # NCHW


# --------------------------------------------------------------------------- #
if __name__ == "__main__":
    key = jax.random.PRNGKey(0)
    kx, kp = jax.random.split(key)
    params = init_params(kp)
    x = jax.random.normal(kx, (2, 64), jnp.float32)    # batch=2, input_dim=64

    packed = pack_params(params)
    y = jax.jit(decoder_forward)(packed, x)
    y = jax.block_until_ready(y)

    assert y.shape == (2, 1, 64, 64), y.shape
    assert bool(jnp.all(y >= 0.0))                     # final ReLU

    y_ref = jax.jit(_reference_forward)(params, x)
    np.testing.assert_allclose(np.asarray(y), np.asarray(y_ref), rtol=1e-3, atol=1e-3)
    print("KERNEL_OK")
</pallas_src>

<mosaic_0001>
module attributes {stable_mosaic.version = 11 : i64} {
  func.func @_decoder_kernel(%arg0: i32, %arg1: memref<1x1x64xf32, #tpu.memory_space<vmem>>, %arg2: memref<64x128xf32, #tpu.memory_space<vmem>>, %arg3: memref<1x128xf32, #tpu.memory_space<vmem>>, %arg4: memref<4x128x128xf32, #tpu.memory_space<vmem>>, %arg5: memref<1x128xf32, #tpu.memory_space<vmem>>, %arg6: memref<4x128x128xf32, #tpu.memory_space<vmem>>, %arg7: memref<1x128xf32, #tpu.memory_space<vmem>>, %arg8: memref<4x128x128xf32, #tpu.memory_space<vmem>>, %arg9: memref<1x128xf32, #tpu.memory_space<vmem>>, %arg10: memref<4x128x128xf32, #tpu.memory_space<vmem>>, %arg11: memref<1x128xf32, #tpu.memory_space<vmem>>, %arg12: memref<4x128x128xf32, #tpu.memory_space<vmem>>, %arg13: memref<1x128xf32, #tpu.memory_space<vmem>>, %arg14: memref<4x128x64xf32, #tpu.memory_space<vmem>>, %arg15: memref<1x64xf32, #tpu.memory_space<vmem>>, %arg16: memref<1x1x64x64xf32, #tpu.memory_space<vmem>>, %arg17: memref<4x128xf32, #tpu.memory_space<vmem>>, %arg18: memref<6x128xf32, #tpu.memory_space<vmem>>, %arg19: memref<10x128xf32, #tpu.memory_space<vmem>>, %arg20: memref<18x128xf32, #tpu.memory_space<vmem>>, %arg21: memref<34x128xf32, #tpu.memory_space<vmem>>) attributes {dimension_semantics = [#tpu.dimension_semantics<parallel>], iteration_bounds = array<i64: 2>, scalar_prefetch = 0 : i64, scratch_operands = 5 : i64, tpu.core_type = #tpu.core_type<tc>, window_params = [{transform_indices = @transform_0, window_bounds = array<i64: 1, 1, 64>}, {pipeline_mode = #tpu.pipeline_mode<synchronous>, transform_indices = @transform_1, window_bounds = array<i64: 64, 128>}, {pipeline_mode = #tpu.pipeline_mode<synchronous>, transform_indices = @transform_2, window_bounds = array<i64: 1, 128>}, {pipeline_mode = #tpu.pipeline_mode<synchronous>, transform_indices = @transform_3, window_bounds = array<i64: 4, 128, 128>}, {pipeline_mode = #tpu.pipeline_mode<synchronous>, transform_indices = @transform_4, window_bounds = array<i64: 1, 128>}, {pipeline_mode = #tpu.pipeline_mode<synchronous>, transform_indices = @transform_5, window_bounds = array<i64: 4, 128, 128>}, {pipeline_mode = #tpu.pipeline_mode<synchronous>, transform_indices = @transform_6, window_bounds = array<i64: 1, 128>}, {pipeline_mode = #tpu.pipeline_mode<synchronous>, transform_indices = @transform_7, window_bounds = array<i64: 4, 128, 128>}, {pipeline_mode = #tpu.pipeline_mode<synchronous>, transform_indices = @transform_8, window_bounds = array<i64: 1, 128>}, {pipeline_mode = #tpu.pipeline_mode<synchronous>, transform_indices = @transform_9, window_bounds = array<i64: 4, 128, 128>}, {pipeline_mode = #tpu.pipeline_mode<synchronous>, transform_indices = @transform_10, window_bounds = array<i64: 1, 128>}, {pipeline_mode = #tpu.pipeline_mode<synchronous>, transform_indices = @transform_11, window_bounds = array<i64: 4, 128, 128>}, {pipeline_mode = #tpu.pipeline_mode<synchronous>, transform_indices = @transform_12, window_bounds = array<i64: 1, 128>}, {pipeline_mode = #tpu.pipeline_mode<synchronous>, transform_indices = @transform_13, window_bounds = array<i64: 4, 128, 64>}, {pipeline_mode = #tpu.pipeline_mode<synchronous>, transform_indices = @transform_14, window_bounds = array<i64: 1, 64>}, {transform_indices = @transform_15, window_bounds = array<i64: 1, 1, 64, 64>}]} {
    %c0 = arith.constant 0 : index
    %c0_0 = arith.constant 0 : index
    %c0_1 = arith.constant 0 : index
    %0 = vector.load %arg1[%c0, %c0_0, %c0_1] : memref<1x1x64xf32, #tpu.memory_space<vmem>>, vector<1x1x64xf32>
    %1 = vector.shape_cast %0 : vector<1x1x64xf32> to vector<1x64xf32>
    %c0_2 = arith.constant 0 : index
    %c0_3 = arith.constant 0 : index
    %2 = vector.load %arg2[%c0_2, %c0_3] : memref<64x128xf32, #tpu.memory_space<vmem>>, vector<64x128xf32>
    %cst = arith.constant dense<0.000000e+00> : vector<1x128xf32>
    %3 = tpu.matmul %1, %2, %cst {dimension_numbers = #tpu.dot_dimension_numbers<[1], [0], [0], [1], [0, 0, 1, 1], [], []>} : vector<1x64xf32>, vector<64x128xf32>, vector<1x128xf32> -> vector<1x128xf32>
    %c0_4 = arith.constant 0 : index
    %c0_5 = arith.constant 0 : index
    %4 = vector.load %arg3[%c0_4, %c0_5] : memref<1x128xf32, #tpu.memory_space<vmem>>, vector<1x128xf32>
    %5 = arith.addf %3, %4 : vector<1x128xf32>
    %cst_6 = arith.constant 0.000000e+00 : f32
    %6 = vector.broadcast %cst_6 : f32 to vector<1x128xf32>
    %7 = arith.maximumf %5, %6 : vector<1x128xf32>
    %c0_7 = arith.constant 0 : index
    %c0_8 = arith.constant 0 : index
    %8 = vector.load %arg5[%c0_7, %c0_8] : memref<1x128xf32, #tpu.memory_space<vmem>>, vector<1x128xf32>
    %c1 = arith.constant 1 : index
    %c0_9 = arith.constant 0 : index
    %c0_10 = arith.constant 0 : index
    %9 = vector.load %arg4[%c1, %c0_9, %c0_10] : memref<4x128x128xf32, #tpu.memory_space<vmem>>, vector<1x128x128xf32>
    %10 = vector.shape_cast %9 : vector<1x128x128xf32> to vector<128x128xf32>
    %cst_11 = arith.constant dense<0.000000e+00> : vector<1x128xf32>
    %11 = tpu.matmul %7, %10, %cst_11 {dimension_numbers = #tpu.dot_dimension_numbers<[1], [0], [0], [1], [0, 0, 1, 1], [], []>} : vector<1x128xf32>, vector<128x128xf32>, vector<1x128xf32> -> vector<1x128xf32>
    %c2 = arith.constant 2 : index
    %c0_12 = arith.constant 0 : index
    %c0_13 = arith.constant 0 : index
    %12 = vector.load %arg4[%c2, %c0_12, %c0_13] : memref<4x128x128xf32, #tpu.memory_space<vmem>>, vector<1x128x128xf32>
    %13 = vector.shape_cast %12 : vector<1x128x128xf32> to vector<128x128xf32>
    %cst_14 = arith.constant dense<0.000000e+00> : vector<1x128xf32>
    %14 = tpu.matmul %7, %13, %cst_14 {dimension_numbers = #tpu.dot_dimension_numbers<[1], [0], [0], [1], [0, 0, 1, 1], [], []>} : vector<1x128xf32>, vector<128x128xf32>, vector<1x128xf32> -> vector<1x128xf32>
    %15 = arith.addf %11, %8 : vector<1x128xf32>
    %cst_15 = arith.constant 0.000000e+00 : f32
    %16 = vector.broadcast %cst_15 : f32 to vector<1x128xf32>
    %17 = arith.maximumf %15, %16 : vector<1x128xf32>
    %18 = arith.addf %14, %8 : vector<1x128xf32>
    %cst_16 = arith.constant 0.000000e+00 : f32
    %19 = vector.broadcast %cst_16 : f32 to vector<1x128xf32>
    %20 = arith.maximumf %18, %19 : vector<1x128xf32>
    %cst_17 = arith.constant 0.000000e+00 : f32
    %21 = vector.broadcast %cst_17 : f32 to vector<1x128xf32>
    %c0_18 = arith.constant 0 : index
    %c0_19 = arith.constant 0 : index
    %22 = vector.load %arg17[%c0_18, %c0_19] : memref<4x128xf32, #tpu.memory_space<vmem>>, vector<1x128xf32>
    tpu.vector_store %arg17[%c0_18, %c0_19], %21 {strides = array<i32>} : memref<4x128xf32, #tpu.memory_space<vmem>>, vector<1x128xf32>,
    %cst_20 = arith.constant 0.000000e+00 : f32
    %23 = vector.broadcast %cst_20 : f32 to vector<1x128xf32>
    %c3 = arith.constant 3 : index
    %c0_21 = arith.constant 0 : index
    %24 = vector.load %arg17[%c3, %c0_21] : memref<4x128xf32, #tpu.memory_space<vmem>>, vector<1x128xf32>
    tpu.vector_store %arg17[%c3, %c0_21], %23 {strides = array<i32>} : memref<4x128xf32, #tpu.memory_space<vmem>>, vector<1x128xf32>,
    %c1_22 = arith.constant 1 : index
    %c0_23 = arith.constant 0 : index
    %25 = vector.load %arg17[%c1_22, %c0_23] : memref<4x128xf32, #tpu.memory_space<vmem>>, vector<1x128xf32>
    tpu.vector_store %arg17[%c1_22, %c0_23], %17 {strides = array<i32>} : memref<4x128xf32, #tpu.memory_space<vmem>>, vector<1x128xf32>,
    %c2_24 = arith.constant 2 : index
    %c0_25 = arith.constant 0 : index
    %26 = vector.load %arg17[%c2_24, %c0_25] : memref<4x128xf32, #tpu.memory_space<vmem>>, vector<1x128xf32>
    tpu.vector_store %arg17[%c2_24, %c0_25], %20 {strides = array<i32>} : memref<4x128xf32, #tpu.memory_space<vmem>>, vector<1x128xf32>,
    %c0_26 = arith.constant 0 : index
    %c0_27 = arith.constant 0 : index
    %27 = vector.load %arg7[%c0_26, %c0_27] : memref<1x128xf32, #tpu.memory_space<vmem>>, vector<1x128xf32>
    %c1_28 = arith.constant 1 : index
    %c0_29 = arith.constant 0 : index
    %28 = vector.load %arg17[%c1_28, %c0_29] : memref<4x128xf32, #tpu.memory_space<vmem>>, vector<2x128xf32>
    %c0_30 = arith.constant 0 : index
    %c0_31 = arith.constant 0 : index
    %29 = vector.load %arg17[%c0_30, %c0_31] : memref<4x128xf32, #tpu.memory_space<vmem>>, vector<2x128xf32>
    %c2_32 = arith.constant 2 : index
    %c0_33 = arith.constant 0 : index
    %30 = vector.load %arg17[%c2_32, %c0_33] : memref<4x128xf32, #tpu.memory_space<vmem>>, vector<2x128xf32>
    %c1_34 = arith.constant 1 : index
    %c0_35 = arith.constant 0 : index
    %c0_36 = arith.constant 0 : index
    %31 = vector.load %arg6[%c1_34, %c0_35, %c0_36] : memref<4x128x128xf32, #tpu.memory_space<vmem>>, vector<1x128x128xf32>
    %32 = vector.shape_cast %31 : vector<1x128x128xf32> to vector<128x128xf32>
    %cst_37 = arith.constant dense<0.000000e+00> : vector<2x128xf32>
    %33 = tpu.matmul %28, %32, %cst_37 {dimension_numbers = #tpu.dot_dimension_numbers<[1], [0], [0], [1], [0, 0, 1, 1], [], []>} : vector<2x128xf32>, vector<128x128xf32>, vector<2x128xf32> -> vector<2x128xf32>
    %c3_38 = arith.constant 3 : index
    %c0_39 = arith.constant 0 : index
    %c0_40 = arith.constant 0 : index
    %34 = vector.load %arg6[%c3_38, %c0_39, %c0_40] : memref<4x128x128xf32, #tpu.memory_space<vmem>>, vector<1x128x128xf32>
    %35 = vector.shape_cast %34 : vector<1x128x128xf32> to vector<128x128xf32>
    %cst_41 = arith.constant dense<0.000000e+00> : vector<2x128xf32>
    %36 = tpu.matmul %29, %35, %cst_41 {dimension_numbers = #tpu.dot_dimension_numbers<[1], [0], [0], [1], [0, 0, 1, 1], [], []>} : vector<2x128xf32>, vector<128x128xf32>, vector<2x128xf32> -> vector<2x128xf32>
    %37 = arith.addf %33, %36 : vector<2x128xf32>
    %c2_42 = arith.constant 2 : index
    %c0_43 = arith.constant 0 : index
    %c0_44 = arith.constant 0 : index
    %38 = vector.load %arg6[%c2_42, %c0_43, %c0_44] : memref<4x128x128xf32, #tpu.memory_space<vmem>>, vector<1x128x128xf32>
    %39 = vector.shape_cast %38 : vector<1x128x128xf32> to vector<128x128xf32>
    %cst_45 = arith.constant dense<0.000000e+00> : vector<2x128xf32>
    %40 = tpu.matmul %28, %39, %cst_45 {dimension_numbers = #tpu.dot_dimension_numbers<[1], [0], [0], [1], [0, 0, 1, 1], [], []>} : vector<2x128xf32>, vector<128x128xf32>, vector<2x128xf32> -> vector<2x128xf32>
    %c0_46 = arith.constant 0 : index
    %c0_47 = arith.constant 0 : index
    %c0_48 = arith.constant 0 : index
    %41 = vector.load %arg6[%c0_46, %c0_47, %c0_48] : memref<4x128x128xf32, #tpu.memory_space<vmem>>, vector<1x128x128xf32>
    %42 = vector.shape_cast %41 : vector<1x128x128xf32> to vector<128x128xf32>
    %cst_49 = arith.constant dense<0.000000e+00> : vector<2x128xf32>
    %43 = tpu.matmul %30, %42, %cst_49 {dimension_numbers = #tpu.dot_dimension_numbers<[1], [0], [0], [1], [0, 0, 1, 1], [], []>} : vector<2x128xf32>, vector<128x128xf32>, vector<2x128xf32> -> vector<2x128xf32>
    %44 = arith.addf %40, %43 : vector<2x128xf32>
    %45 = vector.broadcast %27 : vector<1x128xf32> to vector<2x128xf32>
    %46 = arith.addf %37, %45 : vector<2x128xf32>
    %cst_50 = arith.constant 0.000000e+00 : f32
    %47 = vector.broadcast %cst_50 : f32 to vector<2x128xf32>
    %48 = arith.maximumf %46, %47 : vector<2x128xf32>
    %49 = vector.broadcast %27 : vector<1x128xf32> to vector<2x128xf32>
    %50 = arith.addf %44, %49 : vector<2x128xf32>
    %cst_51 = arith.constant 0.000000e+00 : f32
    %51 = vector.broadcast %cst_51 : f32 to vector<2x128xf32>
    %52 = arith.maximumf %50, %51 : vector<2x128xf32>
    %cst_52 = arith.constant 0.000000e+00 : f32
    %53 = vector.broadcast %cst_52 : f32 to vector<1x128xf32>
    %c0_53 = arith.constant 0 : index
    %c0_54 = arith.constant 0 : index
    %54 = vector.load %arg18[%c0_53, %c0_54] : memref<6x128xf32, #tpu.memory_space<vmem>>, vector<1x128xf32>
    tpu.vector_store %arg18[%c0_53, %c0_54], %53 {strides = array<i32>} : memref<6x128xf32, #tpu.memory_space<vmem>>, vector<1x128xf32>,
    %cst_55 = arith.constant 0.000000e+00 : f32
    %55 = vector.broadcast %cst_55 : f32 to vector<1x128xf32>
    %c5 = arith.constant 5 : index
    %c0_56 = arith.constant 0 : index
    %56 = vector.load %arg18[%c5, %c0_56] : memref<6x128xf32, #tpu.memory_space<vmem>>, vector<1x128xf32>
    tpu.vector_store %arg18[%c5, %c0_56], %55 {strides = array<i32>} : memref<6x128xf32, #tpu.memory_space<vmem>>, vector<1x128xf32>,
    %57 = tpu.iota {dimensions = array<i32: 0>} : vector<4x2xi32>
    %58 = tpu.iota {dimensions = array<i32: 1>} : vector<4x2xi32>
    %c2_i32 = arith.constant 2 : i32
    %59 = vector.broadcast %c2_i32 : i32 to vector<4x2xi32>
    %60 = arith.muli %59, %58 : vector<4x2xi32>
    %61 = arith.cmpi eq, %57, %60 : vector<4x2xi32>
    %62 = arith.extui %61 : vector<4x2xi1> to vector<4x2xi32>
    %63 = arith.sitofp %62 : vector<4x2xi32> to vector<4x2xf32>
    %c2_i32_57 = arith.constant 2 : i32
    %64 = vector.broadcast %c2_i32_57 : i32 to vector<4x2xi32>
    %65 = arith.muli %64, %58 : vector<4x2xi32>
    %c1_i32 = arith.constant 1 : i32
    %66 = vector.broadcast %c1_i32 : i32 to vector<4x2xi32>
    %67 = arith.addi %65, %66 : vector<4x2xi32>
    %68 = arith.cmpi eq, %57, %67 : vector<4x2xi32>
    %69 = arith.extui %68 : vector<4x2xi1> to vector<4x2xi32>
    %70 = arith.sitofp %69 : vector<4x2xi32> to vector<4x2xf32>
    %cst_58 = arith.constant dense<0.000000e+00> : vector<4x128xf32>
    %71 = tpu.matmul %63, %48, %cst_58 {dimension_numbers = #tpu.dot_dimension_numbers<[1], [0], [0], [1], [0, 0, 1, 1], [], []>} : vector<4x2xf32>, vector<2x128xf32>, vector<4x128xf32> -> vector<4x128xf32>
    %cst_59 = arith.constant dense<0.000000e+00> : vector<4x128xf32>
    %72 = tpu.matmul %70, %52, %cst_59 {dimension_numbers = #tpu.dot_dimension_numbers<[1], [0], [0], [1], [0, 0, 1, 1], [], []>} : vector<4x2xf32>, vector<2x128xf32>, vector<4x128xf32> -> vector<4x128xf32>
    %73 = arith.addf %71, %72 : vector<4x128xf32>
    %c1_60 = arith.constant 1 : index
    %c0_61 = arith.constant 0 : index
    %74 = vector.load %arg18[%c1_60, %c0_61] : memref<6x128xf32, #tpu.memory_space<vmem>>, vector<4x128xf32>
    tpu.vector_store %arg18[%c1_60, %c0_61], %73 {strides = array<i32>} : memref<6x128xf32, #tpu.memory_space<vmem>>, vector<4x128xf32>,
    %c0_62 = arith.constant 0 : index
    %c0_63 = arith.constant 0 : index
    %75 = vector.load %arg9[%c0_62, %c0_63] : memref<1x128xf32, #tpu.memory_space<vmem>>, vector<1x128xf32>
    %c1_64 = arith.constant 1 : index
    %c0_65 = arith.constant 0 : index
    %76 = vector.load %arg18[%c1_64, %c0_65] : memref<6x128xf32, #tpu.memory_space<vmem>>, vector<4x128xf32>
    %c0_66 = arith.constant 0 : index
    %c0_67 = arith.constant 0 : index
    %77 = vector.load %arg18[%c0_66, %c0_67] : memref<6x128xf32, #tpu.memory_space<vmem>>, vector<4x128xf32>
    %c2_68 = arith.constant 2 : index
    %c0_69 = arith.constant 0 : index
    %78 = vector.load %arg18[%c2_68, %c0_69] : memref<6x128xf32, #tpu.memory_space<vmem>>, vector<4x128xf32>
    %c1_70 = arith.constant 1 : index
    %c0_71 = arith.constant 0 : index
    %c0_72 = arith.constant 0 : index
    %79 = vector.load %arg8[%c1_70, %c0_71, %c0_72] : memref<4x128x128xf32, #tpu.memory_space<vmem>>, vector<1x128x128xf32>
    %80 = vector.shape_cast %79 : vector<1x128x128xf32> to vector<128x128xf32>
    %cst_73 = arith.constant dense<0.000000e+00> : vector<4x128xf32>
    %81 = tpu.matmul %76, %80, %cst_73 {dimension_numbers = #tpu.dot_dimension_numbers<[1], [0], [0], [1], [0, 0, 1, 1], [], []>} : vector<4x128xf32>, vector<128x128xf32>, vector<4x128xf32> -> vector<4x128xf32>
    %c3_74 = arith.constant 3 : index
    %c0_75 = arith.constant 0 : index
    %c0_76 = arith.constant 0 : index
    %82 = vector.load %arg8[%c3_74, %c0_75, %c0_76] : memref<4x128x128xf32, #tpu.memory_space<vmem>>, vector<1x128x128xf32>
    %83 = vector.shape_cast %82 : vector<1x128x128xf32> to vector<128x128xf32>
    %cst_77 = arith.constant dense<0.000000e+00> : vector<4x128xf32>
    %84 = tpu.matmul %77, %83, %cst_77 {dimension_numbers = #tpu.dot_dimension_numbers<[1], [0], [0], [1], [0, 0, 1, 1], [], []>} : vector<4x128xf32>, vector<128x128xf32>, vector<4x128xf32> -> vector<4x128xf32>
    %85 = arith.addf %81, %84 : vector<4x128xf32>
    %c2_78 = arith.constant 2 : index
    %c0_79 = arith.constant 0 : index
    %c0_80 = arith.constant 0 : index
    %86 = vector.load %arg8[%c2_78, %c0_79, %c0_80] : memref<4x128x128xf32, #tpu.memory_space<vmem>>, vector<1x128x128xf32>
    %87 = vector.shape_cast %86 : vector<1x128x128xf32> to vector<128x128xf32>
    %cst_81 = arith.constant dense<0.000000e+00> : vector<4x128xf32>
    %88 = tpu.matmul %76, %87, %cst_81 {dimension_numbers = #tpu.dot_dimension_numbers<[1], [0], [0], [1], [0, 0, 1, 1], [], []>} : vector<4x128xf32>, vector<128x128xf32>, vector<4x128xf32> -> vector<4x128xf32>
    %c0_82 = arith.constant 0 : index
    %c0_83 = arith.constant 0 : index
    %c0_84 = arith.constant 0 : index
    %89 = vector.load %arg8[%c0_82, %c0_83, %c0_84] : memref<4x128x128xf32, #tpu.memory_space<vmem>>, vector<1x128x128xf32>
    %90 = vector.shape_cast %89 : vector<1x128x128xf32> to vector<128x128xf32>
    %cst_85 = arith.constant dense<0.000000e+00> : vector<4x128xf32>
    %91 = tpu.matmul %78, %90, %cst_85 {dimension_numbers = #tpu.dot_dimension_numbers<[1], [0], [0], [1], [0, 0, 1, 1], [], []>} : vector<4x128xf32>, vector<128x128xf32>, vector<4x128xf32> -> vector<4x128xf32>
    %92 = arith.addf %88, %91 : vector<4x128xf32>
    %93 = vector.broadcast %75 : vector<1x128xf32> to vector<4x128xf32>
    %94 = arith.addf %85, %93 : vector<4x128xf32>
    %cst_86 = arith.constant 0.000000e+00 : f32
    %95 = vector.broadcast %cst_86 : f32 to vector<4x128xf32>
    %96 = arith.maximumf %94, %95 : vector<4x128xf32>
    %97 = vector.broadcast %75 : vector<1x128xf32> to vector<4x128xf32>
    %98 = arith.addf %92, %97 : vector<4x128xf32>
    %cst_87 = arith.constant 0.000000e+00 : f32
    %99 = vector.broadcast %cst_87 : f32 to vector<4x128xf32>
    %100 = arith.maximumf %98, %99 : vector<4x128xf32>
    %cst_88 = arith.constant 0.000000e+00 : f32
    %101 = vector.broadcast %cst_88 : f32 to vector<1x128xf32>
    %c0_89 = arith.constant 0 : index
    %c0_90 = arith.constant 0 : index
    %102 = vector.load %arg19[%c0_89, %c0_90] : memref<10x128xf32, #tpu.memory_space<vmem>>, vector<1x128xf32>
    tpu.vector_store %arg19[%c0_89, %c0_90], %101 {strides = array<i32>} : memref<10x128xf32, #tpu.memory_space<vmem>>, vector<1x128xf32>,
    %cst_91 = arith.constant 0.000000e+00 : f32
    %103 = vector.broadcast %cst_91 : f32 to vector<1x128xf32>
    %c9 = arith.constant 9 : index
    %c0_92 = arith.constant 0 : index
    %104 = vector.load %arg19[%c9, %c0_92] : memref<10x128xf32, #tpu.memory_space<vmem>>, vector<1x128xf32>
    tpu.vector_store %arg19[%c9, %c0_92], %103 {strides = array<i32>} : memref<10x128xf32, #tpu.memory_space<vmem>>, vector<1x128xf32>,
    %105 = tpu.iota {dimensions = array<i32: 0>} : vector<8x4xi32>
    %106 = tpu.iota {dimensions = array<i32: 1>} : vector<8x4xi32>
    %c2_i32_93 = arith.constant 2 : i32
    %107 = vector.broadcast %c2_i32_93 : i32 to vector<8x4xi32>
    %108 = arith.muli %107, %106 : vector<8x4xi32>
    %109 = arith.cmpi eq, %105, %108 : vector<8x4xi32>
    %110 = arith.extui %109 : vector<8x4xi1> to vector<8x4xi32>
    %111 = arith.sitofp %110 : vector<8x4xi32> to vector<8x4xf32>
    %c2_i32_94 = arith.constant 2 : i32
    %112 = vector.broadcast %c2_i32_94 : i32 to vector<8x4xi32>
    %113 = arith.muli %112, %106 : vector<8x4xi32>
    %c1_i32_95 = arith.constant 1 : i32
    %114 = vector.broadcast %c1_i32_95 : i32 to vector<8x4xi32>
    %115 = arith.addi %113, %114 : vector<8x4xi32>
    %116 = arith.cmpi eq, %105, %115 : vector<8x4xi32>
    %117 = arith.extui %116 : vector<8x4xi1> to vector<8x4xi32>
    %118 = arith.sitofp %117 : vector<8x4xi32> to vector<8x4xf32>
    %cst_96 = arith.constant dense<0.000000e+00> : vector<8x128xf32>
    %119 = tpu.matmul %111, %96, %cst_96 {dimension_numbers = #tpu.dot_dimension_numbers<[1], [0], [0], [1], [0, 0, 1, 1], [], []>} : vector<8x4xf32>, vector<4x128xf32>, vector<8x128xf32> -> vector<8x128xf32>
    %cst_97 = arith.constant dense<0.000000e+00> : vector<8x128xf32>
    %120 = tpu.matmul %118, %100, %cst_97 {dimension_numbers = #tpu.dot_dimension_numbers<[1], [0], [0], [1], [0, 0, 1, 1], [], []>} : vector<8x4xf32>, vector<4x128xf32>, vector<8x128xf32> -> vector<8x128xf32>
    %121 = arith.addf %119, %120 : vector<8x128xf32>
    %c1_98 = arith.constant 1 : index
    %c0_99 = arith.constant 0 : index
    %122 = vector.load %arg19[%c1_98, %c0_99] : memref<10x128xf32, #tpu.memory_space<vmem>>, vector<8x128xf32>
    tpu.vector_store %arg19[%c1_98, %c0_99], %121 {strides = array<i32>} : memref<10x128xf32, #tpu.memory_space<vmem>>, vector<8x128xf32>,
    %c0_100 = arith.constant 0 : index
    %c0_101 = arith.constant 0 : index
    %123 = vector.load %arg11[%c0_100, %c0_101] : memref<1x128xf32, #tpu.memory_space<vmem>>, vector<1x128xf32>
    %c1_102 = arith.constant 1 : index
    %c0_103 = arith.constant 0 : index
    %124 = vector.load %arg19[%c1_102, %c0_103] : memref<10x128xf32, #tpu.memory_space<vmem>>, vector<8x128xf32>
    %c0_104 = arith.constant 0 : index
    %c0_105 = arith.constant 0 : index
    %125 = vector.load %arg19[%c0_104, %c0_105] : memref<10x128xf32, #tpu.memory_space<vmem>>, vector<8x128xf32>
    %c2_106 = arith.constant 2 : index
    %c0_107 = arith.constant 0 : index
    %126 = vector.load %arg19[%c2_106, %c0_107] : memref<10x128xf32, #tpu.memory_space<vmem>>, vector<8x128xf32>
    %c1_108 = arith.constant 1 : index
    %c0_109 = arith.constant 0 : index
    %c0_110 = arith.constant 0 : index
    %127 = vector.load %arg10[%c1_108, %c0_109, %c0_110] : memref<4x128x128xf32, #tpu.memory_space<vmem>>, vector<1x128x128xf32>
    %128 = vector.shape_cast %127 : vector<1x128x128xf32> to vector<128x128xf32>
    %cst_111 = arith.constant dense<0.000000e+00> : vector<8x128xf32>
    %129 = tpu.matmul %124, %128, %cst_111 {dimension_numbers = #tpu.dot_dimension_numbers<[1], [0], [0], [1], [0, 0, 1, 1], [], []>} : vector<8x128xf32>, vector<128x128xf32>, vector<8x128xf32> -> vector<8x128xf32>
    %c3_112 = arith.constant 3 : index
    %c0_113 = arith.constant 0 : index
    %c0_114 = arith.constant 0 : index
    %130 = vector.load %arg10[%c3_112, %c0_113, %c0_114] : memref<4x128x128xf32, #tpu.memory_space<vmem>>, vector<1x128x128xf32>
    %131 = vector.shape_cast %130 : vector<1x128x128xf32> to vector<128x128xf32>
    %cst_115 = arith.constant dense<0.000000e+00> : vector<8x128xf32>
    %132 = tpu.matmul %125, %131, %cst_115 {dimension_numbers = #tpu.dot_dimension_numbers<[1], [0], [0], [1], [0, 0, 1, 1], [], []>} : vector<8x128xf32>, vector<128x128xf32>, vector<8x128xf32> -> vector<8x128xf32>
    %133 = arith.addf %129, %132 : vector<8x128xf32>
    %c2_116 = arith.constant 2 : index
    %c0_117 = arith.constant 0 : index
    %c0_118 = arith.constant 0 : index
    %134 = vector.load %arg10[%c2_116, %c0_117, %c0_118] : memref<4x128x128xf32, #tpu.memory_space<vmem>>, vector<1x128x128xf32>
    %135 = vector.shape_cast %134 : vector<1x128x128xf32> to vector<128x128xf32>
    %cst_119 = arith.constant dense<0.000000e+00> : vector<8x128xf32>
    %136 = tpu.matmul %124, %135, %cst_119 {dimension_numbers = #tpu.dot_dimension_numbers<[1], [0], [0], [1], [0, 0, 1, 1], [], []>} : vector<8x128xf32>, vector<128x128xf32>, vector<8x128xf32> -> vector<8x128xf32>
    %c0_120 = arith.constant 0 : index
    %c0_121 = arith.constant 0 : index
    %c0_122 = arith.constant 0 : index
    %137 = vector.load %arg10[%c0_120, %c0_121, %c0_122] : memref<4x128x128xf32, #tpu.memory_space<vmem>>, vector<1x128x128xf32>
    %138 = vector.shape_cast %137 : vector<1x128x128xf32> to vector<128x128xf32>
    %cst_123 = arith.constant dense<0.000000e+00> : vector<8x128xf32>
    %139 = tpu.matmul %126, %138, %cst_123 {dimension_numbers = #tpu.dot_dimension_numbers<[1], [0], [0], [1], [0, 0, 1, 1], [], []>} : vector<8x128xf32>, vector<128x128xf32>, vector<8x128xf32> -> vector<8x128xf32>
    %140 = arith.addf %136, %139 : vector<8x128xf32>
    %141 = vector.broadcast %123 : vector<1x128xf32> to vector<8x128xf32>
    %142 = arith.addf %133, %141 : vector<8x128xf32>
    %cst_124 = arith.constant 0.000000e+00 : f32
    %143 = vector.broadcast %cst_124 : f32 to vector<8x128xf32>
    %144 = arith.maximumf %142, %143 : vector<8x128xf32>
    %145 = vector.broadcast %123 : vector<1x128xf32> to vector<8x128xf32>
    %146 = arith.addf %140, %145 : vector<8x128xf32>
    %cst_125 = arith.constant 0.000000e+00 : f32
    %147 = vector.broadcast %cst_125 : f32 to vector<8x128xf32>
    %148 = arith.maximumf %146, %147 : vector<8x128xf32>
    %cst_126 = arith.constant 0.000000e+00 : f32
    %149 = vector.broadcast %cst_126 : f32 to vector<1x128xf32>
    %c0_127 = arith.constant 0 : index
    %c0_128 = arith.constant 0 : index
    %150 = vector.load %arg20[%c0_127, %c0_128] : memref<18x128xf32, #tpu.memory_space<vmem>>, vector<1x128xf32>
    tpu.vector_store %arg20[%c0_127, %c0_128], %149 {strides = array<i32>} : memref<18x128xf32, #tpu.memory_space<vmem>>, vector<1x128xf32>,
    %cst_129 = arith.constant 0.000000e+00 : f32
    %151 = vector.broadcast %cst_129 : f32 to vector<1x128xf32>
    %c17 = arith.constant 17 : index
    %c0_130 = arith.constant 0 : index
    %152 = vector.load %arg20[%c17, %c0_130] : memref<18x128xf32, #tpu.memory_space<vmem>>, vector<1x128xf32>
    tpu.vector_store %arg20[%c17, %c0_130], %151 {strides = array<i32>} : memref<18x128xf32, #tpu.memory_space<vmem>>, vector<1x128xf32>,
    %153 = tpu.iota {dimensions = array<i32: 0>} : vector<16x8xi32>
    %154 = tpu.iota {dimensions = array<i32: 1>} : vector<16x8xi32>
    %c2_i32_131 = arith.constant 2 : i32
    %155 = vector.broadcast %c2_i32_131 : i32 to vector<16x8xi32>
    %156 = arith.muli %155, %154 : vector<16x8xi32>
    %157 = arith.cmpi eq, %153, %156 : vector<16x8xi32>
    %158 = arith.extui %157 : vector<16x8xi1> to vector<16x8xi32>
    %159 = arith.sitofp %158 : vector<16x8xi32> to vector<16x8xf32>
    %c2_i32_132 = arith.constant 2 : i32
    %160 = vector.broadcast %c2_i32_132 : i32 to vector<16x8xi32>
    %161 = arith.muli %160, %154 : vector<16x8xi32>
    %c1_i32_133 = arith.constant 1 : i32
    %162 = vector.broadcast %c1_i32_133 : i32 to vector<16x8xi32>
    %163 = arith.addi %161, %162 : vector<16x8xi32>
    %164 = arith.cmpi eq, %153, %163 : vector<16x8xi32>
    %165 = arith.extui %164 : vector<16x8xi1> to vector<16x8xi32>
    %166 = arith.sitofp %165 : vector<16x8xi32> to vector<16x8xf32>
    %cst_134 = arith.constant dense<0.000000e+00> : vector<16x128xf32>
    %167 = tpu.matmul %159, %144, %cst_134 {dimension_numbers = #tpu.dot_dimension_numbers<[1], [0], [0], [1], [0, 0, 1, 1], [], []>} : vector<16x8xf32>, vector<8x128xf32>, vector<16x128xf32> -> vector<16x128xf32>
    %cst_135 = arith.constant dense<0.000000e+00> : vector<16x128xf32>
    %168 = tpu.matmul %166, %148, %cst_135 {dimension_numbers = #tpu.dot_dimension_numbers<[1], [0], [0], [1], [0, 0, 1, 1], [], []>} : vector<16x8xf32>, vector<8x128xf32>, vector<16x128xf32> -> vector<16x128xf32>
    %169 = arith.addf %167, %168 : vector<16x128xf32>
    %c1_136 = arith.constant 1 : index
    %c0_137 = arith.constant 0 : index
    %170 = vector.load %arg20[%c1_136, %c0_137] : memref<18x128xf32, #tpu.memory_space<vmem>>, vector<16x128xf32>
    tpu.vector_store %arg20[%c1_136, %c0_137], %169 {strides = array<i32>} : memref<18x128xf32, #tpu.memory_space<vmem>>, vector<16x128xf32>,
    %c0_138 = arith.constant 0 : index
    %c0_139 = arith.constant 0 : index
    %171 = vector.load %arg13[%c0_138, %c0_139] : memref<1x128xf32, #tpu.memory_space<vmem>>, vector<1x128xf32>
    %c1_140 = arith.constant 1 : index
    %c0_141 = arith.constant 0 : index
    %172 = vector.load %arg20[%c1_140, %c0_141] : memref<18x128xf32, #tpu.memory_space<vmem>>, vector<16x128xf32>
    %c0_142 = arith.constant 0 : index
    %c0_143 = arith.constant 0 : index
    %173 = vector.load %arg20[%c0_142, %c0_143] : memref<18x128xf32, #tpu.memory_space<vmem>>, vector<16x128xf32>
    %c2_144 = arith.constant 2 : index
    %c0_145 = arith.constant 0 : index
    %174 = vector.load %arg20[%c2_144, %c0_145] : memref<18x128xf32, #tpu.memory_space<vmem>>, vector<16x128xf32>
    %c1_146 = arith.constant 1 : index
    %c0_147 = arith.constant 0 : index
    %c0_148 = arith.constant 0 : index
    %175 = vector.load %arg12[%c1_146, %c0_147, %c0_148] : memref<4x128x128xf32, #tpu.memory_space<vmem>>, vector<1x128x128xf32>
    %176 = vector.shape_cast %175 : vector<1x128x128xf32> to vector<128x128xf32>
    %cst_149 = arith.constant dense<0.000000e+00> : vector<16x128xf32>
    %177 = tpu.matmul %172, %176, %cst_149 {dimension_numbers = #tpu.dot_dimension_numbers<[1], [0], [0], [1], [0, 0, 1, 1], [], []>} : vector<16x128xf32>, vector<128x128xf32>, vector<16x128xf32> -> vector<16x128xf32>
    %c3_150 = arith.constant 3 : index
    %c0_151 = arith.constant 0 : index
    %c0_152 = arith.constant 0 : index
    %178 = vector.load %arg12[%c3_150, %c0_151, %c0_152] : memref<4x128x128xf32, #tpu.memory_space<vmem>>, vector<1x128x128xf32>
    %179 = vector.shape_cast %178 : vector<1x128x128xf32> to vector<128x128xf32>
    %cst_153 = arith.constant dense<0.000000e+00> : vector<16x128xf32>
    %180 = tpu.matmul %173, %179, %cst_153 {dimension_numbers = #tpu.dot_dimension_numbers<[1], [0], [0], [1], [0, 0, 1, 1], [], []>} : vector<16x128xf32>, vector<128x128xf32>, vector<16x128xf32> -> vector<16x128xf32>
    %181 = arith.addf %177, %180 : vector<16x128xf32>
    %c2_154 = arith.constant 2 : index
    %c0_155 = arith.constant 0 : index
    %c0_156 = arith.constant 0 : index
    %182 = vector.load %arg12[%c2_154, %c0_155, %c0_156] : memref<4x128x128xf32, #tpu.memory_space<vmem>>, vector<1x128x128xf32>
    %183 = vector.shape_cast %182 : vector<1x128x128xf32> to vector<128x128xf32>
    %cst_157 = arith.constant dense<0.000000e+00> : vector<16x128xf32>
    %184 = tpu.matmul %172, %183, %cst_157 {dimension_numbers = #tpu.dot_dimension_numbers<[1], [0], [0], [1], [0, 0, 1, 1], [], []>} : vector<16x128xf32>, vector<128x128xf32>, vector<16x128xf32> -> vector<16x128xf32>
    %c0_158 = arith.constant 0 : index
    %c0_159 = arith.constant 0 : index
    %c0_160 = arith.constant 0 : index
    %185 = vector.load %arg12[%c0_158, %c0_159, %c0_160] : memref<4x128x128xf32, #tpu.memory_space<vmem>>, vector<1x128x128xf32>
    %186 = vector.shape_cast %185 : vector<1x128x128xf32> to vector<128x128xf32>
    %cst_161 = arith.constant dense<0.000000e+00> : vector<16x128xf32>
    %187 = tpu.matmul %174, %186, %cst_161 {dimension_numbers = #tpu.dot_dimension_numbers<[1], [0], [0], [1], [0, 0, 1, 1], [], []>} : vector<16x128xf32>, vector<128x128xf32>, vector<16x128xf32> -> vector<16x128xf32>
    %188 = arith.addf %184, %187 : vector<16x128xf32>
    %189 = vector.broadcast %171 : vector<1x128xf32> to vector<16x128xf32>
    %190 = arith.addf %181, %189 : vector<16x128xf32>
    %cst_162 = arith.constant 0.000000e+00 : f32
    %191 = vector.broadcast %cst_162 : f32 to vector<16x128xf32>
    %192 = arith.maximumf %190, %191 : vector<16x128xf32>
    %193 = vector.broadcast %171 : vector<1x128xf32> to vector<16x128xf32>
    %194 = arith.addf %188, %193 : vector<16x128xf32>
    %cst_163 = arith.constant 0.000000e+00 : f32
    %195 = vector.broadcast %cst_163 : f32 to vector<16x128xf32>
    %196 = arith.maximumf %194, %195 : vector<16x128xf32>
    %cst_164 = arith.constant 0.000000e+00 : f32
    %197 = vector.broadcast %cst_164 : f32 to vector<1x128xf32>
    %c0_165 = arith.constant 0 : index
    %c0_166 = arith.constant 0 : index
    %198 = vector.load %arg21[%c0_165, %c0_166] : memref<34x128xf32, #tpu.memory_space<vmem>>, vector<1x128xf32>
    tpu.vector_store %arg21[%c0_165, %c0_166], %197 {strides = array<i32>} : memref<34x128xf32, #tpu.memory_space<vmem>>, vector<1x128xf32>,
    %cst_167 = arith.constant 0.000000e+00 : f32
    %199 = vector.broadcast %cst_167 : f32 to vector<1x128xf32>
    %c33 = arith.constant 33 : index
    %c0_168 = arith.constant 0 : index
    %200 = vector.load %arg21[%c33, %c0_168] : memref<34x128xf32, #tpu.memory_space<vmem>>, vector<1x128xf32>
    tpu.vector_store %arg21[%c33, %c0_168], %199 {strides = array<i32>} : memref<34x128xf32, #tpu.memory_space<vmem>>, vector<1x128xf32>,
    %201 = tpu.iota {dimensions = array<i32: 0>} : vector<32x16xi32>
    %202 = tpu.iota {dimensions = array<i32: 1>} : vector<32x16xi32>
    %c2_i32_169 = arith.constant 2 : i32
    %203 = vector.broadcast %c2_i32_169 : i32 to vector<32x16xi32>
    %204 = arith.muli %203, %202 : vector<32x16xi32>
    %205 = arith.cmpi eq, %201, %204 : vector<32x16xi32>
    %206 = arith.extui %205 : vector<32x16xi1> to vector<32x16xi32>
    %207 = arith.sitofp %206 : vector<32x16xi32> to vector<32x16xf32>
    %c2_i32_170 = arith.constant 2 : i32
    %208 = vector.broadcast %c2_i32_170 : i32 to vector<32x16xi32>
    %209 = arith.muli %208, %202 : vector<32x16xi32>
    %c1_i32_171 = arith.constant 1 : i32
    %210 = vector.broadcast %c1_i32_171 : i32 to vector<32x16xi32>
    %211 = arith.addi %209, %210 : vector<32x16xi32>
    %212 = arith.cmpi eq, %201, %211 : vector<32x16xi32>
    %213 = arith.extui %212 : vector<32x16xi1> to vector<32x16xi32>
    %214 = arith.sitofp %213 : vector<32x16xi32> to vector<32x16xf32>
    %cst_172 = arith.constant dense<0.000000e+00> : vector<32x128xf32>
    %215 = tpu.matmul %207, %192, %cst_172 {dimension_numbers = #tpu.dot_dimension_numbers<[1], [0], [0], [1], [0, 0, 1, 1], [], []>} : vector<32x16xf32>, vector<16x128xf32>, vector<32x128xf32> -> vector<32x128xf32>
    %cst_173 = arith.constant dense<0.000000e+00> : vector<32x128xf32>
    %216 = tpu.matmul %214, %196, %cst_173 {dimension_numbers = #tpu.dot_dimension_numbers<[1], [0], [0], [1], [0, 0, 1, 1], [], []>} : vector<32x16xf32>, vector<16x128xf32>, vector<32x128xf32> -> vector<32x128xf32>
    %217 = arith.addf %215, %216 : vector<32x128xf32>
    %c1_174 = arith.constant 1 : index
    %c0_175 = arith.constant 0 : index
    %218 = vector.load %arg21[%c1_174, %c0_175] : memref<34x128xf32, #tpu.memory_space<vmem>>, vector<32x128xf32>
    tpu.vector_store %arg21[%c1_174, %c0_175], %217 {strides = array<i32>} : memref<34x128xf32, #tpu.memory_space<vmem>>, vector<32x128xf32>,
    %c0_176 = arith.constant 0 : index
    %c0_177 = arith.constant 0 : index
    %219 = vector.load %arg15[%c0_176, %c0_177] : memref<1x64xf32, #tpu.memory_space<vmem>>, vector<1x64xf32>
    %c1_178 = arith.constant 1 : index
    %c0_179 = arith.constant 0 : index
    %220 = vector.load %arg21[%c1_178, %c0_179] : memref<34x128xf32, #tpu.memory_space<vmem>>, vector<32x128xf32>
    %c0_180 = arith.constant 0 : index
    %c0_181 = arith.constant 0 : index
    %221 = vector.load %arg21[%c0_180, %c0_181] : memref<34x128xf32, #tpu.memory_space<vmem>>, vector<32x128xf32>
    %c2_182 = arith.constant 2 : index
    %c0_183 = arith.constant 0 : index
    %222 = vector.load %arg21[%c2_182, %c0_183] : memref<34x128xf32, #tpu.memory_space<vmem>>, vector<32x128xf32>
    %c1_184 = arith.constant 1 : index
    %c0_185 = arith.constant 0 : index
    %c0_186 = arith.constant 0 : index
    %223 = vector.load %arg14[%c1_184, %c0_185, %c0_186] : memref<4x128x64xf32, #tpu.memory_space<vmem>>, vector<1x128x64xf32>
    %224 = vector.shape_cast %223 : vector<1x128x64xf32> to vector<128x64xf32>
    %cst_187 = arith.constant dense<0.000000e+00> : vector<32x64xf32>
    %225 = tpu.matmul %220, %224, %cst_187 {dimension_numbers = #tpu.dot_dimension_numbers<[1], [0], [0], [1], [0, 0, 1, 1], [], []>} : vector<32x128xf32>, vector<128x64xf32>, vector<32x64xf32> -> vector<32x64xf32>
    %c3_188 = arith.constant 3 : index
    %c0_189 = arith.constant 0 : index
    %c0_190 = arith.constant 0 : index
    %226 = vector.load %arg14[%c3_188, %c0_189, %c0_190] : memref<4x128x64xf32, #tpu.memory_space<vmem>>, vector<1x128x64xf32>
    %227 = vector.shape_cast %226 : vector<1x128x64xf32> to vector<128x64xf32>
    %cst_191 = arith.constant dense<0.000000e+00> : vector<32x64xf32>
    %228 = tpu.matmul %221, %227, %cst_191 {dimension_numbers = #tpu.dot_dimension_numbers<[1], [0], [0], [1], [0, 0, 1, 1], [], []>} : vector<32x128xf32>, vector<128x64xf32>, vector<32x64xf32> -> vector<32x64xf32>
    %229 = arith.addf %225, %228 : vector<32x64xf32>
    %c2_192 = arith.constant 2 : index
    %c0_193 = arith.constant 0 : index
    %c0_194 = arith.constant 0 : index
    %230 = vector.load %arg14[%c2_192, %c0_193, %c0_194] : memref<4x128x64xf32, #tpu.memory_space<vmem>>, vector<1x128x64xf32>
    %231 = vector.shape_cast %230 : vector<1x128x64xf32> to vector<128x64xf32>
    %cst_195 = arith.constant dense<0.000000e+00> : vector<32x64xf32>
    %232 = tpu.matmul %220, %231, %cst_195 {dimension_numbers = #tpu.dot_dimension_numbers<[1], [0], [0], [1], [0, 0, 1, 1], [], []>} : vector<32x128xf32>, vector<128x64xf32>, vector<32x64xf32> -> vector<32x64xf32>
    %c0_196 = arith.constant 0 : index
    %c0_197 = arith.constant 0 : index
    %c0_198 = arith.constant 0 : index
    %233 = vector.load %arg14[%c0_196, %c0_197, %c0_198] : memref<4x128x64xf32, #tpu.memory_space<vmem>>, vector<1x128x64xf32>
    %234 = vector.shape_cast %233 : vector<1x128x64xf32> to vector<128x64xf32>
    %cst_199 = arith.constant dense<0.000000e+00> : vector<32x64xf32>
    %235 = tpu.matmul %222, %234, %cst_199 {dimension_numbers = #tpu.dot_dimension_numbers<[1], [0], [0], [1], [0, 0, 1, 1], [], []>} : vector<32x128xf32>, vector<128x64xf32>, vector<32x64xf32> -> vector<32x64xf32>
    %236 = arith.addf %232, %235 : vector<32x64xf32>
    %237 = vector.broadcast %219 : vector<1x64xf32> to vector<32x64xf32>
    %238 = arith.addf %229, %237 : vector<32x64xf32>
    %cst_200 = arith.constant 0.000000e+00 : f32
    %239 = vector.broadcast %cst_200 : f32 to vector<32x64xf32>
    %240 = arith.maximumf %238, %239 : vector<32x64xf32>
    %241 = vector.broadcast %219 : vector<1x64xf32> to vector<32x64xf32>
    %242 = arith.addf %236, %241 : vector<32x64xf32>
    %cst_201 = arith.constant 0.000000e+00 : f32
    %243 = vector.broadcast %cst_201 : f32 to vector<32x64xf32>
    %244 = arith.maximumf %242, %243 : vector<32x64xf32>
    %245 = tpu.iota {dimensions = array<i32: 0>} : vector<64x32xi32>
    %246 = tpu.iota {dimensions = array<i32: 1>} : vector<64x32xi32>
    %c2_i32_202 = arith.constant 2 : i32
    %247 = vector.broadcast %c2_i32_202 : i32 to vector<64x32xi32>
    %248 = arith.muli %247, %246 : vector<64x32xi32>
    %249 = arith.cmpi eq, %245, %248 : vector<64x32xi32>
    %250 = arith.extui %249 : vector<64x32xi1> to vector<64x32xi32>
    %251 = arith.sitofp %250 : vector<64x32xi32> to vector<64x32xf32>
    %c2_i32_203 = arith.constant 2 : i32
    %252 = vector.broadcast %c2_i32_203 : i32 to vector<64x32xi32>
    %253 = arith.muli %252, %246 : vector<64x32xi32>
    %c1_i32_204 = arith.constant 1 : i32
    %254 = vector.broadcast %c1_i32_204 : i32 to vector<64x32xi32>
    %255 = arith.addi %253, %254 : vector<64x32xi32>
    %256 = arith.cmpi eq, %245, %255 : vector<64x32xi32>
    %257 = arith.extui %256 : vector<64x32xi1> to vector<64x32xi32>
    %258 = arith.sitofp %257 : vector<64x32xi32> to vector<64x32xf32>
    %cst_205 = arith.constant dense<0.000000e+00> : vector<64x64xf32>
    %259 = tpu.matmul %251, %240, %cst_205 {dimension_numbers = #tpu.dot_dimension_numbers<[1], [0], [0], [1], [0, 0, 1, 1], [], []>} : vector<64x32xf32>, vector<32x64xf32>, vector<64x64xf32> -> vector<64x64xf32>
    %cst_206 = arith.constant dense<0.000000e+00> : vector<64x64xf32>
    %260 = tpu.matmul %258, %244, %cst_206 {dimension_numbers = #tpu.dot_dimension_numbers<[1], [0], [0], [1], [0, 0, 1, 1], [], []>} : vector<64x32xf32>, vector<32x64xf32>, vector<64x64xf32> -> vector<64x64xf32>
    %261 = arith.addf %259, %260 : vector<64x64xf32>
    %c0_207 = arith.constant 0 : index
    %c0_208 = arith.constant 0 : index
    %c0_209 = arith.constant 0 : index
    %c0_210 = arith.constant 0 : index
    %262 = vector.load %arg16[%c0_207, %c0_208, %c0_209, %c0_210] : memref<1x1x64x64xf32, #tpu.memory_space<vmem>>, vector<1x1x64x64xf32>
    %263 = vector.shape_cast %262 : vector<1x1x64x64xf32> to vector<64x64xf32>
    %264 = vector.shape_cast %261 : vector<64x64xf32> to vector<1x1x64x64xf32>
    tpu.vector_store %arg16[%c0_207, %c0_208, %c0_209, %c0_210], %264 {strides = array<i32>} : memref<1x1x64x64xf32, #tpu.memory_space<vmem>>, vector<1x1x64x64xf32>,
    return
  }
  func.func @transform_0(%arg0: i32) -> (i32, i32, i32) {
    %c0_i32 = arith.constant 0 : i32
    %c0_i32_0 = arith.constant 0 : i32
    %c0_i32_1 = arith.constant 0 : i32
    return %arg0, %c0_i32, %c0_i32_0 : i32, i32, i32
  }
  func.func @transform_1(%arg0: i32) -> (i32, i32) {
    %c0_i32 = arith.constant 0 : i32
    %c0_i32_0 = arith.constant 0 : i32
    %c0_i32_1 = arith.constant 0 : i32
    return %c0_i32, %c0_i32_0 : i32, i32
  }
  func.func @transform_2(%arg0: i32) -> (i32, i32) {
    %c0_i32 = arith.constant 0 : i32
    %c0_i32_0 = arith.constant 0 : i32
    %c0_i32_1 = arith.constant 0 : i32
    return %c0_i32, %c0_i32_0 : i32, i32
  }
  func.func @transform_3(%arg0: i32) -> (i32, i32, i32) {
    %c0_i32 = arith.constant 0 : i32
    %c0_i32_0 = arith.constant 0 : i32
    %c0_i32_1 = arith.constant 0 : i32
    %c0_i32_2 = arith.constant 0 : i32
    return %c0_i32, %c0_i32_0, %c0_i32_1 : i32, i32, i32
  }
  func.func @transform_4(%arg0: i32) -> (i32, i32) {
    %c0_i32 = arith.constant 0 : i32
    %c0_i32_0 = arith.constant 0 : i32
    %c0_i32_1 = arith.constant 0 : i32
    return %c0_i32, %c0_i32_0 : i32, i32
  }
  func.func @transform_5(%arg0: i32) -> (i32, i32, i32) {
    %c0_i32 = arith.constant 0 : i32
    %c0_i32_0 = arith.constant 0 : i32
    %c0_i32_1 = arith.constant 0 : i32
    %c0_i32_2 = arith.constant 0 : i32
    return %c0_i32, %c0_i32_0, %c0_i32_1 : i32, i32, i32
  }
  func.func @transform_6(%arg0: i32) -> (i32, i32) {
    %c0_i32 = arith.constant 0 : i32
    %c0_i32_0 = arith.constant 0 : i32
    %c0_i32_1 = arith.constant 0 : i32
    return %c0_i32, %c0_i32_0 : i32, i32
  }
  func.func @transform_7(%arg0: i32) -> (i32, i32, i32) {
    %c0_i32 = arith.constant 0 : i32
    %c0_i32_0 = arith.constant 0 : i32
    %c0_i32_1 = arith.constant 0 : i32
    %c0_i32_2 = arith.constant 0 : i32
    return %c0_i32, %c0_i32_0, %c0_i32_1 : i32, i32, i32
  }
  func.func @transform_8(%arg0: i32) -> (i32, i32) {
    %c0_i32 = arith.constant 0 : i32
    %c0_i32_0 = arith.constant 0 : i32
    %c0_i32_1 = arith.constant 0 : i32
    return %c0_i32, %c0_i32_0 : i32, i32
  }
  func.func @transform_9(%arg0: i32) -> (i32, i32, i32) {
    %c0_i32 = arith.constant 0 : i32
    %c0_i32_0 = arith.constant 0 : i32
    %c0_i32_1 = arith.constant 0 : i32
    %c0_i32_2 = arith.constant 0 : i32
    return %c0_i32, %c0_i32_0, %c0_i32_1 : i32, i32, i32
  }
  func.func @transform_10(%arg0: i32) -> (i32, i32) {
    %c0_i32 = arith.constant 0 : i32
    %c0_i32_0 = arith.constant 0 : i32
    %c0_i32_1 = arith.constant 0 : i32
    return %c0_i32, %c0_i32_0 : i32, i32
  }
  func.func @transform_11(%arg0: i32) -> (i32, i32, i32) {
    %c0_i32 = arith.constant 0 : i32
    %c0_i32_0 = arith.constant 0 : i32
    %c0_i32_1 = arith.constant 0 : i32
    %c0_i32_2 = arith.constant 0 : i32
    return %c0_i32, %c0_i32_0, %c0_i32_1 : i32, i32, i32
  }
  func.func @transform_12(%arg0: i32) -> (i32, i32) {
    %c0_i32 = arith.constant 0 : i32
    %c0_i32_0 = arith.constant 0 : i32
    %c0_i32_1 = arith.constant 0 : i32
    return %c0_i32, %c0_i32_0 : i32, i32
  }
  func.func @transform_13(%arg0: i32) -> (i32, i32, i32) {
    %c0_i32 = arith.constant 0 : i32
    %c0_i32_0 = arith.constant 0 : i32
    %c0_i32_1 = arith.constant 0 : i32
    %c0_i32_2 = arith.constant 0 : i32
    return %c0_i32, %c0_i32_0, %c0_i32_1 : i32, i32, i32
  }
  func.func @transform_14(%arg0: i32) -> (i32, i32) {
    %c0_i32 = arith.constant 0 : i32
    %c0_i32_0 = arith.constant 0 : i32
    %c0_i32_1 = arith.constant 0 : i32
    return %c0_i32, %c0_i32_0 : i32, i32
  }
  func.func @transform_15(%arg0: i32) -> (i32, i32, i32, i32) {
    %c0_i32 = arith.constant 0 : i32
    %c0_i32_0 = arith.constant 0 : i32
    %c0_i32_1 = arith.constant 0 : i32
    %c0_i32_2 = arith.constant 0 : i32
    return %arg0, %c0_i32, %c0_i32_0, %c0_i32_1 : i32, i32, i32, i32
  }
}

</mosaic_0001>

<llo_original>
// kernel: decoder_forward.1
$region0: #{decoder_forward.1}
  #allocation0 [shape = 'u32[]', space=smem, size = 0x4, offset = 0x4, fixed_abs, tag = 'smem constant byte address 0x4 - core index']
  #allocation1 [shape = 'u32[144,128]{1,0:T(1,128)}', space=vmem, size = 0x12000, scoped, tag = 'internal scratch']
  #allocation2 [shape = 'f32[4,128]{1,0:T(4,128)}', space=vmem, size = 0x800, scoped, tag = 'scratch operand']
  #allocation3 [shape = 'f32[6,128]{1,0:T(8,128)}', space=vmem, size = 0x1000, scoped, tag = 'scratch operand']
  #allocation4 [shape = 'f32[10,128]{1,0:T(8,128)}', space=vmem, size = 0x2000, scoped, tag = 'scratch operand']
  #allocation5 [shape = 'f32[18,128]{1,0:T(8,128)}', space=vmem, size = 0x3000, scoped, tag = 'scratch operand']
  #allocation6 [shape = 'f32[34,128]{1,0:T(8,128)}', space=vmem, size = 0x5000, scoped, tag = 'scratch operand']
  %s0 = inlined_call_operand.vmem [shape: f32[2,1,64], index: 0, kind: input, shape index: {}]
  %s1 = inlined_call_operand.vmem [shape: f32[64,128], index: 1, kind: input, shape index: {}]
  %s2 = inlined_call_operand.vmem [shape: f32[1,128], index: 2, kind: input, shape index: {}]
  %s3 = inlined_call_operand.vmem [shape: f32[4,128,128], index: 3, kind: input, shape index: {}]
  %s4 = inlined_call_operand.vmem [shape: f32[1,128], index: 4, kind: input, shape index: {}]
  %s5 = inlined_call_operand.hbm [shape: f32[4,128,128], index: 5, kind: input, shape index: {}]
  %s6 = inlined_call_operand.vmem [shape: f32[1,128], index: 6, kind: input, shape index: {}]
  %s7 = inlined_call_operand.hbm [shape: f32[4,128,128], index: 7, kind: input, shape index: {}]
  %s8 = inlined_call_operand.vmem [shape: f32[1,128], index: 8, kind: input, shape index: {}]
  %s9 = inlined_call_operand.hbm [shape: f32[4,128,128], index: 9, kind: input, shape index: {}]
  %s10 = inlined_call_operand.vmem [shape: f32[1,128], index: 10, kind: input, shape index: {}]
  %s11 = inlined_call_operand.hbm [shape: f32[4,128,128], index: 11, kind: input, shape index: {}]
  %s12 = inlined_call_operand.vmem [shape: f32[1,128], index: 12, kind: input, shape index: {}]
  %s13 = inlined_call_operand.vmem [shape: f32[4,128,64], index: 13, kind: input, shape index: {}]
  %s14 = inlined_call_operand.vmem [shape: f32[1,64], index: 14, kind: input, shape index: {}]
  %s15 = inlined_call_operand.hbm [shape: f32[2,1,64,64], index: 15, kind: output, shape index: {}]
  %s16 = sld [smem:[#allocation0]]
  $region109: #{decoder_forward.1} parent=0
    _
  %s18 = ssub.s32 1, %s16
  %s19 = scalar_select 0, %s18, %s16
  $region1: #{decoder_forward.1} parent=0
    #allocation7 [shape = 'u8[262144]{0}', space=vmem, size = 0x40000, scoped, tag = 'input window, operand 5, single buffered']
    #allocation8 [shape = 's32[2]{0}', space=sflag, size = 0x8, scoped, tag = 'scoped memory for decoder_forward.1']
    #allocation9 [shape = 's32[2]{0}', space=sflag, size = 0x8, scoped, tag = 'scoped memory for decoder_forward.1']
    #allocation10 [shape = 'u8[262144]{0}', space=vmem, size = 0x40000, scoped, tag = 'input window, operand 7, single buffered']
    #allocation11 [shape = 's32[1]{0}', space=sflag, size = 0x4, scoped, tag = 'scoped memory for decoder_forward.1']
    #allocation12 [shape = 'u8[262144]{0}', space=vmem, size = 0x40000, scoped, tag = 'input window, operand 9, single buffered']
    #allocation13 [shape = 'u8[262144]{0}', space=vmem, size = 0x40000, scoped, tag = 'input window, operand 11, single buffered']
    #allocation14 [shape = 's32[1]{0}', space=sflag, size = 0x4, scoped, tag = 'scoped memory for decoder_forward.1']
    #allocation15 [shape = 'u8[65536]{0}', space=vmem, size = 0x10000, scoped, tag = 'output window, operand 0']
    %20 = vsyncpa [#allocation8], 0
    %21 = vsyncpa [#allocation11], 0
    %22 = vsyncpa [#allocation14], 0
    %23 = vsyncpa [#allocation9], 0
    %s24 = scalar_lea.sflag [#allocation9], 1
    %25 = vsyncpa %s24, 0
    loop: start=0, step=1, limit=4
    $region2: #{decoder_forward.1} parent=1 // loop_pre_header
      _
    $region3: #{decoder_forward.1} parent=1 // loop_header
      %s27 = sphi 0, %s31
      %p28 = scmp.ge.s32.totalorder %s27, 4
      %s37 = sphi 0, %s39
      %s40 = sphi 0, %s37
      %s41 = sphi 0, %s40
      %s57 = sphi 0, %s41
      %s61 = sphi 0, %s61
      %s63 = sphi 0, %s61
      %s64 = sphi 0, %s63
      %s78 = sphi 0, %s64
      %s82 = sphi 0, %s82
      %s84 = sphi 0, %s82
      %s85 = sphi 0, %s84
      %s99 = sphi 0, %s85
      %s103 = sphi 0, %s103
      %s105 = sphi 0, %s103
      %s106 = sphi 0, %s105
      %s120 = sphi 0, %s106
      %s124 = sphi 0, %s124
      %s126 = sphi 0, %s124
      %s127 = sphi 0, %s126
      %s141 = sphi 0, %s127
      %s145 = sphi 0, %s145
      %s147 = sphi 0, %s145
      %s148 = sphi 0, %s147
      %s162 = sphi 0, %s148
      %s166 = sphi 0, %s166
      %s168 = sphi 0, %s166
      %s169 = sphi 0, %s168
      %s183 = sphi 0, %s169
      %s187 = sphi 0, %s187
      %s189 = sphi 0, %s187
      %s190 = sphi 0, %s189
      %s204 = sphi 0, %s190
      %s208 = sphi 0, %s208
      %s210 = sphi 0, %s208
      %s211 = sphi 0, %s210
      %s225 = sphi 0, %s211
      %s229 = sphi 0, %s229
      %s231 = sphi 0, %s229
      %s232 = sphi 0, %s231
      %s246 = sphi 0, %s232
      %s250 = sphi 0, %s250
      %s252 = sphi 0, %s250
      %s253 = sphi 0, %s252
      %s267 = sphi 0, %s253
      %s271 = sphi 0, %s271
      %s273 = sphi 0, %s271
      %s274 = sphi 0, %s273
      %s288 = sphi 0, %s274
      %s292 = sphi 0, %s292
      %s294 = sphi 0, %s292
      %s295 = sphi 0, %s294
      %s309 = sphi 0, %s295
      %s313 = sphi 0, %s313
      %s315 = sphi 0, %s313
      %s316 = sphi 0, %s315
      %s330 = sphi 0, %s316
      %s334 = sphi 0, %s334
      %s336 = sphi 0, %s334
      %s337 = sphi 0, %s336
      %s351 = sphi 0, %s337
      %s357 = sphi 0, %s359
      %s360 = sphi 0, %s357
      %s361 = sphi 0, %s360
      %s377 = sphi 0, %s361
    $region4: #{decoder_forward.1} parent=1 // loop_header_branch
      %30 = sbr.rel (%p28) target = $region8
    $region5: #{decoder_forward.1} parent=1 // loop_body
      %s32 = ssub.s32 %s27, 1
      %s33 = ssub.s32 %s27, 2
      %s34 = sadd.s32 %s27, 1
      %s35 = ssub.s32 %s27, %s34
      %p36 = scmp.eq.s32.totalorder %s35, 0
      %s38 = sadd.s32 %s37, 1
      %s39 = scalar_select %p36, %s37, %s38
      %p42 = pneg %p36
      %p43 = scmp.eq.s32.totalorder %s27, 1
      %p44 = por %p42, %p43
      %p45 = scmp.ne.s32.totalorder %s37, %s40
      %p46 = scmp.eq.s32.totalorder %s27, 0
      %p47 = por %p45, %p46
      %p48 = scmp.ne.s32.totalorder %s37, %s40
      %p49 = scmp.eq.s32.totalorder %s32, 1
      %p50 = por %p48, %p49
      %p51 = scmp.ne.s32.totalorder %s40, %s41
      %p52 = scmp.eq.s32.totalorder %s32, 0
      %p53 = por %p51, %p52
      %p54 = scmp.ne.s32.totalorder %s40, %s41
      %p55 = scmp.eq.s32.totalorder %s33, 1
      %p56 = por %p54, %p55
      %p58 = scmp.ne.s32.totalorder %s41, %s57
      %p59 = scmp.eq.s32.totalorder %s33, 0
      %p60 = por %p58, %p59
      %s62 = sadd.s32 %s61, 1
      %p65 = scmp.eq.s32.totalorder %s27, 1
      %p66 = scmp.ne.s32.totalorder %s61, %s63
      %p67 = scmp.eq.s32.totalorder %s27, 0
      %p68 = por %p66, %p67
      %p69 = scmp.ne.s32.totalorder %s61, %s63
      %p70 = scmp.eq.s32.totalorder %s32, 1
      %p71 = por %p69, %p70
      %p72 = scmp.ne.s32.totalorder %s63, %s64
      %p73 = scmp.eq.s32.totalorder %s32, 0
      %p74 = por %p72, %p73
      %p75 = scmp.ne.s32.totalorder %s63, %s64
      %p76 = scmp.eq.s32.totalorder %s33, 1
      %p77 = por %p75, %p76
      %p79 = scmp.ne.s32.totalorder %s64, %s78
      %p80 = scmp.eq.s32.totalorder %s33, 0
      %p81 = por %p79, %p80
      %s83 = sadd.s32 %s82, 1
      %p86 = scmp.eq.s32.totalorder %s27, 1
      %p87 = scmp.ne.s32.totalorder %s82, %s84
      %p88 = scmp.eq.s32.totalorder %s27, 0
      %p89 = por %p87, %p88
      %p90 = scmp.ne.s32.totalorder %s82, %s84
      %p91 = scmp.eq.s32.totalorder %s32, 1
      %p92 = por %p90, %p91
      %p93 = scmp.ne.s32.totalorder %s84, %s85
      %p94 = scmp.eq.s32.totalorder %s32, 0
      %p95 = por %p93, %p94
      %p96 = scmp.ne.s32.totalorder %s84, %s85
      %p97 = scmp.eq.s32.totalorder %s33, 1
      %p98 = por %p96, %p97
      %p100 = scmp.ne.s32.totalorder %s85, %s99
      %p101 = scmp.eq.s32.totalorder %s33, 0
      %p102 = por %p100, %p101
      %s104 = sadd.s32 %s103, 1
      %p107 = scmp.eq.s32.totalorder %s27, 1
      %p108 = scmp.ne.s32.totalorder %s103, %s105
      %p109 = scmp.eq.s32.totalorder %s27, 0
      %p110 = por %p108, %p109
      %p111 = scmp.ne.s32.totalorder %s103, %s105
      %p112 = scmp.eq.s32.totalorder %s32, 1
      %p113 = por %p111, %p112
      %p114 = scmp.ne.s32.totalorder %s105, %s106
      %p115 = scmp.eq.s32.totalorder %s32, 0
      %p116 = por %p114, %p115
      %p117 = scmp.ne.s32.totalorder %s105, %s106
      %p118 = scmp.eq.s32.totalorder %s33, 1
      %p119 = por %p117, %p118
      %p121 = scmp.ne.s32.totalorder %s106, %s120
      %p122 = scmp.eq.s32.totalorder %s33, 0
      %p123 = por %p121, %p122
      %s125 = sadd.s32 %s124, 1
      %p128 = scmp.eq.s32.totalorder %s27, 1
      %p129 = scmp.ne.s32.totalorder %s124, %s126
      %p130 = scmp.eq.s32.totalorder %s27, 0
      %p131 = por %p129, %p130
      %p132 = scmp.ne.s32.totalorder %s124, %s126
      %p133 = scmp.eq.s32.totalorder %s32, 1
      %p134 = por %p132, %p133
      %p135 = scmp.ne.s32.totalorder %s126, %s127
      %p136 = scmp.eq.s32.totalorder %s32, 0
      %p137 = por %p135, %p136
      %p138 = scmp.ne.s32.totalorder %s126, %s127
      %p139 = scmp.eq.s32.totalorder %s33, 1
      %p140 = por %p138, %p139
      %p142 = scmp.ne.s32.totalorder %s127, %s141
      %p143 = scmp.eq.s32.totalorder %s33, 0
      %p144 = por %p142, %p143
      %s146 = sadd.s32 %s145, 1
      %p149 = scmp.eq.s32.totalorder %s27, 1
      %p150 = scmp.ne.s32.totalorder %s145, %s147
      %p151 = scmp.eq.s32.totalorder %s27, 0
      %p152 = por %p150, %p151
      %p153 = scmp.ne.s32.totalorder %s145, %s147
      %p154 = scmp.eq.s32.totalorder %s32, 1
      %p155 = por %p153, %p154
      %p156 = scmp.ne.s32.totalorder %s147, %s148
      %p157 = scmp.eq.s32.totalorder %s32, 0
      %p158 = por %p156, %p157
      %p159 = scmp.ne.s32.totalorder %s147, %s148
      %p160 = scmp.eq.s32.totalorder %s33, 1
      %p161 = por %p159, %p160
      %p163 = scmp.ne.s32.totalorder %s148, %s162
      %p164 = scmp.eq.s32.totalorder %s33, 0
      %p165 = por %p163, %p164
      %s167 = sadd.s32 %s166, 1
      %p170 = scmp.eq.s32.totalorder %s27, 1
      %p171 = scmp.ne.s32.totalorder %s166, %s168
      %p172 = scmp.eq.s32.totalorder %s27, 0
      %p173 = por %p171, %p172
      %p174 = scmp.ne.s32.totalorder %s166, %s168
      %p175 = scmp.eq.s32.totalorder %s32, 1
      %p176 = por %p174, %p175
      %p177 = scmp.ne.s32.totalorder %s168, %s169
      %p178 = scmp.eq.s32.totalorder %s32, 0
      %p179 = por %p177, %p178
      %p180 = scmp.ne.s32.totalorder %s168, %s169
      %p181 = scmp.eq.s32.totalorder %s33, 1
      %p182 = por %p180, %p181
      %p184 = scmp.ne.s32.totalorder %s169, %s183
      %p185 = scmp.eq.s32.totalorder %s33, 0
      %p186 = por %p184, %p185
      %s188 = sadd.s32 %s187, 1
      %p191 = scmp.eq.s32.totalorder %s27, 1
      %p192 = scmp.ne.s32.totalorder %s187, %s189
      %p193 = scmp.eq.s32.totalorder %s27, 0
      %p194 = por %p192, %p193
      %p195 = scmp.ne.s32.totalorder %s187, %s189
      %p196 = scmp.eq.s32.totalorder %s32, 1
      %p197 = por %p195, %p196
      %p198 = scmp.ne.s32.totalorder %s189, %s190
      %p199 = scmp.eq.s32.totalorder %s32, 0
      %p200 = por %p198, %p199
      %p201 = scmp.ne.s32.totalorder %s189, %s190
      %p202 = scmp.eq.s32.totalorder %s33, 1
      %p203 = por %p201, %p202
      %p205 = scmp.ne.s32.totalorder %s190, %s204
      %p206 = scmp.eq.s32.totalorder %s33, 0
      %p207 = por %p205, %p206
      %s209 = sadd.s32 %s208, 1
      %p212 = scmp.eq.s32.totalorder %s27, 1
      %p213 = scmp.ne.s32.totalorder %s208, %s210
      %p214 = scmp.eq.s32.totalorder %s27, 0
      %p215 = por %p213, %p214
      %p216 = scmp.ne.s32.totalorder %s208, %s210
      %p217 = scmp.eq.s32.totalorder %s32, 1
      %p218 = por %p216, %p217
      %p219 = scmp.ne.s32.totalorder %s210, %s211
      %p220 = scmp.eq.s32.totalorder %s32, 0
      %p221 = por %p219, %p220
      %p222 = scmp.ne.s32.totalorder %s210, %s211
      %p223 = scmp.eq.s32.totalorder %s33, 1
      %p224 = por %p222, %p223
      %p226 = scmp.ne.s32.totalorder %s211, %s225
      %p227 = scmp.eq.s32.totalorder %s33, 0
      %p228 = por %p226, %p227
      %s230 = sadd.s32 %s229, 1
      %p233 = scmp.eq.s32.totalorder %s27, 1
      %p234 = scmp.ne.s32.totalorder %s229, %s231
      %p235 = scmp.eq.s32.totalorder %s27, 0
      %p236 = por %p234, %p235
      %p237 = scmp.ne.s32.totalorder %s229, %s231
      %p238 = scmp.eq.s32.totalorder %s32, 1
      %p239 = por %p237, %p238
      %p240 = scmp.ne.s32.totalorder %s231, %s232
      %p241 = scmp.eq.s32.totalorder %s32, 0
      %p242 = por %p240, %p241
      %p243 = scmp.ne.s32.totalorder %s231, %s232
      %p244 = scmp.eq.s32.totalorder %s33, 1
      %p245 = por %p243, %p244
      %p247 = scmp.ne.s32.totalorder %s232, %s246
      %p248 = scmp.eq.s32.totalorder %s33, 0
      %p249 = por %p247, %p248
      %s251 = sadd.s32 %s250, 1
      %p254 = scmp.eq.s32.totalorder %s27, 1
      %p255 = scmp.ne.s32.totalorder %s250, %s252
      %p256 = scmp.eq.s32.totalorder %s27, 0
      %p257 = por %p255, %p256
      %p258 = scmp.ne.s32.totalorder %s250, %s252
      %p259 = scmp.eq.s32.totalorder %s32, 1
      %p260 = por %p258, %p259
      %p261 = scmp.ne.s32.totalorder %s252, %s253
      %p262 = scmp.eq.s32.totalorder %s32, 0
      %p263 = por %p261, %p262
      %p264 = scmp.ne.s32.totalorder %s252, %s253
      %p265 = scmp.eq.s32.totalorder %s33, 1
      %p266 = por %p264, %p265
      %p268 = scmp.ne.s32.totalorder %s253, %s267
      %p269 = scmp.eq.s32.totalorder %s33, 0
      %p270 = por %p268, %p269
      %s272 = sadd.s32 %s271, 1
      %p275 = scmp.eq.s32.totalorder %s27, 1
      %p276 = scmp.ne.s32.totalorder %s271, %s273
      %p277 = scmp.eq.s32.totalorder %s27, 0
      %p278 = por %p276, %p277
      %p279 = scmp.ne.s32.totalorder %s271, %s273
      %p280 = scmp.eq.s32.totalorder %s32, 1
      %p281 = por %p279, %p280
      %p282 = scmp.ne.s32.totalorder %s273, %s274
      %p283 = scmp.eq.s32.totalorder %s32, 0
      %p284 = por %p282, %p283
      %p285 = scmp.ne.s32.totalorder %s273, %s274
      %p286 = scmp.eq.s32.totalorder %s33, 1
      %p287 = por %p285, %p286
      %p289 = scmp.ne.s32.totalorder %s274, %s288
      %p290 = scmp.eq.s32.totalorder %s33, 0
      %p291 = por %p289, %p290
      %s293 = sadd.s32 %s292, 1
      %p296 = scmp.eq.s32.totalorder %s27, 1
      %p297 = scmp.ne.s32.totalorder %s292, %s294
      %p298 = scmp.eq.s32.totalorder %s27, 0
      %p299 = por %p297, %p298
      %p300 = scmp.ne.s32.totalorder %s292, %s294
      %p301 = scmp.eq.s32.totalorder %s32, 1
      %p302 = por %p300, %p301
      %p303 = scmp.ne.s32.totalorder %s294, %s295
      %p304 = scmp.eq.s32.totalorder %s32, 0
      %p305 = por %p303, %p304
      %p306 = scmp.ne.s32.totalorder %s294, %s295
      %p307 = scmp.eq.s32.totalorder %s33, 1
      %p308 = por %p306, %p307
      %p310 = scmp.ne.s32.totalorder %s295, %s309
      %p311 = scmp.eq.s32.totalorder %s33, 0
      %p312 = por %p310, %p311
      %s314 = sadd.s32 %s313, 1
      %p317 = scmp.eq.s32.totalorder %s27, 1
      %p318 = scmp.ne.s32.totalorder %s313, %s315
      %p319 = scmp.eq.s32.totalorder %s27, 0
      %p320 = por %p318, %p319
      %p321 = scmp.ne.s32.totalorder %s313, %s315
      %p322 = scmp.eq.s32.totalorder %s32, 1
      %p323 = por %p321, %p322
      %p324 = scmp.ne.s32.totalorder %s315, %s316
      %p325 = scmp.eq.s32.totalorder %s32, 0
      %p326 = por %p324, %p325
      %p327 = scmp.ne.s32.totalorder %s315, %s316
      %p328 = scmp.eq.s32.totalorder %s33, 1
      %p329 = por %p327, %p328
      %p331 = scmp.ne.s32.totalorder %s316, %s330
      %p332 = scmp.eq.s32.totalorder %s33, 0
      %p333 = por %p331, %p332
      %s335 = sadd.s32 %s334, 1
      %p338 = scmp.eq.s32.totalorder %s27, 1
      %p339 = scmp.ne.s32.totalorder %s334, %s336
      %p340 = scmp.eq.s32.totalorder %s27, 0
      %p341 = por %p339, %p340
      %p342 = scmp.ne.s32.totalorder %s334, %s336
      %p343 = scmp.eq.s32.totalorder %s32, 1
      %p344 = por %p342, %p343
      %p345 = scmp.ne.s32.totalorder %s336, %s337
      %p346 = scmp.eq.s32.totalorder %s32, 0
      %p347 = por %p345, %p346
      %p348 = scmp.ne.s32.totalorder %s336, %s337
      %p349 = scmp.eq.s32.totalorder %s33, 1
      %p350 = por %p348, %p349
      %p352 = scmp.ne.s32.totalorder %s337, %s351
      %p353 = scmp.eq.s32.totalorder %s33, 0
      %p354 = por %p352, %p353
      %s355 = ssub.s32 %s27, %s34
      %p356 = scmp.eq.s32.totalorder %s355, 0
      %s358 = sadd.s32 %s357, 1
      %s359 = scalar_select %p356, %s357, %s358
      %p362 = pneg %p356
      %p363 = scmp.eq.s32.totalorder %s27, 1
      %p364 = por %p362, %p363
      %p365 = scmp.ne.s32.totalorder %s357, %s360
      %p366 = scmp.eq.s32.totalorder %s27, 0
      %p367 = por %p365, %p366
      %p368 = scmp.ne.s32.totalorder %s357, %s360
      %p369 = scmp.eq.s32.totalorder %s32, 1
      %p370 = por %p368, %p369
      %p371 = scmp.ne.s32.totalorder %s360, %s361
      %p372 = scmp.eq.s32.totalorder %s32, 0
      %p373 = por %p371, %p372
      %p374 = scmp.ne.s32.totalorder %s360, %s361
      %p375 = scmp.eq.s32.totalorder %s33, 1
      %p376 = por %p374, %p375
      %p378 = scmp.ne.s32.totalorder %s361, %s377
      %p379 = scmp.eq.s32.totalorder %s33, 0
      %p380 = por %p378, %p379
      %p381 = scmp.le.s32.totalorder 1, %s27
      %p382 = scmp.lt.s32.totalorder %s27, 3
      %p383 = pnand %p381, %p382
      %p384 = pneg %p383
      // Predicated region
      $region9: #{decoder_forward.1} parent=5 // pred_check
        _
      $region10: #{decoder_forward.1} parent=5 // pred_check_branch
        %386 = sbr.rel (%p383) target = $region12
      $region11: #{decoder_forward.1} parent=5 // pred_region
        %s387 = ssub.s32 %s27, 1
        // Predicated region
        $region13: #{decoder_forward.1} parent=11 // pred_check
          %p388 = pneg %p74
        $region14: #{decoder_forward.1} parent=11 // pred_check_branch
          %390 = sbr.rel (%p388) target = $region16
        $region15: #{decoder_forward.1} parent=11 // pred_region
          _
        $region16: #{decoder_forward.1} parent=11 // pred_fallthru
          _
        // Predicated region
        $region17: #{decoder_forward.1} parent=11 // pred_check
          %p391 = pneg %p95
        $region18: #{decoder_forward.1} parent=11 // pred_check_branch
          %393 = sbr.rel (%p391) target = $region20
        $region19: #{decoder_forward.1} parent=11 // pred_region
          _
        $region20: #{decoder_forward.1} parent=11 // pred_fallthru
          _
        // Predicated region
        $region21: #{decoder_forward.1} parent=11 // pred_check
          %p394 = pneg %p116
        $region22: #{decoder_forward.1} parent=11 // pred_check_branch
          %396 = sbr.rel (%p394) target = $region24
        $region23: #{decoder_forward.1} parent=11 // pred_region
          _
        $region24: #{decoder_forward.1} parent=11 // pred_fallthru
          _
        // Predicated region
        $region25: #{decoder_forward.1} parent=11 // pred_check
          %p397 = pneg %p137
        $region26: #{decoder_forward.1} parent=11 // pred_check_branch
          %399 = sbr.rel (%p397) target = $region28
        $region27: #{decoder_forward.1} parent=11 // pred_region
          _
        $region28: #{decoder_forward.1} parent=11 // pred_fallthru
          _
        // Predicated region
        $region29: #{decoder_forward.1} parent=11 // pred_check
          %p400 = pneg %p158
        $region30: #{decoder_forward.1} parent=11 // pred_check_branch
          %402 = sbr.rel (%p400) target = $region32
        $region31: #{decoder_forward.1} parent=11 // pred_region
          %s404 = ssub.s32 8192, 8192
          %405 = vsyncadd [#allocation8], %s404
          %s406 = sshll.u32 [#allocation7], 4
          %s407 = int_to_ptr.vmem [resolvable:$true] %s406
          %412 = dma.hbm_to_vmem [thread:$0]  %s5, 8192, %s407, [#allocation8], 128, 128, 8
        $region32: #{decoder_forward.1} parent=11 // pred_fallthru
          _
        // Predicated region
        $region33: #{decoder_forward.1} parent=11 // pred_check
          %p413 = pneg %p179
        $region34: #{decoder_forward.1} parent=11 // pred_check_branch
          %415 = sbr.rel (%p413) target = $region36
        $region35: #{decoder_forward.1} parent=11 // pred_region
          _
        $region36: #{decoder_forward.1} parent=11 // pred_fallthru
          _
        // Predicated region
        $region37: #{decoder_forward.1} parent=11 // pred_check
          %p416 = pneg %p200
        $region38: #{decoder_forward.1} parent=11 // pred_check_branch
          %418 = sbr.rel (%p416) target = $region40
        $region39: #{decoder_forward.1} parent=11 // pred_region
          %s420 = ssub.s32 8192, 8192
          %421 = vsyncadd [#allocation11], %s420
          %s422 = sshll.u32 [#allocation10], 4
          %s423 = int_to_ptr.vmem [resolvable:$true] %s422
          %428 = dma.hbm_to_vmem [thread:$0]  %s7, 8192, %s423, [#allocation11], 128, 128, 8
        $region40: #{decoder_forward.1} parent=11 // pred_fallthru
          _
        // Predicated region
        $region41: #{decoder_forward.1} parent=11 // pred_check
          %p429 = pneg %p221
        $region42: #{decoder_forward.1} parent=11 // pred_check_branch
          %431 = sbr.rel (%p429) target = $region44
        $region43: #{decoder_forward.1} parent=11 // pred_region
          _
        $region44: #{decoder_forward.1} parent=11 // pred_fallthru
          _
        // Predicated region
        $region45: #{decoder_forward.1} parent=11 // pred_check
          %p432 = pneg %p242
        $region46: #{decoder_forward.1} parent=11 // pred_check_branch
          %434 = sbr.rel (%p432) target = $region48
        $region47: #{decoder_forward.1} parent=11 // pred_region
          %s436 = ssub.s32 8192, 8192
          %437 = vsyncadd [#allocation11], %s436
          %s438 = sshll.u32 [#allocation12], 4
          %s439 = int_to_ptr.vmem [resolvable:$true] %s438
          %444 = dma.hbm_to_vmem [thread:$0]  %s9, 8192, %s439, [#allocation11], 128, 128, 8
        $region48: #{decoder_forward.1} parent=11 // pred_fallthru
          _
        // Predicated region
        $region49: #{decoder_forward.1} parent=11 // pred_check
          %p445 = pneg %p263
        $region50: #{decoder_forward.1} parent=11 // pred_check_branch
          %447 = sbr.rel (%p445) target = $region52
        $region51: #{decoder_forward.1} parent=11 // pred_region
          _
        $region52: #{decoder_forward.1} parent=11 // pred_fallthru
          _
        // Predicated region
        $region53: #{decoder_forward.1} parent=11 // pred_check
          %p448 = pneg %p284
        $region54: #{decoder_forward.1} parent=11 // pred_check_branch
          %450 = sbr.rel (%p448) target = $region56
        $region55: #{decoder_forward.1} parent=11 // pred_region
          %s452 = ssub.s32 8192, 8192
          %453 = vsyncadd [#allocation14], %s452
          %s454 = sshll.u32 [#allocation13], 4
          %s455 = int_to_ptr.vmem [resolvable:$true] %s454
          %460 = dma.hbm_to_vmem [thread:$0]  %s11, 8192, %s455, [#allocation14], 128, 128, 8
        $region56: #{decoder_forward.1} parent=11 // pred_fallthru
          _
        // Predicated region
        $region57: #{decoder_forward.1} parent=11 // pred_check
          %p461 = pneg %p305
        $region58: #{decoder_forward.1} parent=11 // pred_check_branch
          %463 = sbr.rel (%p461) target = $region60
        $region59: #{decoder_forward.1} parent=11 // pred_region
          _
        $region60: #{decoder_forward.1} parent=11 // pred_fallthru
          _
        // Predicated region
        $region61: #{decoder_forward.1} parent=11 // pred_check
          %p464 = pneg %p326
        $region62: #{decoder_forward.1} parent=11 // pred_check_branch
          %466 = sbr.rel (%p464) target = $region64
        $region63: #{decoder_forward.1} parent=11 // pred_region
          _
        $region64: #{decoder_forward.1} parent=11 // pred_fallthru
          _
        // Predicated region
        $region65: #{decoder_forward.1} parent=11 // pred_check
          %p467 = pneg %p347
        $region66: #{decoder_forward.1} parent=11 // pred_check_branch
          %469 = sbr.rel (%p467) target = $region68
        $region67: #{decoder_forward.1} parent=11 // pred_region
          _
        $region68: #{decoder_forward.1} parent=11 // pred_fallthru
          _
      $region12: #{decoder_forward.1} parent=5 // pred_fallthru
        _
      %p470 = scmp.lt.s32.totalorder %s27, 2
      // Predicated region
      $region69: #{decoder_forward.1} parent=5 // pred_check
        %p471 = pneg %p470
      $region70: #{decoder_forward.1} parent=5 // pred_check_branch
        %473 = sbr.rel (%p471) target = $region72
      $region71: #{decoder_forward.1} parent=5 // pred_region
        // Predicated region
        $region73: #{decoder_forward.1} parent=71 // pred_check
          %p474 = pneg %p47
        $region74: #{decoder_forward.1} parent=71 // pred_check_branch
          %476 = sbr.rel (%p474) target = $region76
        $region75: #{decoder_forward.1} parent=71 // pred_region
          %p477 = scmp.lt.s32.totalorder %s27, 1
          %s478 = scalar_select %p477, %s27, 1
          %s479 = scalar_lea.vmem %s0, %s478
        $region76: #{decoder_forward.1} parent=71 // pred_fallthru
          _
      $region72: #{decoder_forward.1} parent=5 // pred_fallthru
        _
      %p480 = scmp.le.s32.totalorder 1, %s27
      %p481 = scmp.lt.s32.totalorder %s27, 3
      %p482 = pnand %p480, %p481
      %p483 = pneg %p482
      // Predicated region
      $region77: #{decoder_forward.1} parent=5 // pred_check
        _
      $region78: #{decoder_forward.1} parent=5 // pred_check_branch
        %485 = sbr.rel (%p482) target = $region80
      $region79: #{decoder_forward.1} parent=5 // pred_region
        %s486 = ssub.s32 %s27, 1
        // Predicated region
        $region81: #{decoder_forward.1} parent=79 // pred_check
          %p487 = pneg %p158
        $region82: #{decoder_forward.1} parent=79 // pred_check_branch
          %489 = sbr.rel (%p487) target = $region84
        $region83: #{decoder_forward.1} parent=79 // pred_region
          %490 = dma.done [#allocation8], 8192
        $region84: #{decoder_forward.1} parent=79 // pred_fallthru
          _
        // Predicated region
        $region85: #{decoder_forward.1} parent=79 // pred_check
          %p491 = pneg %p200
        $region86: #{decoder_forward.1} parent=79 // pred_check_branch
          %493 = sbr.rel (%p491) target = $region88
        $region87: #{decoder_forward.1} parent=79 // pred_region
          %494 = dma.done [#allocation11], 8192
        $region88: #{decoder_forward.1} parent=79 // pred_fallthru
          _
        // Predicated region
        $region89: #{decoder_forward.1} parent=79 // pred_check
          %p495 = pneg %p242
        $region90: #{decoder_forward.1} parent=79 // pred_check_branch
          %497 = sbr.rel (%p495) target = $region92
        $region91: #{decoder_forward.1} parent=79 // pred_region
          %498 = dma.done [#allocation11], 8192
        $region92: #{decoder_forward.1} parent=79 // pred_fallthru
          _
        // Predicated region
        $region93: #{decoder_forward.1} parent=79 // pred_check
          %p499 = pneg %p284
        $region94: #{decoder_forward.1} parent=79 // pred_check_branch
          %501 = sbr.rel (%p499) target = $region96
        $region95: #{decoder_forward.1} parent=79 // pred_region
          %502 = dma.done [#allocation14], 8192
        $region96: #{decoder_forward.1} parent=79 // pred_fallthru
          _
        %p503 = scmp.lt.s32.totalorder %s32, 1
        %s504 = scalar_select %p503, %s32, 1
        %s505 = scalar_lea.vmem %s0, %s504
        %p506 = pneg %p53
        %p507 = pneg %p50
        %p508 = pneg %p74
        %p509 = pneg %p71
        %p510 = pneg %p95
        %p511 = pneg %p92
        %p512 = pneg %p116
        %p513 = pneg %p113
        %p514 = pneg %p137
        %p515 = pneg %p134
        %p516 = pneg %p158
        %p517 = pneg %p155
        %p518 = pneg %p179
        %p519 = pneg %p176
        %p520 = pneg %p200
        %p521 = pneg %p197
        %p522 = pneg %p221
        %p523 = pneg %p218
        %p524 = pneg %p242
        %p525 = pneg %p239
        %p526 = pneg %p263
        %p527 = pneg %p260
        %p528 = pneg %p284
        %p529 = pneg %p281
        %p530 = pneg %p305
        %p531 = pneg %p302
        %p532 = pneg %p326
        %p533 = pneg %p323
        %p534 = pneg %p347
        %p535 = pneg %p344
        %p536 = pneg %p373
        %p537 = pneg %p370
        %s538 = sand.u32 %s360, 1
        %s539 = scalar_lea.sflag [#allocation9], %s538
        %s540 = sand.u32 %s360, 1
        %s541 = smul.addr %s540, 64
        %s542 = scalar_lea.vmem [#allocation15], %s541
        %p543 = scmp.lt.s32.totalorder %s32, 1
        %s544 = scalar_select %p543, %s32, 1
        %s545 = scalar_lea.vmem %s0, %s544
        %v546 = vld [vmem:[%s545] sm:$0x1]
        %v547 = vld [vmem:[%s1] sm:$0xff]
        %v548 = vld [vmem:[%s1 + $0x8] sm:$0xff]
        %v549 = vld [vmem:[%s1 + $0x10] sm:$0xff]
        %v550 = vld [vmem:[%s1 + $0x18] sm:$0xff]
        %v551 = vld [vmem:[%s1 + $0x20] sm:$0xff]
        %v552 = vld [vmem:[%s1 + $0x28] sm:$0xff]
        %v553 = vld [vmem:[%s1 + $0x30] sm:$0xff]
        %v554 = vld [vmem:[%s1 + $0x38] sm:$0xff]
        %v555 = vld [vmem:[%s2] sm:$0x1]
        %vm556 = vcmask 523264
        %v558 = vsel %vm556, %v546, 0
        %560 = vmatprep.subr.mxu0 0.0
        %561 = vmatpush1.msra.mxu0 %v547
        %562 = vmatprep.subr.mxu0 0.0
        %563 = vmatpush1.msra.mxu0 %v548
        %564 = vmatprep.subr.mxu0 0.0
        %565 = vmatpush1.msra.mxu0 %v549
        %566 = vmatprep.subr.mxu0 0.0
        %567 = vmatpush1.msra.mxu0 %v550
        %568 = vmatprep.subr.mxu0 0.0
        %569 = vmatpush1.msra.mxu0 %v551
        %570 = vmatprep.subr.mxu0 0.0
        %571 = vmatpush1.msra.mxu0 %v552
        %572 = vmatprep.subr.mxu0 0.0
        %573 = vmatpush1.msra.mxu0 %v553
        %574 = vmatprep.subr.mxu0 0.0
        %575 = vmatpush1.msra.mxu0 %v554
        %576 = vmatprep.subr.mxu0 0.0
        %577 = vmatpush1.msra.mxu0 0.0
        %578 = vmatprep.subr.mxu0 0.0
        %579 = vmatpush1.msra.mxu0 0.0
        %580 = vmatprep.subr.mxu0 0.0
        %581 = vmatpush1.msra.mxu0 0.0
        %582 = vmatprep.subr.mxu0 0.0
        %583 = vmatpush1.msra.mxu0 0.0
        %584 = vmatprep.subr.mxu0 0.0
        %585 = vmatpush1.msra.mxu0 0.0
        %586 = vmatprep.subr.mxu0 0.0
        %587 = vmatpush1.msra.mxu0 0.0
        %588 = vmatprep.subr.mxu0 0.0
        %589 = vmatpush1.msra.mxu0 0.0
        %590 = vmatprep.subr.mxu0 0.0
        %591 = vmatpush1.msra.mxu0 0.0
        %592 = vmatprep.subr.mxu0 0.0
        %593 = vmatpush1.msra.mxu0 0.0
        %594 = vmatprep.subr.mxu0 0.0
        %595 = vmatpush1.msra.mxu0 0.0
        %596 = vmatprep.subr.mxu0 0.0
        %597 = vmatpush1.msra.mxu0 0.0
        %598 = vmatprep.subr.mxu0 0.0
        %599 = vmatpush1.msra.mxu0 0.0
        %600 = vmatprep.subr.mxu0 0.0
        %601 = vmatpush1.msra.mxu0 0.0
        %602 = vmatprep.subr.mxu0 0.0
        %603 = vmatpush1.msra.mxu0 0.0
        %604 = vmatprep.subr.mxu0 0.0
        %605 = vmatpush1.msra.mxu0 0.0
        %606 = vmatprep.subr.mxu0 0.0
        %607 = vmatpush1.msra.mxu0 0.0
        %608 = vmatprep.subr.mxu0 0.0
        %609 = vmatpush1.msra.mxu0 0.0
        %610 = vmatprep.subr.mxu0 0.0
        %611 = vmatpush1.msra.mxu0 0.0
        %612 = vmatprep.subr.mxu0 0.0
        %613 = vmatpush1.msra.mxu0 0.0
        %614 = vmatprep.subr.mxu0 0.0
        %615 = vmatpush1.msra.mxu0 0.0
        %616 = vmatprep.subr.mxu0 0.0
        %617 = vmatpush1.msra.mxu0 0.0
        %618 = vmatprep.subr.mxu0 0.0
        %619 = vmatpush1.msra.mxu0 0.0
        %620 = vmatprep.subr.mxu0 0.0
        %621 = vmatpush1.msra.mxu0 0.0
        %622 = vmatprep.subr.mxu0 0.0
        %623 = vmatpush1.msra.mxu0 0.0
        %624 = vmatprep.mubr.f32.mxu0 0.0
        %625 = vmatmul.mubr.f32.gmra.mrb[0].mxu0 %v558
        %v626 = vpop.f32.mrb[0].mxu0
        %v627 = vadd.f32 %v555, %v626
        %v628 = vpop.f32.mrb[0].mxu0
        %629 = vdwg.mxu0
        %v630 = vmax.f32 %v627, 0.0
        %v631 = vld [vmem:[%s4] sm:$0x1]
        %s632 = scalar_lea.vmem %s3, 128
        %v633 = vld [vmem:[%s632] sm:$0xff]
        %v634 = vld [vmem:[%s632 + $0x8] sm:$0xff]
        %v635 = vld [vmem:[%s632 + $0x10] sm:$0xff]
        %v636 = vld [vmem:[%s632 + $0x18] sm:$0xff]
        %v637 = vld [vmem:[%s632 + $0x20] sm:$0xff]
        %v638 = vld [vmem:[%s632 + $0x28] sm:$0xff]
        %v639 = vld [vmem:[%s632 + $0x30] sm:$0xff]
        %v640 = vld [vmem:[%s632 + $0x38] sm:$0xff]
        %v641 = vld [vmem:[%s632 + $0x40] sm:$0xff]
        %v642 = vld [vmem:[%s632 + $0x48] sm:$0xff]
        %v643 = vld [vmem:[%s632 + $0x50] sm:$0xff]
        %v644 = vld [vmem:[%s632 + $0x58] sm:$0xff]
        %v645 = vld [vmem:[%s632 + $0x60] sm:$0xff]
        %v646 = vld [vmem:[%s632 + $0x68] sm:$0xff]
        %v647 = vld [vmem:[%s632 + $0x70] sm:$0xff]
        %v648 = vld [vmem:[%s632 + $0x78] sm:$0xff]
        %s649 = scalar_lea.vmem %s3, 256
        %v650 = vld [vmem:[%s649] sm:$0xff]
        %v651 = vld [vmem:[%s649 + $0x8] sm:$0xff]
        %v652 = vld [vmem:[%s649 + $0x10] sm:$0xff]
        %v653 = vld [vmem:[%s649 + $0x18] sm:$0xff]
        %v654 = vld [vmem:[%s649 + $0x20] sm:$0xff]
        %v655 = vld [vmem:[%s649 + $0x28] sm:$0xff]
        %v656 = vld [vmem:[%s649 + $0x30] sm:$0xff]
        %v657 = vld [vmem:[%s649 + $0x38] sm:$0xff]
        %v658 = vld [vmem:[%s649 + $0x40] sm:$0xff]
        %v659 = vld [vmem:[%s649 + $0x48] sm:$0xff]
        %v660 = vld [vmem:[%s649 + $0x50] sm:$0xff]
        %v661 = vld [vmem:[%s649 + $0x58] sm:$0xff]
        %v662 = vld [vmem:[%s649 + $0x60] sm:$0xff]
        %v663 = vld [vmem:[%s649 + $0x68] sm:$0xff]
        %v664 = vld [vmem:[%s649 + $0x70] sm:$0xff]
        %v665 = vld [vmem:[%s649 + $0x78] sm:$0xff]
        %666 = vmatprep.subr.mxu0 0.0
        %667 = vmatpush1.msra.mxu0 %v633
        %668 = vmatprep.subr.mxu0 0.0
        %669 = vmatpush1.msra.mxu0 %v634
        %670 = vmatprep.subr.mxu0 0.0
        %671 = vmatpush1.msra.mxu0 %v635
        %672 = vmatprep.subr.mxu0 0.0
        %673 = vmatpush1.msra.mxu0 %v636
        %674 = vmatprep.subr.mxu0 0.0
        %675 = vmatpush1.msra.mxu0 %v637
        %676 = vmatprep.subr.mxu0 0.0
        %677 = vmatpush1.msra.mxu0 %v638
        %678 = vmatprep.subr.mxu0 0.0
        %679 = vmatpush1.msra.mxu0 %v639
        %680 = vmatprep.subr.mxu0 0.0
        %681 = vmatpush1.msra.mxu0 %v640
        %682 = vmatprep.subr.mxu0 0.0
        %683 = vmatpush1.msra.mxu0 %v641
        %684 = vmatprep.subr.mxu0 0.0
        %685 = vmatpush1.msra.mxu0 %v642
        %686 = vmatprep.subr.mxu0 0.0
        %687 = vmatpush1.msra.mxu0 %v643
        %688 = vmatprep.subr.mxu0 0.0
        %689 = vmatpush1.msra.mxu0 %v644
        %690 = vmatprep.subr.mxu0 0.0
        %691 = vmatpush1.msra.mxu0 %v645
        %692 = vmatprep.subr.mxu0 0.0
        %693 = vmatpush1.msra.mxu0 %v646
        %694 = vmatprep.subr.mxu0 0.0
        %695 = vmatpush1.msra.mxu0 %v647
        %696 = vmatprep.subr.mxu0 0.0
        %697 = vmatpush1.msra.mxu0 %v648
        %698 = vmatprep.subr.mxu0 0.0
        %699 = vmatpush1.msra.mxu0 0.0
        %700 = vmatprep.subr.mxu0 0.0
        %701 = vmatpush1.msra.mxu0 0.0
        %702 = vmatprep.subr.mxu0 0.0
        %703 = vmatpush1.msra.mxu0 0.0
        %704 = vmatprep.subr.mxu0 0.0
        %705 = vmatpush1.msra.mxu0 0.0
        %706 = vmatprep.subr.mxu0 0.0
        %707 = vmatpush1.msra.mxu0 0.0
        %708 = vmatprep.subr.mxu0 0.0
        %709 = vmatpush1.msra.mxu0 0.0
        %710 = vmatprep.subr.mxu0 0.0
        %711 = vmatpush1.msra.mxu0 0.0
        %712 = vmatprep.subr.mxu0 0.0
        %713 = vmatpush1.msra.mxu0 0.0
        %714 = vmatprep.subr.mxu0 0.0
        %715 = vmatpush1.msra.mxu0 0.0
        %716 = vmatprep.subr.mxu0 0.0
        %717 = vmatpush1.msra.mxu0 0.0
        %718 = vmatprep.subr.mxu0 0.0
        %719 = vmatpush1.msra.mxu0 0.0
        %720 = vmatprep.subr.mxu0 0.0
        %721 = vmatpush1.msra.mxu0 0.0
        %722 = vmatprep.subr.mxu0 0.0
        %723 = vmatpush1.msra.mxu0 0.0
        %724 = vmatprep.subr.mxu0 0.0
        %725 = vmatpush1.msra.mxu0 0.0
        %726 = vmatprep.subr.mxu0 0.0
        %727 = vmatpush1.msra.mxu0 0.0
        %728 = vmatprep.subr.mxu0 0.0
        %729 = vmatpush1.msra.mxu0 0.0
        %730 = vmatprep.mubr.f32.mxu0 0.0
        %731 = vmatmul.mubr.f32.gmra.mrb[0].mxu0 %v630
        %v732 = vpop.f32.mrb[0].mxu0
        %v733 = vadd.f32 %v631, %v732
        %v734 = vpop.f32.mrb[0].mxu0
        %735 = vdwg.mxu0
        %v736 = vmax.f32 %v733, 0.0
        %737 = vmatprep.subr.mxu0 0.0
        %738 = vmatpush1.msra.mxu0 %v650
        %739 = vmatprep.subr.mxu0 0.0
        %740 = vmatpush1.msra.mxu0 %v651
        %741 = vmatprep.subr.mxu0 0.0
        %742 = vmatpush1.msra.mxu0 %v652
        %743 = vmatprep.subr.mxu0 0.0
        %744 = vmatpush1.msra.mxu0 %v653
        %745 = vmatprep.subr.mxu0 0.0
        %746 = vmatpush1.msra.mxu0 %v654
        %747 = vmatprep.subr.mxu0 0.0
        %748 = vmatpush1.msra.mxu0 %v655
        %749 = vmatprep.subr.mxu0 0.0
        %750 = vmatpush1.msra.mxu0 %v656
        %751 = vmatprep.subr.mxu0 0.0
        %752 = vmatpush1.msra.mxu0 %v657
        %753 = vmatprep.subr.mxu0 0.0
        %754 = vmatpush1.msra.mxu0 %v658
        %755 = vmatprep.subr.mxu0 0.0
        %756 = vmatpush1.msra.mxu0 %v659
        %757 = vmatprep.subr.mxu0 0.0
        %758 = vmatpush1.msra.mxu0 %v660
        %759 = vmatprep.subr.mxu0 0.0
        %760 = vmatpush1.msra.mxu0 %v661
        %761 = vmatprep.subr.mxu0 0.0
        %762 = vmatpush1.msra.mxu0 %v662
        %763 = vmatprep.subr.mxu0 0.0
        %764 = vmatpush1.msra.mxu0 %v663
        %765 = vmatprep.subr.mxu0 0.0
        %766 = vmatpush1.msra.mxu0 %v664
        %767 = vmatprep.subr.mxu0 0.0
        %768 = vmatpush1.msra.mxu0 %v665
        %769 = vmatprep.subr.mxu0 0.0
        %770 = vmatpush1.msra.mxu0 0.0
        %771 = vmatprep.subr.mxu0 0.0
        %772 = vmatpush1.msra.mxu0 0.0
        %773 = vmatprep.subr.mxu0 0.0
        %774 = vmatpush1.msra.mxu0 0.0
        %775 = vmatprep.subr.mxu0 0.0
        %776 = vmatpush1.msra.mxu0 0.0
        %777 = vmatprep.subr.mxu0 0.0
        %778 = vmatpush1.msra.mxu0 0.0
        %779 = vmatprep.subr.mxu0 0.0
        %780 = vmatpush1.msra.mxu0 0.0
        %781 = vmatprep.subr.mxu0 0.0
        %782 = vmatpush1.msra.mxu0 0.0
        %783 = vmatprep.subr.mxu0 0.0
        %784 = vmatpush1.msra.mxu0 0.0
        %785 = vmatprep.subr.mxu0 0.0
        %786 = vmatpush1.msra.mxu0 0.0
        %787 = vmatprep.subr.mxu0 0.0
        %788 = vmatpush1.msra.mxu0 0.0
        %789 = vmatprep.subr.mxu0 0.0
        %790 = vmatpush1.msra.mxu0 0.0
        %791 = vmatprep.subr.mxu0 0.0
        %792 = vmatpush1.msra.mxu0 0.0
        %793 = vmatprep.subr.mxu0 0.0
        %794 = vmatpush1.msra.mxu0 0.0
        %795 = vmatprep.subr.mxu0 0.0
        %796 = vmatpush1.msra.mxu0 0.0
        %797 = vmatprep.subr.mxu0 0.0
        %798 = vmatpush1.msra.mxu0 0.0
        %799 = vmatprep.subr.mxu0 0.0
        %800 = vmatpush1.msra.mxu0 0.0
        %801 = vmatprep.mubr.f32.mxu0 0.0
        %802 = vmatmul.mubr.f32.gmra.mrb[0].mxu0 %v630
        %v803 = vpop.f32.mrb[0].mxu0
        %v804 = vadd.f32 %v631, %v803
        %v805 = vpop.f32.mrb[0].mxu0
        %806 = vdwg.mxu0
        %v807 = vmax.f32 %v804, 0.0
        %808 = vst [vmem:[#allocation2] sm:$0x1] 0.0
        %809 = vst [vmem:[#allocation2 + $0x3] sm:$0x1] 0.0
        %810 = vst [vmem:[#allocation2 + $0x1] sm:$0x1] %v736
        %811 = vst [vmem:[#allocation2 + $0x2] sm:$0x1] %v807
        %v812 = vld [vmem:[%s6] sm:$0x1]
        %v813 = vld [vmem:[#allocation2 + $0x1] sm:$0x3]
        %v814 = vld [vmem:[#allocation2] sm:$0x3]
        %v815 = vld [vmem:[#allocation2 + $0x2] sm:$0x3]
        %s816 = scalar_lea.vmem [#allocation7], 128
        %v817 = vld [vmem:[%s816] sm:$0xff]
        %v818 = vld [vmem:[%s816 + $0x8] sm:$0xff]
        %v819 = vld [vmem:[%s816 + $0x10] sm:$0xff]
        %v820 = vld [vmem:[%s816 + $0x18] sm:$0xff]
        %v821 = vld [vmem:[%s816 + $0x20] sm:$0xff]
        %v822 = vld [vmem:[%s816 + $0x28] sm:$0xff]
        %v823 = vld [vmem:[%s816 + $0x30] sm:$0xff]
        %v824 = vld [vmem:[%s816 + $0x38] sm:$0xff]
        %v825 = vld [vmem:[%s816 + $0x40] sm:$0xff]
        %v826 = vld [vmem:[%s816 + $0x48] sm:$0xff]
        %v827 = vld [vmem:[%s816 + $0x50] sm:$0xff]
        %v828 = vld [vmem:[%s816 + $0x58] sm:$0xff]
        %v829 = vld [vmem:[%s816 + $0x60] sm:$0xff]
        %v830 = vld [vmem:[%s816 + $0x68] sm:$0xff]
        %v831 = vld [vmem:[%s816 + $0x70] sm:$0xff]
        %v832 = vld [vmem:[%s816 + $0x78] sm:$0xff]
        %s833 = scalar_lea.vmem [#allocation7], 384
        %v834 = vld [vmem:[%s833] sm:$0xff]
        %v835 = vld [vmem:[%s833 + $0x8] sm:$0xff]
        %v836 = vld [vmem:[%s833 + $0x10] sm:$0xff]
        %v837 = vld [vmem:[%s833 + $0x18] sm:$0xff]
        %v838 = vld [vmem:[%s833 + $0x20] sm:$0xff]
        %v839 = vld [vmem:[%s833 + $0x28] sm:$0xff]
        %v840 = vld [vmem:[%s833 + $0x30] sm:$0xff]
        %v841 = vld [vmem:[%s833 + $0x38] sm:$0xff]
        %v842 = vld [vmem:[%s833 + $0x40] sm:$0xff]
        %v843 = vld [vmem:[%s833 + $0x48] sm:$0xff]
        %v844 = vld [vmem:[%s833 + $0x50] sm:$0xff]
        %v845 = vld [vmem:[%s833 + $0x58] sm:$0xff]
        %v846 = vld [vmem:[%s833 + $0x60] sm:$0xff]
        %v847 = vld [vmem:[%s833 + $0x68] sm:$0xff]
        %v848 = vld [vmem:[%s833 + $0x70] sm:$0xff]
        %v849 = vld [vmem:[%s833 + $0x78] sm:$0xff]
        %850 = vmatprep.subr.mxu0 0.0
        %851 = vmatpush1.msra.mxu0 %v834
        %852 = vmatprep.subr.mxu0 0.0
        %853 = vmatpush1.msra.mxu0 %v835
        %854 = vmatprep.subr.mxu0 0.0
        %855 = vmatpush1.msra.mxu0 %v836
        %856 = vmatprep.subr.mxu0 0.0
        %857 = vmatpush1.msra.mxu0 %v837
        %858 = vmatprep.subr.mxu0 0.0
        %859 = vmatpush1.msra.mxu0 %v838
        %860 = vmatprep.subr.mxu0 0.0
        %861 = vmatpush1.msra.mxu0 %v839
        %862 = vmatprep.subr.mxu0 0.0
        %863 = vmatpush1.msra.mxu0 %v840
        %864 = vmatprep.subr.mxu0 0.0
        %865 = vmatpush1.msra.mxu0 %v841
        %866 = vmatprep.subr.mxu0 0.0
        %867 = vmatpush1.msra.mxu0 %v842
        %868 = vmatprep.subr.mxu0 0.0
        %869 = vmatpush1.msra.mxu0 %v843
        %870 = vmatprep.subr.mxu0 0.0
        %871 = vmatpush1.msra.mxu0 %v844
        %872 = vmatprep.subr.mxu0 0.0
        %873 = vmatpush1.msra.mxu0 %v845
        %874 = vmatprep.subr.mxu0 0.0
        %875 = vmatpush1.msra.mxu0 %v846
        %876 = vmatprep.subr.mxu0 0.0
        %877 = vmatpush1.msra.mxu0 %v847
        %878 = vmatprep.subr.mxu0 0.0
        %879 = vmatpush1.msra.mxu0 %v848
        %880 = vmatprep.subr.mxu0 0.0
        %881 = vmatpush1.msra.mxu0 %v849
        %882 = vmatprep.subr.mxu0 0.0
        %883 = vmatpush1.msra.mxu0 0.0
        %884 = vmatprep.subr.mxu0 0.0
        %885 = vmatpush1.msra.mxu0 0.0
        %886 = vmatprep.subr.mxu0 0.0
        %887 = vmatpush1.msra.mxu0 0.0
        %888 = vmatprep.subr.mxu0 0.0
        %889 = vmatpush1.msra.mxu0 0.0
        %890 = vmatprep.subr.mxu0 0.0
        %891 = vmatpush1.msra.mxu0 0.0
        %892 = vmatprep.subr.mxu0 0.0
        %893 = vmatpush1.msra.mxu0 0.0
        %894 = vmatprep.subr.mxu0 0.0
        %895 = vmatpush1.msra.mxu0 0.0
        %896 = vmatprep.subr.mxu0 0.0
        %897 = vmatpush1.msra.mxu0 0.0
        %898 = vmatprep.subr.mxu0 0.0
        %899 = vmatpush1.msra.mxu0 0.0
        %900 = vmatprep.subr.mxu0 0.0
        %901 = vmatpush1.msra.mxu0 0.0
        %902 = vmatprep.subr.mxu0 0.0
        %903 = vmatpush1.msra.mxu0 0.0
        %904 = vmatprep.subr.mxu0 0.0
        %905 = vmatpush1.msra.mxu0 0.0
        %906 = vmatprep.subr.mxu0 0.0
        %907 = vmatpush1.msra.mxu0 0.0
        %908 = vmatprep.subr.mxu0 0.0
        %909 = vmatpush1.msra.mxu0 0.0
        %910 = vmatprep.subr.mxu0 0.0
        %911 = vmatpush1.msra.mxu0 0.0
        %912 = vmatprep.subr.mxu0 0.0
        %913 = vmatpush1.msra.mxu0 0.0
        %914 = vmatprep.mubr.f32.mxu0 0.0
        %915 = vmatmul.mubr.f32.gmra.mrb[0].mxu0 %v814
        %v916 = vpop.f32.mrb[0].mxu0
        %v917 = vadd.f32 0.0, %v916
        %v918 = vpop.f32.mrb[0].mxu0
        %919 = vdwg.mxu0
        %920 = vmatprep.subr.mxu0 0.0
        %921 = vmatpush1.msra.mxu0 %v817
        %922 = vmatprep.subr.mxu0 0.0
        %923 = vmatpush1.msra.mxu0 %v818
        %924 = vmatprep.subr.mxu0 0.0
        %925 = vmatpush1.msra.mxu0 %v819
        %926 = vmatprep.subr.mxu0 0.0
        %927 = vmatpush1.msra.mxu0 %v820
        %928 = vmatprep.subr.mxu0 0.0
        %929 = vmatpush1.msra.mxu0 %v821
        %930 = vmatprep.subr.mxu0 0.0
        %931 = vmatpush1.msra.mxu0 %v822
        %932 = vmatprep.subr.mxu0 0.0
        %933 = vmatpush1.msra.mxu0 %v823
        %934 = vmatprep.subr.mxu0 0.0
        %935 = vmatpush1.msra.mxu0 %v824
        %936 = vmatprep.subr.mxu0 0.0
        %937 = vmatpush1.msra.mxu0 %v825
        %938 = vmatprep.subr.mxu0 0.0
        %939 = vmatpush1.msra.mxu0 %v826
        %940 = vmatprep.subr.mxu0 0.0
        %941 = vmatpush1.msra.mxu0 %v827
        %942 = vmatprep.subr.mxu0 0.0
        %943 = vmatpush1.msra.mxu0 %v828
        %944 = vmatprep.subr.mxu0 0.0
        %945 = vmatpush1.msra.mxu0 %v829
        %946 = vmatprep.subr.mxu0 0.0
        %947 = vmatpush1.msra.mxu0 %v830
        %948 = vmatprep.subr.mxu0 0.0
        %949 = vmatpush1.msra.mxu0 %v831
        %950 = vmatprep.subr.mxu0 0.0
        %951 = vmatpush1.msra.mxu0 %v832
        %952 = vmatprep.subr.mxu0 0.0
        %953 = vmatpush1.msra.mxu0 0.0
        %954 = vmatprep.subr.mxu0 0.0
        %955 = vmatpush1.msra.mxu0 0.0
        %956 = vmatprep.subr.mxu0 0.0
        %957 = vmatpush1.msra.mxu0 0.0
        %958 = vmatprep.subr.mxu0 0.0
        %959 = vmatpush1.msra.mxu0 0.0
        %960 = vmatprep.subr.mxu0 0.0
        %961 = vmatpush1.msra.mxu0 0.0
        %962 = vmatprep.subr.mxu0 0.0
        %963 = vmatpush1.msra.mxu0 0.0
        %964 = vmatprep.subr.mxu0 0.0
        %965 = vmatpush1.msra.mxu0 0.0
        %966 = vmatprep.subr.mxu0 0.0
        %967 = vmatpush1.msra.mxu0 0.0
        %968 = vmatprep.subr.mxu0 0.0
        %969 = vmatpush1.msra.mxu0 0.0
        %970 = vmatprep.subr.mxu0 0.0
        %971 = vmatpush1.msra.mxu0 0.0
        %972 = vmatprep.subr.mxu0 0.0
        %973 = vmatpush1.msra.mxu0 0.0
        %974 = vmatprep.subr.mxu0 0.0
        %975 = vmatpush1.msra.mxu0 0.0
        %976 = vmatprep.subr.mxu0 0.0
        %977 = vmatpush1.msra.mxu0 0.0
        %978 = vmatprep.subr.mxu0 0.0
        %979 = vmatpush1.msra.mxu0 0.0
        %980 = vmatprep.subr.mxu0 0.0
        %981 = vmatpush1.msra.mxu0 0.0
        %982 = vmatprep.subr.mxu0 0.0
        %983 = vmatpush1.msra.mxu0 0.0
        %984 = vmatprep.mubr.f32.mxu0 0.0
        %985 = vmatmul.mubr.f32.gmra.mrb[0].mxu0 %v813
        %v986 = vpop.f32.mrb[0].mxu0
        %v987 = vadd.f32 %v917, %v986
        %v988 = vpop.f32.mrb[0].mxu0
        %989 = vdwg.mxu0
        %s990 = scalar_lea.vmem [#allocation7], 256
        %v991 = vld [vmem:[%s990] sm:$0xff]
        %v992 = vld [vmem:[%s990 + $0x8] sm:$0xff]
        %v993 = vld [vmem:[%s990 + $0x10] sm:$0xff]
        %v994 = vld [vmem:[%s990 + $0x18] sm:$0xff]
        %v995 = vld [vmem:[%s990 + $0x20] sm:$0xff]
        %v996 = vld [vmem:[%s990 + $0x28] sm:$0xff]
        %v997 = vld [vmem:[%s990 + $0x30] sm:$0xff]
        %v998 = vld [vmem:[%s990 + $0x38] sm:$0xff]
        %v999 = vld [vmem:[%s990 + $0x40] sm:$0xff]
        %v1000 = vld [vmem:[%s990 + $0x48] sm:$0xff]
        %v1001 = vld [vmem:[%s990 + $0x50] sm:$0xff]
        %v1002 = vld [vmem:[%s990 + $0x58] sm:$0xff]
        %v1003 = vld [vmem:[%s990 + $0x60] sm:$0xff]
        %v1004 = vld [vmem:[%s990 + $0x68] sm:$0xff]
        %v1005 = vld [vmem:[%s990 + $0x70] sm:$0xff]
        %v1006 = vld [vmem:[%s990 + $0x78] sm:$0xff]
        %v1007 = vld [vmem:[#allocation7] sm:$0xff]
        %v1008 = vld [vmem:[#allocation7 + $0x8] sm:$0xff]
        %v1009 = vld [vmem:[#allocation7 + $0x10] sm:$0xff]
        %v1010 = vld [vmem:[#allocation7 + $0x18] sm:$0xff]
        %v1011 = vld [vmem:[#allocation7 + $0x20] sm:$0xff]
        %v1012 = vld [vmem:[#allocation7 + $0x28] sm:$0xff]
        %v1013 = vld [vmem:[#allocation7 + $0x30] sm:$0xff]
        %v1014 = vld [vmem:[#allocation7 + $0x38] sm:$0xff]
        %v1015 = vld [vmem:[#allocation7 + $0x40] sm:$0xff]
        %v1016 = vld [vmem:[#allocation7 + $0x48] sm:$0xff]
        %v1017 = vld [vmem:[#allocation7 + $0x50] sm:$0xff]
        %v1018 = vld [vmem:[#allocation7 + $0x58] sm:$0xff]
        %v1019 = vld [vmem:[#allocation7 + $0x60] sm:$0xff]
        %v1020 = vld [vmem:[#allocation7 + $0x68] sm:$0xff]
        %v1021 = vld [vmem:[#allocation7 + $0x70] sm:$0xff]
        %v1022 = vld [vmem:[#allocation7 + $0x78] sm:$0xff]
        %1023 = vmatprep.subr.mxu0 0.0
        %1024 = vmatpush1.msra.mxu0 %v1007
        %1025 = vmatprep.subr.mxu0 0.0
        %1026 = vmatpush1.msra.mxu0 %v1008
        %1027 = vmatprep.subr.mxu0 0.0
        %1028 = vmatpush1.msra.mxu0 %v1009
        %1029 = vmatprep.subr.mxu0 0.0
        %1030 = vmatpush1.msra.mxu0 %v1010
        %1031 = vmatprep.subr.mxu0 0.0
        %1032 = vmatpush1.msra.mxu0 %v1011
        %1033 = vmatprep.subr.mxu0 0.0
        %1034 = vmatpush1.msra.mxu0 %v1012
        %1035 = vmatprep.subr.mxu0 0.0
        %1036 = vmatpush1.msra.mxu0 %v1013
        %1037 = vmatprep.subr.mxu0 0.0
        %1038 = vmatpush1.msra.mxu0 %v1014
        %1039 = vmatprep.subr.mxu0 0.0
        %1040 = vmatpush1.msra.mxu0 %v1015
        %1041 = vmatprep.subr.mxu0 0.0
        %1042 = vmatpush1.msra.mxu0 %v1016
        %1043 = vmatprep.subr.mxu0 0.0
        %1044 = vmatpush1.msra.mxu0 %v1017
        %1045 = vmatprep.subr.mxu0 0.0
        %1046 = vmatpush1.msra.mxu0 %v1018
        %1047 = vmatprep.subr.mxu0 0.0
        %1048 = vmatpush1.msra.mxu0 %v1019
        %1049 = vmatprep.subr.mxu0 0.0
        %1050 = vmatpush1.msra.mxu0 %v1020
        %1051 = vmatprep.subr.mxu0 0.0
        %1052 = vmatpush1.msra.mxu0 %v1021
        %1053 = vmatprep.subr.mxu0 0.0
        %1054 = vmatpush1.msra.mxu0 %v1022
        %1055 = vmatprep.subr.mxu0 0.0
        %1056 = vmatpush1.msra.mxu0 0.0
        %1057 = vmatprep.subr.mxu0 0.0
        %1058 = vmatpush1.msra.mxu0 0.0
        %1059 = vmatprep.subr.mxu0 0.0
        %1060 = vmatpush1.msra.mxu0 0.0
        %1061 = vmatprep.subr.mxu0 0.0
        %1062 = vmatpush1.msra.mxu0 0.0
        %1063 = vmatprep.subr.mxu0 0.0
        %1064 = vmatpush1.msra.mxu0 0.0
        %1065 = vmatprep.subr.mxu0 0.0
        %1066 = vmatpush1.msra.mxu0 0.0
        %1067 = vmatprep.subr.mxu0 0.0
        %1068 = vmatpush1.msra.mxu0 0.0
        %1069 = vmatprep.subr.mxu0 0.0
        %1070 = vmatpush1.msra.mxu0 0.0
        %1071 = vmatprep.subr.mxu0 0.0
        %1072 = vmatpush1.msra.mxu0 0.0
        %1073 = vmatprep.subr.mxu0 0.0
        %1074 = vmatpush1.msra.mxu0 0.0
        %1075 = vmatprep.subr.mxu0 0.0
        %1076 = vmatpush1.msra.mxu0 0.0
        %1077 = vmatprep.subr.mxu0 0.0
        %1078 = vmatpush1.msra.mxu0 0.0
        %1079 = vmatprep.subr.mxu0 0.0
        %1080 = vmatpush1.msra.mxu0 0.0
        %1081 = vmatprep.subr.mxu0 0.0
        %1082 = vmatpush1.msra.mxu0 0.0
        %1083 = vmatprep.subr.mxu0 0.0
        %1084 = vmatpush1.msra.mxu0 0.0
        %1085 = vmatprep.subr.mxu0 0.0
        %1086 = vmatpush1.msra.mxu0 0.0
        %1087 = vmatprep.mubr.f32.mxu0 0.0
        %1088 = vmatmul.mubr.f32.gmra.mrb[0].mxu0 %v815
        %v1089 = vpop.f32.mrb[0].mxu0
        %v1090 = vadd.f32 0.0, %v1089
        %v1091 = vpop.f32.mrb[0].mxu0
        %1092 = vdwg.mxu0
        %1093 = vmatprep.subr.mxu0 0.0
        %1094 = vmatpush1.msra.mxu0 %v991
        %1095 = vmatprep.subr.mxu0 0.0
        %1096 = vmatpush1.msra.mxu0 %v992
        %1097 = vmatprep.subr.mxu0 0.0
        %1098 = vmatpush1.msra.mxu0 %v993
        %1099 = vmatprep.subr.mxu0 0.0
        %1100 = vmatpush1.msra.mxu0 %v994
        %1101 = vmatprep.subr.mxu0 0.0
        %1102 = vmatpush1.msra.mxu0 %v995
        %1103 = vmatprep.subr.mxu0 0.0
        %1104 = vmatpush1.msra.mxu0 %v996
        %1105 = vmatprep.subr.mxu0 0.0
        %1106 = vmatpush1.msra.mxu0 %v997
        %1107 = vmatprep.subr.mxu0 0.0
        %1108 = vmatpush1.msra.mxu0 %v998
        %1109 = vmatprep.subr.mxu0 0.0
        %1110 = vmatpush1.msra.mxu0 %v999
        %1111 = vmatprep.subr.mxu0 0.0
        %1112 = vmatpush1.msra.mxu0 %v1000
        %1113 = vmatprep.subr.mxu0 0.0
        %1114 = vmatpush1.msra.mxu0 %v1001
        %1115 = vmatprep.subr.mxu0 0.0
        %1116 = vmatpush1.msra.mxu0 %v1002
        %1117 = vmatprep.subr.mxu0 0.0
        %1118 = vmatpush1.msra.mxu0 %v1003
        %1119 = vmatprep.subr.mxu0 0.0
        %1120 = vmatpush1.msra.mxu0 %v1004
        %1121 = vmatprep.subr.mxu0 0.0
        %1122 = vmatpush1.msra.mxu0 %v1005
        %1123 = vmatprep.subr.mxu0 0.0
        %1124 = vmatpush1.msra.mxu0 %v1006
        %1125 = vmatprep.subr.mxu0 0.0
        %1126 = vmatpush1.msra.mxu0 0.0
        %1127 = vmatprep.subr.mxu0 0.0
        %1128 = vmatpush1.msra.mxu0 0.0
        %1129 = vmatprep.subr.mxu0 0.0
        %1130 = vmatpush1.msra.mxu0 0.0
        %1131 = vmatprep.subr.mxu0 0.0
        %1132 = vmatpush1.msra.mxu0 0.0
        %1133 = vmatprep.subr.mxu0 0.0
        %1134 = vmatpush1.msra.mxu0 0.0
        %1135 = vmatprep.subr.mxu0 0.0
        %1136 = vmatpush1.msra.mxu0 0.0
        %1137 = vmatprep.subr.mxu0 0.0
        %1138 = vmatpush1.msra.mxu0 0.0
        %1139 = vmatprep.subr.mxu0 0.0
        %1140 = vmatpush1.msra.mxu0 0.0
        %1141 = vmatprep.subr.mxu0 0.0
        %1142 = vmatpush1.msra.mxu0 0.0
        %1143 = vmatprep.subr.mxu0 0.0
        %1144 = vmatpush1.msra.mxu0 0.0
        %1145 = vmatprep.subr.mxu0 0.0
        %1146 = vmatpush1.msra.mxu0 0.0
        %1147 = vmatprep.subr.mxu0 0.0
        %1148 = vmatpush1.msra.mxu0 0.0
        %1149 = vmatprep.subr.mxu0 0.0
        %1150 = vmatpush1.msra.mxu0 0.0
        %1151 = vmatprep.subr.mxu0 0.0
        %1152 = vmatpush1.msra.mxu0 0.0
        %1153 = vmatprep.subr.mxu0 0.0
        %1154 = vmatpush1.msra.mxu0 0.0
        %1155 = vmatprep.subr.mxu0 0.0
        %1156 = vmatpush1.msra.mxu0 0.0
        %1157 = vmatprep.mubr.f32.mxu0 0.0
        %1158 = vmatmul.mubr.f32.gmra.mrb[0].mxu0 %v813
        %v1159 = vpop.f32.mrb[0].mxu0
        %v1160 = vadd.f32 %v1090, %v1159
        %v1161 = vpop.f32.mrb[0].mxu0
        %1162 = vdwg.mxu0
        %v1164 = vlaneseq
        %v1165 = vshrl.u32 %v1164, 7
        %v1166 = vsub.s32 0, %v1165
        %v1167 = vrot.slane %v812, %v1166
        %v1169 = vadd.f32 %v987, %v1167
        %v1170 = vmax.f32 %v1169, 0.0
        %v1171 = vadd.f32 %v1160, %v1167
        %v1172 = vmax.f32 %v1171, 0.0
        %1173 = vst [vmem:[#allocation3] sm:$0x1] 0.0
        %1174 = vst [vmem:[#allocation3 + $0x5] sm:$0x1] 0.0
        %v1175 = vlaneseq
        %v1176 = vshrl.u32 %v1175, 7
        %v1177 = vlaneseq
        %v1178 = vand.u32 %v1177, 127
        %v1179 = vmul.u32 %v1178, 2
        %vm1180 = vcmp.eq.s32.totalorder %v1176, %v1179
        %v1181 = vsel %vm1180, 1, 0
        %v1182 = vcvt.s32.f32 %v1181
        %v1183 = vadd.s32 %v1179, 1
        %vm1184 = vcmp.eq.s32.totalorder %v1176, %v1183
        %v1185 = vsel %vm1184, 1, 0
        %v1186 = vcvt.s32.f32 %v1185
        %vm1187 = vcmask 15360
        %v1189 = vsel %vm1187, %v1186, 0
        %vm1191 = vcmask 1041408
        %v1193 = vsel %vm1191, %v1172, 0
        %1195 = vmatprep.subr.mxu0 0.0
        %1196 = vmatpush1.msra.mxu0 %v1193
        %1197 = vmatprep.subr.mxu0 0.0
        %1198 = vmatpush1.msra.mxu0 0.0
        %1199 = vmatprep.subr.mxu0 0.0
        %1200 = vmatpush1.msra.mxu0 0.0
        %1201 = vmatprep.subr.mxu0 0.0
        %1202 = vmatpush1.msra.mxu0 0.0
        %1203 = vmatprep.subr.mxu0 0.0
        %1204 = vmatpush1.msra.mxu0 0.0
        %1205 = vmatprep.subr.mxu0 0.0
        %1206 = vmatpush1.msra.mxu0 0.0
        %1207 = vmatprep.subr.mxu0 0.0
        %1208 = vmatpush1.msra.mxu0 0.0
        %1209 = vmatprep.subr.mxu0 0.0
        %1210 = vmatpush1.msra.mxu0 0.0
        %1211 = vmatprep.subr.mxu0 0.0
        %1212 = vmatpush1.msra.mxu0 0.0
        %1213 = vmatprep.subr.mxu0 0.0
        %1214 = vmatpush1.msra.mxu0 0.0
        %1215 = vmatprep.subr.mxu0 0.0
        %1216 = vmatpush1.msra.mxu0 0.0
        %1217 = vmatprep.subr.mxu0 0.0
        %1218 = vmatpush1.msra.mxu0 0.0
        %1219 = vmatprep.subr.mxu0 0.0
        %1220 = vmatpush1.msra.mxu0 0.0
        %1221 = vmatprep.subr.mxu0 0.0
        %1222 = vmatpush1.msra.mxu0 0.0
        %1223 = vmatprep.subr.mxu0 0.0
        %1224 = vmatpush1.msra.mxu0 0.0
        %1225 = vmatprep.subr.mxu0 0.0
        %1226 = vmatpush1.msra.mxu0 0.0
        %1227 = vmatprep.subr.mxu0 0.0
        %1228 = vmatpush1.msra.mxu0 0.0
        %1229 = vmatprep.subr.mxu0 0.0
        %1230 = vmatpush1.msra.mxu0 0.0
        %1231 = vmatprep.subr.mxu0 0.0
        %1232 = vmatpush1.msra.mxu0 0.0
        %1233 = vmatprep.subr.mxu0 0.0
        %1234 = vmatpush1.msra.mxu0 0.0
        %1235 = vmatprep.subr.mxu0 0.0
        %1236 = vmatpush1.msra.mxu0 0.0
        %1237 = vmatprep.subr.mxu0 0.0
        %1238 = vmatpush1.msra.mxu0 0.0
        %1239 = vmatprep.subr.mxu0 0.0
        %1240 = vmatpush1.msra.mxu0 0.0
        %1241 = vmatprep.subr.mxu0 0.0
        %1242 = vmatpush1.msra.mxu0 0.0
        %1243 = vmatprep.subr.mxu0 0.0
        %1244 = vmatpush1.msra.mxu0 0.0
        %1245 = vmatprep.subr.mxu0 0.0
        %1246 = vmatpush1.msra.mxu0 0.0
        %1247 = vmatprep.subr.mxu0 0.0
        %1248 = vmatpush1.msra.mxu0 0.0
        %1249 = vmatprep.subr.mxu0 0.0
        %1250 = vmatpush1.msra.mxu0 0.0
        %1251 = vmatprep.subr.mxu0 0.0
        %1252 = vmatpush1.msra.mxu0 0.0
        %1253 = vmatprep.subr.mxu0 0.0
        %1254 = vmatpush1.msra.mxu0 0.0
        %1255 = vmatprep.subr.mxu0 0.0
        %1256 = vmatpush1.msra.mxu0 0.0
        %1257 = vmatprep.subr.mxu0 0.0
        %1258 = vmatpush1.msra.mxu0 0.0
        %1259 = vmatprep.mubr.f32.mxu0 0.0
        %1260 = vmatmul.mubr.f32.gmra.mrb[0].mxu0 %v1189
        %v1261 = vpop.f32.mrb[0].mxu0
        %v1262 = vadd.f32 0.0, %v1261
        %v1263 = vpop.f32.mrb[0].mxu0
        %1264 = vdwg.mxu0
        %v1266 = vsel %vm1187, %v1182, 0
        %v1269 = vsel %vm1191, %v1170, 0
        %1271 = vmatprep.subr.mxu0 0.0
        %1272 = vmatpush1.msra.mxu0 %v1269
        %1273 = vmatprep.subr.mxu0 0.0
        %1274 = vmatpush1.msra.mxu0 0.0
        %1275 = vmatprep.subr.mxu0 0.0
        %1276 = vmatpush1.msra.mxu0 0.0
        %1277 = vmatprep.subr.mxu0 0.0
        %1278 = vmatpush1.msra.mxu0 0.0
        %1279 = vmatprep.subr.mxu0 0.0
        %1280 = vmatpush1.msra.mxu0 0.0
        %1281 = vmatprep.subr.mxu0 0.0
        %1282 = vmatpush1.msra.mxu0 0.0
        %1283 = vmatprep.subr.mxu0 0.0
        %1284 = vmatpush1.msra.mxu0 0.0
        %1285 = vmatprep.subr.mxu0 0.0
        %1286 = vmatpush1.msra.mxu0 0.0
        %1287 = vmatprep.subr.mxu0 0.0
        %1288 = vmatpush1.msra.mxu0 0.0
        %1289 = vmatprep.subr.mxu0 0.0
        %1290 = vmatpush1.msra.mxu0 0.0
        %1291 = vmatprep.subr.mxu0 0.0
        %1292 = vmatpush1.msra.mxu0 0.0
        %1293 = vmatprep.subr.mxu0 0.0
        %1294 = vmatpush1.msra.mxu0 0.0
        %1295 = vmatprep.subr.mxu0 0.0
        %1296 = vmatpush1.msra.mxu0 0.0
        %1297 = vmatprep.subr.mxu0 0.0
        %1298 = vmatpush1.msra.mxu0 0.0
        %1299 = vmatprep.subr.mxu0 0.0
        %1300 = vmatpush1.msra.mxu0 0.0
        %1301 = vmatprep.subr.mxu0 0.0
        %1302 = vmatpush1.msra.mxu0 0.0
        %1303 = vmatprep.subr.mxu0 0.0
        %1304 = vmatpush1.msra.mxu0 0.0
        %1305 = vmatprep.subr.mxu0 0.0
        %1306 = vmatpush1.msra.mxu0 0.0
        %1307 = vmatprep.subr.mxu0 0.0
        %1308 = vmatpush1.msra.mxu0 0.0
        %1309 = vmatprep.subr.mxu0 0.0
        %1310 = vmatpush1.msra.mxu0 0.0
        %1311 = vmatprep.subr.mxu0 0.0
        %1312 = vmatpush1.msra.mxu0 0.0
        %1313 = vmatprep.subr.mxu0 0.0
        %1314 = vmatpush1.msra.mxu0 0.0
        %1315 = vmatprep.subr.mxu0 0.0
        %1316 = vmatpush1.msra.mxu0 0.0
        %1317 = vmatprep.subr.mxu0 0.0
        %1318 = vmatpush1.msra.mxu0 0.0
        %1319 = vmatprep.subr.mxu0 0.0
        %1320 = vmatpush1.msra.mxu0 0.0
        %1321 = vmatprep.subr.mxu0 0.0
        %1322 = vmatpush1.msra.mxu0 0.0
        %1323 = vmatprep.subr.mxu0 0.0
        %1324 = vmatpush1.msra.mxu0 0.0
        %1325 = vmatprep.subr.mxu0 0.0
        %1326 = vmatpush1.msra.mxu0 0.0
        %1327 = vmatprep.subr.mxu0 0.0
        %1328 = vmatpush1.msra.mxu0 0.0
        %1329 = vmatprep.subr.mxu0 0.0
        %1330 = vmatpush1.msra.mxu0 0.0
        %1331 = vmatprep.subr.mxu0 0.0
        %1332 = vmatpush1.msra.mxu0 0.0
        %1333 = vmatprep.subr.mxu0 0.0
        %1334 = vmatpush1.msra.mxu0 0.0
        %1335 = vmatprep.mubr.f32.mxu0 0.0
        %1336 = vmatmul.mubr.f32.gmra.mrb[0].mxu0 %v1266
        %v1337 = vpop.f32.mrb[0].mxu0
        %v1338 = vadd.f32 %v1262, %v1337
        %v1339 = vpop.f32.mrb[0].mxu0
        %1340 = vdwg.mxu0
        %1341 = vst [vmem:[#allocation3 + $0x1] sm:$0xf] %v1338
        %v1342 = vld [vmem:[%s8] sm:$0x1]
        %v1343 = vld [vmem:[#allocation3 + $0x1] sm:$0xf]
        %v1344 = vld [vmem:[#allocation3] sm:$0xf]
        %v1345 = vld [vmem:[#allocation3 + $0x2] sm:$0xf]
        %s1346 = scalar_lea.vmem [#allocation10], 128
        %v1347 = vld [vmem:[%s1346] sm:$0xff]
        %v1348 = vld [vmem:[%s1346 + $0x8] sm:$0xff]
        %v1349 = vld [vmem:[%s1346 + $0x10] sm:$0xff]
        %v1350 = vld [vmem:[%s1346 + $0x18] sm:$0xff]
        %v1351 = vld [vmem:[%s1346 + $0x20] sm:$0xff]
        %v1352 = vld [vmem:[%s1346 + $0x28] sm:$0xff]
        %v1353 = vld [vmem:[%s1346 + $0x30] sm:$0xff]
        %v1354 = vld [vmem:[%s1346 + $0x38] sm:$0xff]
        %v1355 = vld [vmem:[%s1346 + $0x40] sm:$0xff]
        %v1356 = vld [vmem:[%s1346 + $0x48] sm:$0xff]
        %v1357 = vld [vmem:[%s1346 + $0x50] sm:$0xff]
        %v1358 = vld [vmem:[%s1346 + $0x58] sm:$0xff]
        %v1359 = vld [vmem:[%s1346 + $0x60] sm:$0xff]
        %v1360 = vld [vmem:[%s1346 + $0x68] sm:$0xff]
        %v1361 = vld [vmem:[%s1346 + $0x70] sm:$0xff]
        %v1362 = vld [vmem:[%s1346 + $0x78] sm:$0xff]
        %s1363 = scalar_lea.vmem [#allocation10], 384
        %v1364 = vld [vmem:[%s1363] sm:$0xff]
        %v1365 = vld [vmem:[%s1363 + $0x8] sm:$0xff]
        %v1366 = vld [vmem:[%s1363 + $0x10] sm:$0xff]
        %v1367 = vld [vmem:[%s1363 + $0x18] sm:$0xff]
        %v1368 = vld [vmem:[%s1363 + $0x20] sm:$0xff]
        %v1369 = vld [vmem:[%s1363 + $0x28] sm:$0xff]
        %v1370 = vld [vmem:[%s1363 + $0x30] sm:$0xff]
        %v1371 = vld [vmem:[%s1363 + $0x38] sm:$0xff]
        %v1372 = vld [vmem:[%s1363 + $0x40] sm:$0xff]
        %v1373 = vld [vmem:[%s1363 + $0x48] sm:$0xff]
        %v1374 = vld [vmem:[%s1363 + $0x50] sm:$0xff]
        %v1375 = vld [vmem:[%s1363 + $0x58] sm:$0xff]
        %v1376 = vld [vmem:[%s1363 + $0x60] sm:$0xff]
        %v1377 = vld [vmem:[%s1363 + $0x68] sm:$0xff]
        %v1378 = vld [vmem:[%s1363 + $0x70] sm:$0xff]
        %v1379 = vld [vmem:[%s1363 + $0x78] sm:$0xff]
        %1380 = vmatprep.subr.mxu0 0.0
        %1381 = vmatpush1.msra.mxu0 %v1364
        %1382 = vmatprep.subr.mxu0 0.0
        %1383 = vmatpush1.msra.mxu0 %v1365
        %1384 = vmatprep.subr.mxu0 0.0
        %1385 = vmatpush1.msra.mxu0 %v1366
        %1386 = vmatprep.subr.mxu0 0.0
        %1387 = vmatpush1.msra.mxu0 %v1367
        %1388 = vmatprep.subr.mxu0 0.0
        %1389 = vmatpush1.msra.mxu0 %v1368
        %1390 = vmatprep.subr.mxu0 0.0
        %1391 = vmatpush1.msra.mxu0 %v1369
        %1392 = vmatprep.subr.mxu0 0.0
        %1393 = vmatpush1.msra.mxu0 %v1370
        %1394 = vmatprep.subr.mxu0 0.0
        %1395 = vmatpush1.msra.mxu0 %v1371
        %1396 = vmatprep.subr.mxu0 0.0
        %1397 = vmatpush1.msra.mxu0 %v1372
        %1398 = vmatprep.subr.mxu0 0.0
        %1399 = vmatpush1.msra.mxu0 %v1373
        %1400 = vmatprep.subr.mxu0 0.0
        %1401 = vmatpush1.msra.mxu0 %v1374
        %1402 = vmatprep.subr.mxu0 0.0
        %1403 = vmatpush1.msra.mxu0 %v1375
        %1404 = vmatprep.subr.mxu0 0.0
        %1405 = vmatpush1.msra.mxu0 %v1376
        %1406 = vmatprep.subr.mxu0 0.0
        %1407 = vmatpush1.msra.mxu0 %v1377
        %1408 = vmatprep.subr.mxu0 0.0
        %1409 = vmatpush1.msra.mxu0 %v1378
        %1410 = vmatprep.subr.mxu0 0.0
        %1411 = vmatpush1.msra.mxu0 %v1379
        %1412 = vmatprep.subr.mxu0 0.0
        %1413 = vmatpush1.msra.mxu0 0.0
        %1414 = vmatprep.subr.mxu0 0.0
        %1415 = vmatpush1.msra.mxu0 0.0
        %1416 = vmatprep.subr.mxu0 0.0
        %1417 = vmatpush1.msra.mxu0 0.0
        %1418 = vmatprep.subr.mxu0 0.0
        %1419 = vmatpush1.msra.mxu0 0.0
        %1420 = vmatprep.subr.mxu0 0.0
        %1421 = vmatpush1.msra.mxu0 0.0
        %1422 = vmatprep.subr.mxu0 0.0
        %1423 = vmatpush1.msra.mxu0 0.0
        %1424 = vmatprep.subr.mxu0 0.0
        %1425 = vmatpush1.msra.mxu0 0.0
        %1426 = vmatprep.subr.mxu0 0.0
        %1427 = vmatpush1.msra.mxu0 0.0
        %1428 = vmatprep.subr.mxu0 0.0
        %1429 = vmatpush1.msra.mxu0 0.0
        %1430 = vmatprep.subr.mxu0 0.0
        %1431 = vmatpush1.msra.mxu0 0.0
        %1432 = vmatprep.subr.mxu0 0.0
        %1433 = vmatpush1.msra.mxu0 0.0
        %1434 = vmatprep.subr.mxu0 0.0
        %1435 = vmatpush1.msra.mxu0 0.0
        %1436 = vmatprep.subr.mxu0 0.0
        %1437 = vmatpush1.msra.mxu0 0.0
        %1438 = vmatprep.subr.mxu0 0.0
        %1439 = vmatpush1.msra.mxu0 0.0
        %1440 = vmatprep.subr.mxu0 0.0
        %1441 = vmatpush1.msra.mxu0 0.0
        %1442 = vmatprep.subr.mxu0 0.0
        %1443 = vmatpush1.msra.mxu0 0.0
        %1444 = vmatprep.mubr.f32.mxu0 0.0
        %1445 = vmatmul.mubr.f32.gmra.mrb[0].mxu0 %v1344
        %v1446 = vpop.f32.mrb[0].mxu0
        %v1447 = vadd.f32 0.0, %v1446
        %v1448 = vpop.f32.mrb[0].mxu0
        %1449 = vdwg.mxu0
        %1450 = vmatprep.subr.mxu0 0.0
        %1451 = vmatpush1.msra.mxu0 %v1347
        %1452 = vmatprep.subr.mxu0 0.0
        %1453 = vmatpush1.msra.mxu0 %v1348
        %1454 = vmatprep.subr.mxu0 0.0
        %1455 = vmatpush1.msra.mxu0 %v1349
        %1456 = vmatprep.subr.mxu0 0.0
        %1457 = vmatpush1.msra.mxu0 %v1350
        %1458 = vmatprep.subr.mxu0 0.0
        %1459 = vmatpush1.msra.mxu0 %v1351
        %1460 = vmatprep.subr.mxu0 0.0
        %1461 = vmatpush1.msra.mxu0 %v1352
        %1462 = vmatprep.subr.mxu0 0.0
        %1463 = vmatpush1.msra.mxu0 %v1353
        %1464 = vmatprep.subr.mxu0 0.0
        %1465 = vmatpush1.msra.mxu0 %v1354
        %1466 = vmatprep.subr.mxu0 0.0
        %1467 = vmatpush1.msra.mxu0 %v1355
        %1468 = vmatprep.subr.mxu0 0.0
        %1469 = vmatpush1.msra.mxu0 %v1356
        %1470 = vmatprep.subr.mxu0 0.0
        %1471 = vmatpush1.msra.mxu0 %v1357
        %1472 = vmatprep.subr.mxu0 0.0
        %1473 = vmatpush1.msra.mxu0 %v1358
        %1474 = vmatprep.subr.mxu0 0.0
        %1475 = vmatpush1.msra.mxu0 %v1359
        %1476 = vmatprep.subr.mxu0 0.0
        %1477 = vmatpush1.msra.mxu0 %v1360
        %1478 = vmatprep.subr.mxu0 0.0
        %1479 = vmatpush1.msra.mxu0 %v1361
        %1480 = vmatprep.subr.mxu0 0.0
        %1481 = vmatpush1.msra.mxu0 %v1362
        %1482 = vmatprep.subr.mxu0 0.0
        %1483 = vmatpush1.msra.mxu0 0.0
        %1484 = vmatprep.subr.mxu0 0.0
        %1485 = vmatpush1.msra.mxu0 0.0
        %1486 = vmatprep.subr.mxu0 0.0
        %1487 = vmatpush1.msra.mxu0 0.0
        %1488 = vmatprep.subr.mxu0 0.0
        %1489 = vmatpush1.msra.mxu0 0.0
        %1490 = vmatprep.subr.mxu0 0.0
        %1491 = vmatpush1.msra.mxu0 0.0
        %1492 = vmatprep.subr.mxu0 0.0
        %1493 = vmatpush1.msra.mxu0 0.0
        %1494 = vmatprep.subr.mxu0 0.0
        %1495 = vmatpush1.msra.mxu0 0.0
        %1496 = vmatprep.subr.mxu0 0.0
        %1497 = vmatpush1.msra.mxu0 0.0
        %1498 = vmatprep.subr.mxu0 0.0
        %1499 = vmatpush1.msra.mxu0 0.0
        %1500 = vmatprep.subr.mxu0 0.0
        %1501 = vmatpush1.msra.mxu0 0.0
        %1502 = vmatprep.subr.mxu0 0.0
        %1503 = vmatpush1.msra.mxu0 0.0
        %1504 = vmatprep.subr.mxu0 0.0
        %1505 = vmatpush1.msra.mxu0 0.0
        %1506 = vmatprep.subr.mxu0 0.0
        %1507 = vmatpush1.msra.mxu0 0.0
        %1508 = vmatprep.subr.mxu0 0.0
        %1509 = vmatpush1.msra.mxu0 0.0
        %1510 = vmatprep.subr.mxu0 0.0
        %1511 = vmatpush1.msra.mxu0 0.0
        %1512 = vmatprep.subr.mxu0 0.0
        %1513 = vmatpush1.msra.mxu0 0.0
        %1514 = vmatprep.mubr.f32.mxu0 0.0
        %1515 = vmatmul.mubr.f32.gmra.mrb[0].mxu0 %v1343
        %v1516 = vpop.f32.mrb[0].mxu0
        %v1517 = vadd.f32 %v1447, %v1516
        %v1518 = vpop.f32.mrb[0].mxu0
        %1519 = vdwg.mxu0
        %s1520 = scalar_lea.vmem [#allocation10], 256
        %v1521 = vld [vmem:[%s1520] sm:$0xff]
        %v1522 = vld [vmem:[%s1520 + $0x8] sm:$0xff]
        %v1523 = vld [vmem:[%s1520 + $0x10] sm:$0xff]
        %v1524 = vld [vmem:[%s1520 + $0x18] sm:$0xff]
        %v1525 = vld [vmem:[%s1520 + $0x20] sm:$0xff]
        %v1526 = vld [vmem:[%s1520 + $0x28] sm:$0xff]
        %v1527 = vld [vmem:[%s1520 + $0x30] sm:$0xff]
        %v1528 = vld [vmem:[%s1520 + $0x38] sm:$0xff]
        %v1529 = vld [vmem:[%s1520 + $0x40] sm:$0xff]
        %v1530 = vld [vmem:[%s1520 + $0x48] sm:$0xff]
        %v1531 = vld [vmem:[%s1520 + $0x50] sm:$0xff]
        %v1532 = vld [vmem:[%s1520 + $0x58] sm:$0xff]
        %v1533 = vld [vmem:[%s1520 + $0x60] sm:$0xff]
        %v1534 = vld [vmem:[%s1520 + $0x68] sm:$0xff]
        %v1535 = vld [vmem:[%s1520 + $0x70] sm:$0xff]
        %v1536 = vld [vmem:[%s1520 + $0x78] sm:$0xff]
        %v1537 = vld [vmem:[#allocation10] sm:$0xff]
        %v1538 = vld [vmem:[#allocation10 + $0x8] sm:$0xff]
        %v1539 = vld [vmem:[#allocation10 + $0x10] sm:$0xff]
        %v1540 = vld [vmem:[#allocation10 + $0x18] sm:$0xff]
        %v1541 = vld [vmem:[#allocation10 + $0x20] sm:$0xff]
        %v1542 = vld [vmem:[#allocation10 + $0x28] sm:$0xff]
        %v1543 = vld [vmem:[#allocation10 + $0x30] sm:$0xff]
        %v1544 = vld [vmem:[#allocation10 + $0x38] sm:$0xff]
        %v1545 = vld [vmem:[#allocation10 + $0x40] sm:$0xff]
        %v1546 = vld [vmem:[#allocation10 + $0x48] sm:$0xff]
        %v1547 = vld [vmem:[#allocation10 + $0x50] sm:$0xff]
        %v1548 = vld [vmem:[#allocation10 + $0x58] sm:$0xff]
        %v1549 = vld [vmem:[#allocation10 + $0x60] sm:$0xff]
        %v1550 = vld [vmem:[#allocation10 + $0x68] sm:$0xff]
        %v1551 = vld [vmem:[#allocation10 + $0x70] sm:$0xff]
        %v1552 = vld [vmem:[#allocation10 + $0x78] sm:$0xff]
        %1553 = vmatprep.subr.mxu0 0.0
        %1554 = vmatpush1.msra.mxu0 %v1537
        %1555 = vmatprep.subr.mxu0 0.0
        %1556 = vmatpush1.msra.mxu0 %v1538
        %1557 = vmatprep.subr.mxu0 0.0
        %1558 = vmatpush1.msra.mxu0 %v1539
        %1559 = vmatprep.subr.mxu0 0.0
        %1560 = vmatpush1.msra.mxu0 %v1540
        %1561 = vmatprep.subr.mxu0 0.0
        %1562 = vmatpush1.msra.mxu0 %v1541
        %1563 = vmatprep.subr.mxu0 0.0
        %1564 = vmatpush1.msra.mxu0 %v1542
        %1565 = vmatprep.subr.mxu0 0.0
        %1566 = vmatpush1.msra.mxu0 %v1543
        %1567 = vmatprep.subr.mxu0 0.0
        %1568 = vmatpush1.msra.mxu0 %v1544
        %1569 = vmatprep.subr.mxu0 0.0
        %1570 = vmatpush1.msra.mxu0 %v1545
        %1571 = vmatprep.subr.mxu0 0.0
        %1572 = vmatpush1.msra.mxu0 %v1546
        %1573 = vmatprep.subr.mxu0 0.0
        %1574 = vmatpush1.msra.mxu0 %v1547
        %1575 = vmatprep.subr.mxu0 0.0
        %1576 = vmatpush1.msra.mxu0 %v1548
        %1577 = vmatprep.subr.mxu0 0.0
        %1578 = vmatpush1.msra.mxu0 %v1549
        %1579 = vmatprep.subr.mxu0 0.0
        %1580 = vmatpush1.msra.mxu0 %v1550
        %1581 = vmatprep.subr.mxu0 0.0
        %1582 = vmatpush1.msra.mxu0 %v1551
        %1583 = vmatprep.subr.mxu0 0.0
        %1584 = vmatpush1.msra.mxu0 %v1552
        %1585 = vmatprep.subr.mxu0 0.0
        %1586 = vmatpush1.msra.mxu0 0.0
        %1587 = vmatprep.subr.mxu0 0.0
        %1588 = vmatpush1.msra.mxu0 0.0
        %1589 = vmatprep.subr.mxu0 0.0
        %1590 = vmatpush1.msra.mxu0 0.0
        %1591 = vmatprep.subr.mxu0 0.0
        %1592 = vmatpush1.msra.mxu0 0.0
        %1593 = vmatprep.subr.mxu0 0.0
        %1594 = vmatpush1.msra.mxu0 0.0
        %1595 = vmatprep.subr.mxu0 0.0
        %1596 = vmatpush1.msra.mxu0 0.0
        %1597 = vmatprep.subr.mxu0 0.0
        %1598 = vmatpush1.msra.mxu0 0.0
        %1599 = vmatprep.subr.mxu0 0.0
        %1600 = vmatpush1.msra.mxu0 0.0
        %1601 = vmatprep.subr.mxu0 0.0
        %1602 = vmatpush1.msra.mxu0 0.0
        %1603 = vmatprep.subr.mxu0 0.0
        %1604 = vmatpush1.msra.mxu0 0.0
        %1605 = vmatprep.subr.mxu0 0.0
        %1606 = vmatpush1.msra.mxu0 0.0
        %1607 = vmatprep.subr.mxu0 0.0
        %1608 = vmatpush1.msra.mxu0 0.0
        %1609 = vmatprep.subr.mxu0 0.0
        %1610 = vmatpush1.msra.mxu0 0.0
        %1611 = vmatprep.subr.mxu0 0.0
        %1612 = vmatpush1.msra.mxu0 0.0
        %1613 = vmatprep.subr.mxu0 0.0
        %1614 = vmatpush1.msra.mxu0 0.0
        %1615 = vmatprep.subr.mxu0 0.0
        %1616 = vmatpush1.msra.mxu0 0.0
        %1617 = vmatprep.mubr.f32.mxu0 0.0
        %1618 = vmatmul.mubr.f32.gmra.mrb[0].mxu0 %v1345
        %v1619 = vpop.f32.mrb[0].mxu0
        %v1620 = vadd.f32 0.0, %v1619
        %v1621 = vpop.f32.mrb[0].mxu0
        %1622 = vdwg.mxu0
        %1623 = vmatprep.subr.mxu0 0.0
        %1624 = vmatpush1.msra.mxu0 %v1521
        %1625 = vmatprep.subr.mxu0 0.0
        %1626 = vmatpush1.msra.mxu0 %v1522
        %1627 = vmatprep.subr.mxu0 0.0
        %1628 = vmatpush1.msra.mxu0 %v1523
        %1629 = vmatprep.subr.mxu0 0.0
        %1630 = vmatpush1.msra.mxu0 %v1524
        %1631 = vmatprep.subr.mxu0 0.0
        %1632 = vmatpush1.msra.mxu0 %v1525
        %1633 = vmatprep.subr.mxu0 0.0
        %1634 = vmatpush1.msra.mxu0 %v1526
        %1635 = vmatprep.subr.mxu0 0.0
        %1636 = vmatpush1.msra.mxu0 %v1527
        %1637 = vmatprep.subr.mxu0 0.0
        %1638 = vmatpush1.msra.mxu0 %v1528
        %1639 = vmatprep.subr.mxu0 0.0
        %1640 = vmatpush1.msra.mxu0 %v1529
        %1641 = vmatprep.subr.mxu0 0.0
        %1642 = vmatpush1.msra.mxu0 %v1530
        %1643 = vmatprep.subr.mxu0 0.0
        %1644 = vmatpush1.msra.mxu0 %v1531
        %1645 = vmatprep.subr.mxu0 0.0
        %1646 = vmatpush1.msra.mxu0 %v1532
        %1647 = vmatprep.subr.mxu0 0.0
        %1648 = vmatpush1.msra.mxu0 %v1533
        %1649 = vmatprep.subr.mxu0 0.0
        %1650 = vmatpush1.msra.mxu0 %v1534
        %1651 = vmatprep.subr.mxu0 0.0
        %1652 = vmatpush1.msra.mxu0 %v1535
        %1653 = vmatprep.subr.mxu0 0.0
        %1654 = vmatpush1.msra.mxu0 %v1536
        %1655 = vmatprep.subr.mxu0 0.0
        %1656 = vmatpush1.msra.mxu0 0.0
        %1657 = vmatprep.subr.mxu0 0.0
        %1658 = vmatpush1.msra.mxu0 0.0
        %1659 = vmatprep.subr.mxu0 0.0
        %1660 = vmatpush1.msra.mxu0 0.0
        %1661 = vmatprep.subr.mxu0 0.0
        %1662 = vmatpush1.msra.mxu0 0.0
        %1663 = vmatprep.subr.mxu0 0.0
        %1664 = vmatpush1.msra.mxu0 0.0
        %1665 = vmatprep.subr.mxu0 0.0
        %1666 = vmatpush1.msra.mxu0 0.0
        %1667 = vmatprep.subr.mxu0 0.0
        %1668 = vmatpush1.msra.mxu0 0.0
        %1669 = vmatprep.subr.mxu0 0.0
        %1670 = vmatpush1.msra.mxu0 0.0
        %1671 = vmatprep.subr.mxu0 0.0
        %1672 = vmatpush1.msra.mxu0 0.0
        %1673 = vmatprep.subr.mxu0 0.0
        %1674 = vmatpush1.msra.mxu0 0.0
        %1675 = vmatprep.subr.mxu0 0.0
        %1676 = vmatpush1.msra.mxu0 0.0
        %1677 = vmatprep.subr.mxu0 0.0
        %1678 = vmatpush1.msra.mxu0 0.0
        %1679 = vmatprep.subr.mxu0 0.0
        %1680 = vmatpush1.msra.mxu0 0.0
        %1681 = vmatprep.subr.mxu0 0.0
        %1682 = vmatpush1.msra.mxu0 0.0
        %1683 = vmatprep.subr.mxu0 0.0
        %1684 = vmatpush1.msra.mxu0 0.0
        %1685 = vmatprep.subr.mxu0 0.0
        %1686 = vmatpush1.msra.mxu0 0.0
        %1687 = vmatprep.mubr.f32.mxu0 0.0
        %1688 = vmatmul.mubr.f32.gmra.mrb[0].mxu0 %v1343
        %v1689 = vpop.f32.mrb[0].mxu0
        %v1690 = vadd.f32 %v1620, %v1689
        %v1691 = vpop.f32.mrb[0].mxu0
        %1692 = vdwg.mxu0
        %v1694 = vlaneseq
        %v1695 = vshrl.u32 %v1694, 7
        %v1696 = vsub.s32 0, %v1695
        %v1697 = vrot.slane %v1342, %v1696
        %v1699 = vadd.f32 %v1517, %v1697
        %v1700 = vmax.f32 %v1699, 0.0
        %v1701 = vadd.f32 %v1690, %v1697
        %v1702 = vmax.f32 %v1701, 0.0
        %1703 = vst [vmem:[#allocation4] sm:$0x1] 0.0
        %1704 = vst [vmem:[#allocation4 + $0x9] sm:$0x1] 0.0
        %vm1705 = vcmask 31744
        %v1706 = vsel %vm1705, %v1186, 0
        %vm1708 = vcmask 1043456
        %v1710 = vsel %vm1708, %v1702, 0
        %1712 = vmatprep.subr.mxu0 0.0
        %1713 = vmatpush1.msra.mxu0 %v1710
        %1714 = vmatprep.subr.mxu0 0.0
        %1715 = vmatpush1.msra.mxu0 0.0
        %1716 = vmatprep.subr.mxu0 0.0
        %1717 = vmatpush1.msra.mxu0 0.0
        %1718 = vmatprep.subr.mxu0 0.0
        %1719 = vmatpush1.msra.mxu0 0.0
        %1720 = vmatprep.subr.mxu0 0.0
        %1721 = vmatpush1.msra.mxu0 0.0
        %1722 = vmatprep.subr.mxu0 0.0
        %1723 = vmatpush1.msra.mxu0 0.0
        %1724 = vmatprep.subr.mxu0 0.0
        %1725 = vmatpush1.msra.mxu0 0.0
        %1726 = vmatprep.subr.mxu0 0.0
        %1727 = vmatpush1.msra.mxu0 0.0
        %1728 = vmatprep.subr.mxu0 0.0
        %1729 = vmatpush1.msra.mxu0 0.0
        %1730 = vmatprep.subr.mxu0 0.0
        %1731 = vmatpush1.msra.mxu0 0.0
        %1732 = vmatprep.subr.mxu0 0.0
        %1733 = vmatpush1.msra.mxu0 0.0
        %1734 = vmatprep.subr.mxu0 0.0
        %1735 = vmatpush1.msra.mxu0 0.0
        %1736 = vmatprep.subr.mxu0 0.0
        %1737 = vmatpush1.msra.mxu0 0.0
        %1738 = vmatprep.subr.mxu0 0.0
        %1739 = vmatpush1.msra.mxu0 0.0
        %1740 = vmatprep.subr.mxu0 0.0
        %1741 = vmatpush1.msra.mxu0 0.0
        %1742 = vmatprep.subr.mxu0 0.0
        %1743 = vmatpush1.msra.mxu0 0.0
        %1744 = vmatprep.subr.mxu0 0.0
        %1745 = vmatpush1.msra.mxu0 0.0
        %1746 = vmatprep.subr.mxu0 0.0
        %1747 = vmatpush1.msra.mxu0 0.0
        %1748 = vmatprep.subr.mxu0 0.0
        %1749 = vmatpush1.msra.mxu0 0.0
        %1750 = vmatprep.subr.mxu0 0.0
        %1751 = vmatpush1.msra.mxu0 0.0
        %1752 = vmatprep.subr.mxu0 0.0
        %1753 = vmatpush1.msra.mxu0 0.0
        %1754 = vmatprep.subr.mxu0 0.0
        %1755 = vmatpush1.msra.mxu0 0.0
        %1756 = vmatprep.subr.mxu0 0.0
        %1757 = vmatpush1.msra.mxu0 0.0
        %1758 = vmatprep.subr.mxu0 0.0
        %1759 = vmatpush1.msra.mxu0 0.0
        %1760 = vmatprep.subr.mxu0 0.0
        %1761 = vmatpush1.msra.mxu0 0.0
        %1762 = vmatprep.subr.mxu0 0.0
        %1763 = vmatpush1.msra.mxu0 0.0
        %1764 = vmatprep.subr.mxu0 0.0
        %1765 = vmatpush1.msra.mxu0 0.0
        %1766 = vmatprep.subr.mxu0 0.0
        %1767 = vmatpush1.msra.mxu0 0.0
        %1768 = vmatprep.subr.mxu0 0.0
        %1769 = vmatpush1.msra.mxu0 0.0
        %1770 = vmatprep.subr.mxu0 0.0
        %1771 = vmatpush1.msra.mxu0 0.0
        %1772 = vmatprep.subr.mxu0 0.0
        %1773 = vmatpush1.msra.mxu0 0.0
        %1774 = vmatprep.subr.mxu0 0.0
        %1775 = vmatpush1.msra.mxu0 0.0
        %1776 = vmatprep.mubr.f32.mxu0 0.0
        %1777 = vmatmul.mubr.f32.gmra.mrb[0].mxu0 %v1706
        %v1778 = vpop.f32.mrb[0].mxu0
        %v1779 = vadd.f32 0.0, %v1778
        %v1780 = vpop.f32.mrb[0].mxu0
        %1781 = vdwg.mxu0
        %v1782 = vsel %vm1705, %v1182, 0
        %v1785 = vsel %vm1708, %v1700, 0
        %1787 = vmatprep.subr.mxu0 0.0
        %1788 = vmatpush1.msra.mxu0 %v1785
        %1789 = vmatprep.subr.mxu0 0.0
        %1790 = vmatpush1.msra.mxu0 0.0
        %1791 = vmatprep.subr.mxu0 0.0
        %1792 = vmatpush1.msra.mxu0 0.0
        %1793 = vmatprep.subr.mxu0 0.0
        %1794 = vmatpush1.msra.mxu0 0.0
        %1795 = vmatprep.subr.mxu0 0.0
        %1796 = vmatpush1.msra.mxu0 0.0
        %1797 = vmatprep.subr.mxu0 0.0
        %1798 = vmatpush1.msra.mxu0 0.0
        %1799 = vmatprep.subr.mxu0 0.0
        %1800 = vmatpush1.msra.mxu0 0.0
        %1801 = vmatprep.subr.mxu0 0.0
        %1802 = vmatpush1.msra.mxu0 0.0
        %1803 = vmatprep.subr.mxu0 0.0
        %1804 = vmatpush1.msra.mxu0 0.0
        %1805 = vmatprep.subr.mxu0 0.0
        %1806 = vmatpush1.msra.mxu0 0.0
        %1807 = vmatprep.subr.mxu0 0.0
        %1808 = vmatpush1.msra.mxu0 0.0
        %1809 = vmatprep.subr.mxu0 0.0
        %1810 = vmatpush1.msra.mxu0 0.0
        %1811 = vmatprep.subr.mxu0 0.0
        %1812 = vmatpush1.msra.mxu0 0.0
        %1813 = vmatprep.subr.mxu0 0.0
        %1814 = vmatpush1.msra.mxu0 0.0
        %1815 = vmatprep.subr.mxu0 0.0
        %1816 = vmatpush1.msra.mxu0 0.0
        %1817 = vmatprep.subr.mxu0 0.0
        %1818 = vmatpush1.msra.mxu0 0.0
        %1819 = vmatprep.subr.mxu0 0.0
        %1820 = vmatpush1.msra.mxu0 0.0
        %1821 = vmatprep.subr.mxu0 0.0
        %1822 = vmatpush1.msra.mxu0 0.0
        %1823 = vmatprep.subr.mxu0 0.0
        %1824 = vmatpush1.msra.mxu0 0.0
        %1825 = vmatprep.subr.mxu0 0.0
        %1826 = vmatpush1.msra.mxu0 0.0
        %1827 = vmatprep.subr.mxu0 0.0
        %1828 = vmatpush1.msra.mxu0 0.0
        %1829 = vmatprep.subr.mxu0 0.0
        %1830 = vmatpush1.msra.mxu0 0.0
        %1831 = vmatprep.subr.mxu0 0.0
        %1832 = vmatpush1.msra.mxu0 0.0
        %1833 = vmatprep.subr.mxu0 0.0
        %1834 = vmatpush1.msra.mxu0 0.0
        %1835 = vmatprep.subr.mxu0 0.0
        %1836 = vmatpush1.msra.mxu0 0.0
        %1837 = vmatprep.subr.mxu0 0.0
        %1838 = vmatpush1.msra.mxu0 0.0
        %1839 = vmatprep.subr.mxu0 0.0
        %1840 = vmatpush1.msra.mxu0 0.0
        %1841 = vmatprep.subr.mxu0 0.0
        %1842 = vmatpush1.msra.mxu0 0.0
        %1843 = vmatprep.subr.mxu0 0.0
        %1844 = vmatpush1.msra.mxu0 0.0
        %1845 = vmatprep.subr.mxu0 0.0
        %1846 = vmatpush1.msra.mxu0 0.0
        %1847 = vmatprep.subr.mxu0 0.0
        %1848 = vmatpush1.msra.mxu0 0.0
        %1849 = vmatprep.subr.mxu0 0.0
        %1850 = vmatpush1.msra.mxu0 0.0
        %1851 = vmatprep.mubr.f32.mxu0 0.0
        %1852 = vmatmul.mubr.f32.gmra.mrb[0].mxu0 %v1782
        %v1853 = vpop.f32.mrb[0].mxu0
        %v1854 = vadd.f32 %v1779, %v1853
        %v1855 = vpop.f32.mrb[0].mxu0
        %1856 = vdwg.mxu0
        %1857 = vst [vmem:[#allocation4 + $0x1] sm:$0xff] %v1854
        %v1858 = vld [vmem:[%s10] sm:$0x1]
        %v1859 = vld [vmem:[#allocation4 + $0x1] sm:$0xff]
        %v1860 = vld [vmem:[#allocation4] sm:$0xff]
        %v1861 = vld [vmem:[#allocation4 + $0x2] sm:$0xff]
        %s1862 = scalar_lea.vmem [#allocation12], 128
        %v1863 = vld [vmem:[%s1862] sm:$0xff]
        %v1864 = vld [vmem:[%s1862 + $0x8] sm:$0xff]
        %v1865 = vld [vmem:[%s1862 + $0x10] sm:$0xff]
        %v1866 = vld [vmem:[%s1862 + $0x18] sm:$0xff]
        %v1867 = vld [vmem:[%s1862 + $0x20] sm:$0xff]
        %v1868 = vld [vmem:[%s1862 + $0x28] sm:$0xff]
        %v1869 = vld [vmem:[%s1862 + $0x30] sm:$0xff]
        %v1870 = vld [vmem:[%s1862 + $0x38] sm:$0xff]
        %v1871 = vld [vmem:[%s1862 + $0x40] sm:$0xff]
        %v1872 = vld [vmem:[%s1862 + $0x48] sm:$0xff]
        %v1873 = vld [vmem:[%s1862 + $0x50] sm:$0xff]
        %v1874 = vld [vmem:[%s1862 + $0x58] sm:$0xff]
        %v1875 = vld [vmem:[%s1862 + $0x60] sm:$0xff]
        %v1876 = vld [vmem:[%s1862 + $0x68] sm:$0xff]
        %v1877 = vld [vmem:[%s1862 + $0x70] sm:$0xff]
        %v1878 = vld [vmem:[%s1862 + $0x78] sm:$0xff]
        %s1879 = scalar_lea.vmem [#allocation12], 384
        %v1880 = vld [vmem:[%s1879] sm:$0xff]
        %v1881 = vld [vmem:[%s1879 + $0x8] sm:$0xff]
        %v1882 = vld [vmem:[%s1879 + $0x10] sm:$0xff]
        %v1883 = vld [vmem:[%s1879 + $0x18] sm:$0xff]
        %v1884 = vld [vmem:[%s1879 + $0x20] sm:$0xff]
        %v1885 = vld [vmem:[%s1879 + $0x28] sm:$0xff]
        %v1886 = vld [vmem:[%s1879 + $0x30] sm:$0xff]
        %v1887 = vld [vmem:[%s1879 + $0x38] sm:$0xff]
        %v1888 = vld [vmem:[%s1879 + $0x40] sm:$0xff]
        %v1889 = vld [vmem:[%s1879 + $0x48] sm:$0xff]
        %v1890 = vld [vmem:[%s1879 + $0x50] sm:$0xff]
        %v1891 = vld [vmem:[%s1879 + $0x58] sm:$0xff]
        %v1892 = vld [vmem:[%s1879 + $0x60] sm:$0xff]
        %v1893 = vld [vmem:[%s1879 + $0x68] sm:$0xff]
        %v1894 = vld [vmem:[%s1879 + $0x70] sm:$0xff]
        %v1895 = vld [vmem:[%s1879 + $0x78] sm:$0xff]
        %1896 = vmatprep.subr.mxu0 0.0
        %1897 = vmatpush1.msra.mxu0 %v1880
        %1898 = vmatprep.subr.mxu0 0.0
        %1899 = vmatpush1.msra.mxu0 %v1881
        %1900 = vmatprep.subr.mxu0 0.0
        %1901 = vmatpush1.msra.mxu0 %v1882
        %1902 = vmatprep.subr.mxu0 0.0
        %1903 = vmatpush1.msra.mxu0 %v1883
        %1904 = vmatprep.subr.mxu0 0.0
        %1905 = vmatpush1.msra.mxu0 %v1884
        %1906 = vmatprep.subr.mxu0 0.0
        %1907 = vmatpush1.msra.mxu0 %v1885
        %1908 = vmatprep.subr.mxu0 0.0
        %1909 = vmatpush1.msra.mxu0 %v1886
        %1910 = vmatprep.subr.mxu0 0.0
        %1911 = vmatpush1.msra.mxu0 %v1887
        %1912 = vmatprep.subr.mxu0 0.0
        %1913 = vmatpush1.msra.mxu0 %v1888
        %1914 = vmatprep.subr.mxu0 0.0
        %1915 = vmatpush1.msra.mxu0 %v1889
        %1916 = vmatprep.subr.mxu0 0.0
        %1917 = vmatpush1.msra.mxu0 %v1890
        %1918 = vmatprep.subr.mxu0 0.0
        %1919 = vmatpush1.msra.mxu0 %v1891
        %1920 = vmatprep.subr.mxu0 0.0
        %1921 = vmatpush1.msra.mxu0 %v1892
        %1922 = vmatprep.subr.mxu0 0.0
        %1923 = vmatpush1.msra.mxu0 %v1893
        %1924 = vmatprep.subr.mxu0 0.0
        %1925 = vmatpush1.msra.mxu0 %v1894
        %1926 = vmatprep.subr.mxu0 0.0
        %1927 = vmatpush1.msra.mxu0 %v1895
        %1928 = vmatprep.subr.mxu0 0.0
        %1929 = vmatpush1.msra.mxu0 0.0
        %1930 = vmatprep.subr.mxu0 0.0
        %1931 = vmatpush1.msra.mxu0 0.0
        %1932 = vmatprep.subr.mxu0 0.0
        %1933 = vmatpush1.msra.mxu0 0.0
        %1934 = vmatprep.subr.mxu0 0.0
        %1935 = vmatpush1.msra.mxu0 0.0
        %1936 = vmatprep.subr.mxu0 0.0
        %1937 = vmatpush1.msra.mxu0 0.0
        %1938 = vmatprep.subr.mxu0 0.0
        %1939 = vmatpush1.msra.mxu0 0.0
        %1940 = vmatprep.subr.mxu0 0.0
        %1941 = vmatpush1.msra.mxu0 0.0
        %1942 = vmatprep.subr.mxu0 0.0
        %1943 = vmatpush1.msra.mxu0 0.0
        %1944 = vmatprep.subr.mxu0 0.0
        %1945 = vmatpush1.msra.mxu0 0.0
        %1946 = vmatprep.subr.mxu0 0.0
        %1947 = vmatpush1.msra.mxu0 0.0
        %1948 = vmatprep.subr.mxu0 0.0
        %1949 = vmatpush1.msra.mxu0 0.0
        %1950 = vmatprep.subr.mxu0 0.0
        %1951 = vmatpush1.msra.mxu0 0.0
        %1952 = vmatprep.subr.mxu0 0.0
        %1953 = vmatpush1.msra.mxu0 0.0
        %1954 = vmatprep.subr.mxu0 0.0
        %1955 = vmatpush1.msra.mxu0 0.0
        %1956 = vmatprep.subr.mxu0 0.0
        %1957 = vmatpush1.msra.mxu0 0.0
        %1958 = vmatprep.subr.mxu0 0.0
        %1959 = vmatpush1.msra.mxu0 0.0
        %1960 = vmatprep.mubr.f32.mxu0 0.0
        %1961 = vmatmul.mubr.f32.gmra.mrb[0].mxu0 %v1860
        %v1962 = vpop.f32.mrb[0].mxu0
        %v1963 = vadd.f32 0.0, %v1962
        %v1964 = vpop.f32.mrb[0].mxu0
        %1965 = vdwg.mxu0
        %1966 = vmatprep.subr.mxu0 0.0
        %1967 = vmatpush1.msra.mxu0 %v1863
        %1968 = vmatprep.subr.mxu0 0.0
        %1969 = vmatpush1.msra.mxu0 %v1864
        %1970 = vmatprep.subr.mxu0 0.0
        %1971 = vmatpush1.msra.mxu0 %v1865
        %1972 = vmatprep.subr.mxu0 0.0
        %1973 = vmatpush1.msra.mxu0 %v1866
        %1974 = vmatprep.subr.mxu0 0.0
        %1975 = vmatpush1.msra.mxu0 %v1867
        %1976 = vmatprep.subr.mxu0 0.0
        %1977 = vmatpush1.msra.mxu0 %v1868
        %1978 = vmatprep.subr.mxu0 0.0
        %1979 = vmatpush1.msra.mxu0 %v1869
        %1980 = vmatprep.subr.mxu0 0.0
        %1981 = vmatpush1.msra.mxu0 %v1870
        %1982 = vmatprep.subr.mxu0 0.0
        %1983 = vmatpush1.msra.mxu0 %v1871
        %1984 = vmatprep.subr.mxu0 0.0
        %1985 = vmatpush1.msra.mxu0 %v1872
        %1986 = vmatprep.subr.mxu0 0.0
        %1987 = vmatpush1.msra.mxu0 %v1873
        %1988 = vmatprep.subr.mxu0 0.0
        %1989 = vmatpush1.msra.mxu0 %v1874
        %1990 = vmatprep.subr.mxu0 0.0
        %1991 = vmatpush1.msra.mxu0 %v1875
        %1992 = vmatprep.subr.mxu0 0.0
        %1993 = vmatpush1.msra.mxu0 %v1876
        %1994 = vmatprep.subr.mxu0 0.0
        %1995 = vmatpush1.msra.mxu0 %v1877
        %1996 = vmatprep.subr.mxu0 0.0
        %1997 = vmatpush1.msra.mxu0 %v1878
        %1998 = vmatprep.subr.mxu0 0.0
        %1999 = vmatpush1.msra.mxu0 0.0
        %2000 = vmatprep.subr.mxu0 0.0
        %2001 = vmatpush1.msra.mxu0 0.0
        %2002 = vmatprep.subr.mxu0 0.0
        %2003 = vmatpush1.msra.mxu0 0.0
        %2004 = vmatprep.subr.mxu0 0.0
        %2005 = vmatpush1.msra.mxu0 0.0
        %2006 = vmatprep.subr.mxu0 0.0
        %2007 = vmatpush1.msra.mxu0 0.0
        %2008 = vmatprep.subr.mxu0 0.0
        %2009 = vmatpush1.msra.mxu0 0.0
        %2010 = vmatprep.subr.mxu0 0.0
        %2011 = vmatpush1.msra.mxu0 0.0
        %2012 = vmatprep.subr.mxu0 0.0
        %2013 = vmatpush1.msra.mxu0 0.0
        %2014 = vmatprep.subr.mxu0 0.0
        %2015 = vmatpush1.msra.mxu0 0.0
        %2016 = vmatprep.subr.mxu0 0.0
        %2017 = vmatpush1.msra.mxu0 0.0
        %2018 = vmatprep.subr.mxu0 0.0
        %2019 = vmatpush1.msra.mxu0 0.0
        %2020 = vmatprep.subr.mxu0 0.0
        %2021 = vmatpush1.msra.mxu0 0.0
        %2022 = vmatprep.subr.mxu0 0.0
        %2023 = vmatpush1.msra.mxu0 0.0
        %2024 = vmatprep.subr.mxu0 0.0
        %2025 = vmatpush1.msra.mxu0 0.0
        %2026 = vmatprep.subr.mxu0 0.0
        %2027 = vmatpush1.msra.mxu0 0.0
        %2028 = vmatprep.subr.mxu0 0.0
        %2029 = vmatpush1.msra.mxu0 0.0
        %2030 = vmatprep.mubr.f32.mxu0 0.0
        %2031 = vmatmul.mubr.f32.gmra.mrb[0].mxu0 %v1859
        %v2032 = vpop.f32.mrb[0].mxu0
        %v2033 = vadd.f32 %v1963, %v2032
        %v2034 = vpop.f32.mrb[0].mxu0
        %2035 = vdwg.mxu0
        %s2036 = scalar_lea.vmem [#allocation12], 256
        %v2037 = vld [vmem:[%s2036] sm:$0xff]
        %v2038 = vld [vmem:[%s2036 + $0x8] sm:$0xff]
        %v2039 = vld [vmem:[%s2036 + $0x10] sm:$0xff]
        %v2040 = vld [vmem:[%s2036 + $0x18] sm:$0xff]
        %v2041 = vld [vmem:[%s2036 + $0x20] sm:$0xff]
        %v2042 = vld [vmem:[%s2036 + $0x28] sm:$0xff]
        %v2043 = vld [vmem:[%s2036 + $0x30] sm:$0xff]
        %v2044 = vld [vmem:[%s2036 + $0x38] sm:$0xff]
        %v2045 = vld [vmem:[%s2036 + $0x40] sm:$0xff]
        %v2046 = vld [vmem:[%s2036 + $0x48] sm:$0xff]
        %v2047 = vld [vmem:[%s2036 + $0x50] sm:$0xff]
        %v2048 = vld [vmem:[%s2036 + $0x58] sm:$0xff]
        %v2049 = vld [vmem:[%s2036 + $0x60] sm:$0xff]
        %v2050 = vld [vmem:[%s2036 + $0x68] sm:$0xff]
        %v2051 = vld [vmem:[%s2036 + $0x70] sm:$0xff]
        %v2052 = vld [vmem:[%s2036 + $0x78] sm:$0xff]
        %v2053 = vld [vmem:[#allocation12] sm:$0xff]
        %v2054 = vld [vmem:[#allocation12 + $0x8] sm:$0xff]
        %v2055 = vld [vmem:[#allocation12 + $0x10] sm:$0xff]
        %v2056 = vld [vmem:[#allocation12 + $0x18] sm:$0xff]
        %v2057 = vld [vmem:[#allocation12 + $0x20] sm:$0xff]
        %v2058 = vld [vmem:[#allocation12 + $0x28] sm:$0xff]
        %v2059 = vld [vmem:[#allocation12 + $0x30] sm:$0xff]
        %v2060 = vld [vmem:[#allocation12 + $0x38] sm:$0xff]
        %v2061 = vld [vmem:[#allocation12 + $0x40] sm:$0xff]
        %v2062 = vld [vmem:[#allocation12 + $0x48] sm:$0xff]
        %v2063 = vld [vmem:[#allocation12 + $0x50] sm:$0xff]
        %v2064 = vld [vmem:[#allocation12 + $0x58] sm:$0xff]
        %v2065 = vld [vmem:[#allocation12 + $0x60] sm:$0xff]
        %v2066 = vld [vmem:[#allocation12 + $0x68] sm:$0xff]
        %v2067 = vld [vmem:[#allocation12 + $0x70] sm:$0xff]
        %v2068 = vld [vmem:[#allocation12 + $0x78] sm:$0xff]
        %2069 = vmatprep.subr.mxu0 0.0
        %2070 = vmatpush1.msra.mxu0 %v2053
        %2071 = vmatprep.subr.mxu0 0.0
        %2072 = vmatpush1.msra.mxu0 %v2054
        %2073 = vmatprep.subr.mxu0 0.0
        %2074 = vmatpush1.msra.mxu0 %v2055
        %2075 = vmatprep.subr.mxu0 0.0
        %2076 = vmatpush1.msra.mxu0 %v2056
        %2077 = vmatprep.subr.mxu0 0.0
        %2078 = vmatpush1.msra.mxu0 %v2057
        %2079 = vmatprep.subr.mxu0 0.0
        %2080 = vmatpush1.msra.mxu0 %v2058
        %2081 = vmatprep.subr.mxu0 0.0
        %2082 = vmatpush1.msra.mxu0 %v2059
        %2083 = vmatprep.subr.mxu0 0.0
        %2084 = vmatpush1.msra.mxu0 %v2060
        %2085 = vmatprep.subr.mxu0 0.0
        %2086 = vmatpush1.msra.mxu0 %v2061
        %2087 = vmatprep.subr.mxu0 0.0
        %2088 = vmatpush1.msra.mxu0 %v2062
        %2089 = vmatprep.subr.mxu0 0.0
        %2090 = vmatpush1.msra.mxu0 %v2063
        %2091 = vmatprep.subr.mxu0 0.0
        %2092 = vmatpush1.msra.mxu0 %v2064
        %2093 = vmatprep.subr.mxu0 0.0
        %2094 = vmatpush1.msra.mxu0 %v2065
        %2095 = vmatprep.subr.mxu0 0.0
        %2096 = vmatpush1.msra.mxu0 %v2066
        %2097 = vmatprep.subr.mxu0 0.0
        %2098 = vmatpush1.msra.mxu0 %v2067
        %2099 = vmatprep.subr.mxu0 0.0
        %2100 = vmatpush1.msra.mxu0 %v2068
        %2101 = vmatprep.subr.mxu0 0.0
        %2102 = vmatpush1.msra.mxu0 0.0
        %2103 = vmatprep.subr.mxu0 0.0
        %2104 = vmatpush1.msra.mxu0 0.0
        %2105 = vmatprep.subr.mxu0 0.0
        %2106 = vmatpush1.msra.mxu0 0.0
        %2107 = vmatprep.subr.mxu0 0.0
        %2108 = vmatpush1.msra.mxu0 0.0
        %2109 = vmatprep.subr.mxu0 0.0
        %2110 = vmatpush1.msra.mxu0 0.0
        %2111 = vmatprep.subr.mxu0 0.0
        %2112 = vmatpush1.msra.mxu0 0.0
        %2113 = vmatprep.subr.mxu0 0.0
        %2114 = vmatpush1.msra.mxu0 0.0
        %2115 = vmatprep.subr.mxu0 0.0
        %2116 = vmatpush1.msra.mxu0 0.0
        %2117 = vmatprep.subr.mxu0 0.0
        %2118 = vmatpush1.msra.mxu0 0.0
        %2119 = vmatprep.subr.mxu0 0.0
        %2120 = vmatpush1.msra.mxu0 0.0
        %2121 = vmatprep.subr.mxu0 0.0
        %2122 = vmatpush1.msra.mxu0 0.0
        %2123 = vmatprep.subr.mxu0 0.0
        %2124 = vmatpush1.msra.mxu0 0.0
        %2125 = vmatprep.subr.mxu0 0.0
        %2126 = vmatpush1.msra.mxu0 0.0
        %2127 = vmatprep.subr.mxu0 0.0
        %2128 = vmatpush1.msra.mxu0 0.0
        %2129 = vmatprep.subr.mxu0 0.0
        %2130 = vmatpush1.msra.mxu0 0.0
        %2131 = vmatprep.subr.mxu0 0.0
        %2132 = vmatpush1.msra.mxu0 0.0
        %2133 = vmatprep.mubr.f32.mxu0 0.0
        %2134 = vmatmul.mubr.f32.gmra.mrb[0].mxu0 %v1861
        %v2135 = vpop.f32.mrb[0].mxu0
        %v2136 = vadd.f32 0.0, %v2135
        %v2137 = vpop.f32.mrb[0].mxu0
        %2138 = vdwg.mxu0
        %2139 = vmatprep.subr.mxu0 0.0
        %2140 = vmatpush1.msra.mxu0 %v2037
        %2141 = vmatprep.subr.mxu0 0.0
        %2142 = vmatpush1.msra.mxu0 %v2038
        %2143 = vmatprep.subr.mxu0 0.0
        %2144 = vmatpush1.msra.mxu0 %v2039
        %2145 = vmatprep.subr.mxu0 0.0
        %2146 = vmatpush1.msra.mxu0 %v2040
        %2147 = vmatprep.subr.mxu0 0.0
        %2148 = vmatpush1.msra.mxu0 %v2041
        %2149 = vmatprep.subr.mxu0 0.0
        %2150 = vmatpush1.msra.mxu0 %v2042
        %2151 = vmatprep.subr.mxu0 0.0
        %2152 = vmatpush1.msra.mxu0 %v2043
        %2153 = vmatprep.subr.mxu0 0.0
        %2154 = vmatpush1.msra.mxu0 %v2044
        %2155 = vmatprep.subr.mxu0 0.0
        %2156 = vmatpush1.msra.mxu0 %v2045
        %2157 = vmatprep.subr.mxu0 0.0
        %2158 = vmatpush1.msra.mxu0 %v2046
        %2159 = vmatprep.subr.mxu0 0.0
        %2160 = vmatpush1.msra.mxu0 %v2047
        %2161 = vmatprep.subr.mxu0 0.0
        %2162 = vmatpush1.msra.mxu0 %v2048
        %2163 = vmatprep.subr.mxu0 0.0
        %2164 = vmatpush1.msra.mxu0 %v2049
        %2165 = vmatprep.subr.mxu0 0.0
        %2166 = vmatpush1.msra.mxu0 %v2050
        %2167 = vmatprep.subr.mxu0 0.0
        %2168 = vmatpush1.msra.mxu0 %v2051
        %2169 = vmatprep.subr.mxu0 0.0
        %2170 = vmatpush1.msra.mxu0 %v2052
        %2171 = vmatprep.subr.mxu0 0.0
        %2172 = vmatpush1.msra.mxu0 0.0
        %2173 = vmatprep.subr.mxu0 0.0
        %2174 = vmatpush1.msra.mxu0 0.0
        %2175 = vmatprep.subr.mxu0 0.0
        %2176 = vmatpush1.msra.mxu0 0.0
        %2177 = vmatprep.subr.mxu0 0.0
        %2178 = vmatpush1.msra.mxu0 0.0
        %2179 = vmatprep.subr.mxu0 0.0
        %2180 = vmatpush1.msra.mxu0 0.0
        %2181 = vmatprep.subr.mxu0 0.0
        %2182 = vmatpush1.msra.mxu0 0.0
        %2183 = vmatprep.subr.mxu0 0.0
        %2184 = vmatpush1.msra.mxu0 0.0
        %2185 = vmatprep.subr.mxu0 0.0
        %2186 = vmatpush1.msra.mxu0 0.0
        %2187 = vmatprep.subr.mxu0 0.0
        %2188 = vmatpush1.msra.mxu0 0.0
        %2189 = vmatprep.subr.mxu0 0.0
        %2190 = vmatpush1.msra.mxu0 0.0
        %2191 = vmatprep.subr.mxu0 0.0
        %2192 = vmatpush1.msra.mxu0 0.0
        %2193 = vmatprep.subr.mxu0 0.0
        %2194 = vmatpush1.msra.mxu0 0.0
        %2195 = vmatprep.subr.mxu0 0.0
        %2196 = vmatpush1.msra.mxu0 0.0
        %2197 = vmatprep.subr.mxu0 0.0
        %2198 = vmatpush1.msra.mxu0 0.0
        %2199 = vmatprep.subr.mxu0 0.0
        %2200 = vmatpush1.msra.mxu0 0.0
        %2201 = vmatprep.subr.mxu0 0.0
        %2202 = vmatpush1.msra.mxu0 0.0
        %2203 = vmatprep.mubr.f32.mxu0 0.0
        %2204 = vmatmul.mubr.f32.gmra.mrb[0].mxu0 %v1859
        %v2205 = vpop.f32.mrb[0].mxu0
        %v2206 = vadd.f32 %v2136, %v2205
        %v2207 = vpop.f32.mrb[0].mxu0
        %2208 = vdwg.mxu0
        %v2210 = vlaneseq
        %v2211 = vshrl.u32 %v2210, 7
        %v2212 = vsub.s32 0, %v2211
        %v2213 = vrot.slane %v1858, %v2212
        %v2215 = vadd.f32 %v2033, %v2213
        %v2216 = vmax.f32 %v2215, 0.0
        %v2217 = vadd.f32 %v2206, %v2213
        %v2218 = vmax.f32 %v2217, 0.0
        %2219 = vst [vmem:[#allocation5] sm:$0x1] 0.0
        %2220 = vst [vmem:[#allocation5 + $0x11] sm:$0x1] 0.0
        %v2221 = vadd.s32 %v1176, 8
        %vm2222 = vcmp.eq.s32.totalorder %v2221, %v1179
        %v2223 = vsel %vm2222, 1, 0
        %v2224 = vcvt.s32.f32 %v2223
        %vm2225 = vcmp.eq.s32.totalorder %v2221, %v1183
        %v2226 = vsel %vm2225, 1, 0
        %v2227 = vcvt.s32.f32 %v2226
        %vm2228 = vcmask 64512
        %v2229 = vsel %vm2228, %v1186, 0
        %v2232 = vsel %vm2228, %v2227, 0
        %2234 = vmatprep.subr.mxu0 0.0
        %2235 = vmatpush1.msra.mxu0 %v2218
        %2236 = vmatprep.subr.mxu0 0.0
        %2237 = vmatpush1.msra.mxu0 0.0
        %2238 = vmatprep.subr.mxu0 0.0
        %2239 = vmatpush1.msra.mxu0 0.0
        %2240 = vmatprep.subr.mxu0 0.0
        %2241 = vmatpush1.msra.mxu0 0.0
        %2242 = vmatprep.subr.mxu0 0.0
        %2243 = vmatpush1.msra.mxu0 0.0
        %2244 = vmatprep.subr.mxu0 0.0
        %2245 = vmatpush1.msra.mxu0 0.0
        %2246 = vmatprep.subr.mxu0 0.0
        %2247 = vmatpush1.msra.mxu0 0.0
        %2248 = vmatprep.subr.mxu0 0.0
        %2249 = vmatpush1.msra.mxu0 0.0
        %2250 = vmatprep.subr.mxu0 0.0
        %2251 = vmatpush1.msra.mxu0 0.0
        %2252 = vmatprep.subr.mxu0 0.0
        %2253 = vmatpush1.msra.mxu0 0.0
        %2254 = vmatprep.subr.mxu0 0.0
        %2255 = vmatpush1.msra.mxu0 0.0
        %2256 = vmatprep.subr.mxu0 0.0
        %2257 = vmatpush1.msra.mxu0 0.0
        %2258 = vmatprep.subr.mxu0 0.0
        %2259 = vmatpush1.msra.mxu0 0.0
        %2260 = vmatprep.subr.mxu0 0.0
        %2261 = vmatpush1.msra.mxu0 0.0
        %2262 = vmatprep.subr.mxu0 0.0
        %2263 = vmatpush1.msra.mxu0 0.0
        %2264 = vmatprep.subr.mxu0 0.0
        %2265 = vmatpush1.msra.mxu0 0.0
        %2266 = vmatprep.subr.mxu0 0.0
        %2267 = vmatpush1.msra.mxu0 0.0
        %2268 = vmatprep.subr.mxu0 0.0
        %2269 = vmatpush1.msra.mxu0 0.0
        %2270 = vmatprep.subr.mxu0 0.0
        %2271 = vmatpush1.msra.mxu0 0.0
        %2272 = vmatprep.subr.mxu0 0.0
        %2273 = vmatpush1.msra.mxu0 0.0
        %2274 = vmatprep.subr.mxu0 0.0
        %2275 = vmatpush1.msra.mxu0 0.0
        %2276 = vmatprep.subr.mxu0 0.0
        %2277 = vmatpush1.msra.mxu0 0.0
        %2278 = vmatprep.subr.mxu0 0.0
        %2279 = vmatpush1.msra.mxu0 0.0
        %2280 = vmatprep.subr.mxu0 0.0
        %2281 = vmatpush1.msra.mxu0 0.0
        %2282 = vmatprep.subr.mxu0 0.0
        %2283 = vmatpush1.msra.mxu0 0.0
        %2284 = vmatprep.subr.mxu0 0.0
        %2285 = vmatpush1.msra.mxu0 0.0
        %2286 = vmatprep.subr.mxu0 0.0
        %2287 = vmatpush1.msra.mxu0 0.0
        %2288 = vmatprep.subr.mxu0 0.0
        %2289 = vmatpush1.msra.mxu0 0.0
        %2290 = vmatprep.subr.mxu0 0.0
        %2291 = vmatpush1.msra.mxu0 0.0
        %2292 = vmatprep.subr.mxu0 0.0
        %2293 = vmatpush1.msra.mxu0 0.0
        %2294 = vmatprep.subr.mxu0 0.0
        %2295 = vmatpush1.msra.mxu0 0.0
        %2296 = vmatprep.subr.mxu0 0.0
        %2297 = vmatpush1.msra.mxu0 0.0
        %2298 = vmatprep.mubr.f32.mxu0 0.0
        %2299 = vmatmul.mubr.f32.gmra.mrb[0].mxu0 %v2229
        %v2300 = vpop.f32.mrb[0].mxu0
        %v2301 = vadd.f32 0.0, %v2300
        %v2302 = vpop.f32.mrb[0].mxu0
        %2303 = vmatprep.mubr.f32.mxu0 0.0
        %2304 = vmatmul.mubr.f32.gmra.mrb[0].mxu0 %v2232
        %v2305 = vpop.f32.mrb[0].mxu0
        %v2306 = vadd.f32 0.0, %v2305
        %v2307 = vpop.f32.mrb[0].mxu0
        %2308 = vdwg.mxu0
        %v2309 = vsel %vm2228, %v1182, 0
        %v2312 = vsel %vm2228, %v2224, 0
        %2314 = vmatprep.subr.mxu0 0.0
        %2315 = vmatpush1.msra.mxu0 %v2216
        %2316 = vmatprep.subr.mxu0 0.0
        %2317 = vmatpush1.msra.mxu0 0.0
        %2318 = vmatprep.subr.mxu0 0.0
        %2319 = vmatpush1.msra.mxu0 0.0
        %2320 = vmatprep.subr.mxu0 0.0
        %2321 = vmatpush1.msra.mxu0 0.0
        %2322 = vmatprep.subr.mxu0 0.0
        %2323 = vmatpush1.msra.mxu0 0.0
        %2324 = vmatprep.subr.mxu0 0.0
        %2325 = vmatpush1.msra.mxu0 0.0
        %2326 = vmatprep.subr.mxu0 0.0
        %2327 = vmatpush1.msra.mxu0 0.0
        %2328 = vmatprep.subr.mxu0 0.0
        %2329 = vmatpush1.msra.mxu0 0.0
        %2330 = vmatprep.subr.mxu0 0.0
        %2331 = vmatpush1.msra.mxu0 0.0
        %2332 = vmatprep.subr.mxu0 0.0
        %2333 = vmatpush1.msra.mxu0 0.0
        %2334 = vmatprep.subr.mxu0 0.0
        %2335 = vmatpush1.msra.mxu0 0.0
        %2336 = vmatprep.subr.mxu0 0.0
        %2337 = vmatpush1.msra.mxu0 0.0
        %2338 = vmatprep.subr.mxu0 0.0
        %2339 = vmatpush1.msra.mxu0 0.0
        %2340 = vmatprep.subr.mxu0 0.0
        %2341 = vmatpush1.msra.mxu0 0.0
        %2342 = vmatprep.subr.mxu0 0.0
        %2343 = vmatpush1.msra.mxu0 0.0
        %2344 = vmatprep.subr.mxu0 0.0
        %2345 = vmatpush1.msra.mxu0 0.0
        %2346 = vmatprep.subr.mxu0 0.0
        %2347 = vmatpush1.msra.mxu0 0.0
        %2348 = vmatprep.subr.mxu0 0.0
        %2349 = vmatpush1.msra.mxu0 0.0
        %2350 = vmatprep.subr.mxu0 0.0
        %2351 = vmatpush1.msra.mxu0 0.0
        %2352 = vmatprep.subr.mxu0 0.0
        %2353 = vmatpush1.msra.mxu0 0.0
        %2354 = vmatprep.subr.mxu0 0.0
        %2355 = vmatpush1.msra.mxu0 0.0
        %2356 = vmatprep.subr.mxu0 0.0
        %2357 = vmatpush1.msra.mxu0 0.0
        %2358 = vmatprep.subr.mxu0 0.0
        %2359 = vmatpush1.msra.mxu0 0.0
        %2360 = vmatprep.subr.mxu0 0.0
        %2361 = vmatpush1.msra.mxu0 0.0
        %2362 = vmatprep.subr.mxu0 0.0
        %2363 = vmatpush1.msra.mxu0 0.0
        %2364 = vmatprep.subr.mxu0 0.0
        %2365 = vmatpush1.msra.mxu0 0.0
        %2366 = vmatprep.subr.mxu0 0.0
        %2367 = vmatpush1.msra.mxu0 0.0
        %2368 = vmatprep.subr.mxu0 0.0
        %2369 = vmatpush1.msra.mxu0 0.0
        %2370 = vmatprep.subr.mxu0 0.0
        %2371 = vmatpush1.msra.mxu0 0.0
        %2372 = vmatprep.subr.mxu0 0.0
        %2373 = vmatpush1.msra.mxu0 0.0
        %2374 = vmatprep.subr.mxu0 0.0
        %2375 = vmatpush1.msra.mxu0 0.0
        %2376 = vmatprep.subr.mxu0 0.0
        %2377 = vmatpush1.msra.mxu0 0.0
        %2378 = vmatprep.mubr.f32.mxu0 0.0
        %2379 = vmatmul.mubr.f32.gmra.mrb[0].mxu0 %v2309
        %v2380 = vpop.f32.mrb[0].mxu0
        %v2381 = vadd.f32 %v2301, %v2380
        %v2382 = vpop.f32.mrb[0].mxu0
        %2383 = vmatprep.mubr.f32.mxu0 0.0
        %2384 = vmatmul.mubr.f32.gmra.mrb[0].mxu0 %v2312
        %v2385 = vpop.f32.mrb[0].mxu0
        %v2386 = vadd.f32 %v2306, %v2385
        %v2387 = vpop.f32.mrb[0].mxu0
        %2388 = vdwg.mxu0
        %2389 = vst [vmem:[#allocation5 + $0x1] sm:$0xff] %v2381
        %2390 = vst [vmem:[#allocation5 + $0x9] sm:$0xff] %v2386
        %v2391 = vld [vmem:[%s12] sm:$0x1]
        %v2392 = vld [vmem:[#allocation5 + $0x1] sm:$0xff]
        %v2393 = vld [vmem:[#allocation5 + $0x9] sm:$0xff]
        %v2394 = vld [vmem:[#allocation5] sm:$0xff]
        %v2395 = vld [vmem:[#allocation5 + $0x8] sm:$0xff]
        %v2396 = vld [vmem:[#allocation5 + $0x2] sm:$0xff]
        %v2397 = vld [vmem:[#allocation5 + $0xa] sm:$0xff]
        %s2398 = scalar_lea.vmem [#allocation13], 128
        %v2399 = vld [vmem:[%s2398] sm:$0xff]
        %v2400 = vld [vmem:[%s2398 + $0x8] sm:$0xff]
        %v2401 = vld [vmem:[%s2398 + $0x10] sm:$0xff]
        %v2402 = vld [vmem:[%s2398 + $0x18] sm:$0xff]
        %v2403 = vld [vmem:[%s2398 + $0x20] sm:$0xff]
        %v2404 = vld [vmem:[%s2398 + $0x28] sm:$0xff]
        %v2405 = vld [vmem:[%s2398 + $0x30] sm:$0xff]
        %v2406 = vld [vmem:[%s2398 + $0x38] sm:$0xff]
        %v2407 = vld [vmem:[%s2398 + $0x40] sm:$0xff]
        %v2408 = vld [vmem:[%s2398 + $0x48] sm:$0xff]
        %v2409 = vld [vmem:[%s2398 + $0x50] sm:$0xff]
        %v2410 = vld [vmem:[%s2398 + $0x58] sm:$0xff]
        %v2411 = vld [vmem:[%s2398 + $0x60] sm:$0xff]
        %v2412 = vld [vmem:[%s2398 + $0x68] sm:$0xff]
        %v2413 = vld [vmem:[%s2398 + $0x70] sm:$0xff]
        %v2414 = vld [vmem:[%s2398 + $0x78] sm:$0xff]
        %s2415 = scalar_lea.vmem [#allocation13], 384
        %v2416 = vld [vmem:[%s2415] sm:$0xff]
        %v2417 = vld [vmem:[%s2415 + $0x8] sm:$0xff]
        %v2418 = vld [vmem:[%s2415 + $0x10] sm:$0xff]
        %v2419 = vld [vmem:[%s2415 + $0x18] sm:$0xff]
        %v2420 = vld [vmem:[%s2415 + $0x20] sm:$0xff]
        %v2421 = vld [vmem:[%s2415 + $0x28] sm:$0xff]
        %v2422 = vld [vmem:[%s2415 + $0x30] sm:$0xff]
        %v2423 = vld [vmem:[%s2415 + $0x38] sm:$0xff]
        %v2424 = vld [vmem:[%s2415 + $0x40] sm:$0xff]
        %v2425 = vld [vmem:[%s2415 + $0x48] sm:$0xff]
        %v2426 = vld [vmem:[%s2415 + $0x50] sm:$0xff]
        %v2427 = vld [vmem:[%s2415 + $0x58] sm:$0xff]
        %v2428 = vld [vmem:[%s2415 + $0x60] sm:$0xff]
        %v2429 = vld [vmem:[%s2415 + $0x68] sm:$0xff]
        %v2430 = vld [vmem:[%s2415 + $0x70] sm:$0xff]
        %v2431 = vld [vmem:[%s2415 + $0x78] sm:$0xff]
        %2432 = vmatprep.subr.mxu0 0.0
        %2433 = vmatpush1.msra.mxu0 %v2416
        %2434 = vmatprep.subr.mxu0 0.0
        %2435 = vmatpush1.msra.mxu0 %v2417
        %2436 = vmatprep.subr.mxu0 0.0
        %2437 = vmatpush1.msra.mxu0 %v2418
        %2438 = vmatprep.subr.mxu0 0.0
        %2439 = vmatpush1.msra.mxu0 %v2419
        %2440 = vmatprep.subr.mxu0 0.0
        %2441 = vmatpush1.msra.mxu0 %v2420
        %2442 = vmatprep.subr.mxu0 0.0
        %2443 = vmatpush1.msra.mxu0 %v2421
        %2444 = vmatprep.subr.mxu0 0.0
        %2445 = vmatpush1.msra.mxu0 %v2422
        %2446 = vmatprep.subr.mxu0 0.0
        %2447 = vmatpush1.msra.mxu0 %v2423
        %2448 = vmatprep.subr.mxu0 0.0
        %2449 = vmatpush1.msra.mxu0 %v2424
        %2450 = vmatprep.subr.mxu0 0.0
        %2451 = vmatpush1.msra.mxu0 %v2425
        %2452 = vmatprep.subr.mxu0 0.0
        %2453 = vmatpush1.msra.mxu0 %v2426
        %2454 = vmatprep.subr.mxu0 0.0
        %2455 = vmatpush1.msra.mxu0 %v2427
        %2456 = vmatprep.subr.mxu0 0.0
        %2457 = vmatpush1.msra.mxu0 %v2428
        %2458 = vmatprep.subr.mxu0 0.0
        %2459 = vmatpush1.msra.mxu0 %v2429
        %2460 = vmatprep.subr.mxu0 0.0
        %2461 = vmatpush1.msra.mxu0 %v2430
        %2462 = vmatprep.subr.mxu0 0.0
        %2463 = vmatpush1.msra.mxu0 %v2431
        %2464 = vmatprep.subr.mxu0 0.0
        %2465 = vmatpush1.msra.mxu0 0.0
        %2466 = vmatprep.subr.mxu0 0.0
        %2467 = vmatpush1.msra.mxu0 0.0
        %2468 = vmatprep.subr.mxu0 0.0
        %2469 = vmatpush1.msra.mxu0 0.0
        %2470 = vmatprep.subr.mxu0 0.0
        %2471 = vmatpush1.msra.mxu0 0.0
        %2472 = vmatprep.subr.mxu0 0.0
        %2473 = vmatpush1.msra.mxu0 0.0
        %2474 = vmatprep.subr.mxu0 0.0
        %2475 = vmatpush1.msra.mxu0 0.0
        %2476 = vmatprep.subr.mxu0 0.0
        %2477 = vmatpush1.msra.mxu0 0.0
        %2478 = vmatprep.subr.mxu0 0.0
        %2479 = vmatpush1.msra.mxu0 0.0
        %2480 = vmatprep.subr.mxu0 0.0
        %2481 = vmatpush1.msra.mxu0 0.0
        %2482 = vmatprep.subr.mxu0 0.0
        %2483 = vmatpush1.msra.mxu0 0.0
        %2484 = vmatprep.subr.mxu0 0.0
        %2485 = vmatpush1.msra.mxu0 0.0
        %2486 = vmatprep.subr.mxu0 0.0
        %2487 = vmatpush1.msra.mxu0 0.0
        %2488 = vmatprep.subr.mxu0 0.0
        %2489 = vmatpush1.msra.mxu0 0.0
        %2490 = vmatprep.subr.mxu0 0.0
        %2491 = vmatpush1.msra.mxu0 0.0
        %2492 = vmatprep.subr.mxu0 0.0
        %2493 = vmatpush1.msra.mxu0 0.0
        %2494 = vmatprep.subr.mxu0 0.0
        %2495 = vmatpush1.msra.mxu0 0.0
        %2496 = vmatprep.mubr.f32.mxu0 0.0
        %2497 = vmatmul.mubr.f32.gmra.mrb[0].mxu0 %v2394
        %v2498 = vpop.f32.mrb[0].mxu0
        %v2499 = vadd.f32 0.0, %v2498
        %v2500 = vpop.f32.mrb[0].mxu0
        %2501 = vmatprep.mubr.f32.mxu0 0.0
        %2502 = vmatmul.mubr.f32.gmra.mrb[0].mxu0 %v2395
        %v2503 = vpop.f32.mrb[0].mxu0
        %v2504 = vadd.f32 0.0, %v2503
        %v2505 = vpop.f32.mrb[0].mxu0
        %2506 = vdwg.mxu0
        %2507 = vmatprep.subr.mxu0 0.0
        %2508 = vmatpush1.msra.mxu0 %v2399
        %2509 = vmatprep.subr.mxu0 0.0
        %2510 = vmatpush1.msra.mxu0 %v2400
        %2511 = vmatprep.subr.mxu0 0.0
        %2512 = vmatpush1.msra.mxu0 %v2401
        %2513 = vmatprep.subr.mxu0 0.0
        %2514 = vmatpush1.msra.mxu0 %v2402
        %2515 = vmatprep.subr.mxu0 0.0
        %2516 = vmatpush1.msra.mxu0 %v2403
        %2517 = vmatprep.subr.mxu0 0.0
        %2518 = vmatpush1.msra.mxu0 %v2404
        %2519 = vmatprep.subr.mxu0 0.0
        %2520 = vmatpush1.msra.mxu0 %v2405
        %2521 = vmatprep.subr.mxu0 0.0
        %2522 = vmatpush1.msra.mxu0 %v2406
        %2523 = vmatprep.subr.mxu0 0.0
        %2524 = vmatpush1.msra.mxu0 %v2407
        %2525 = vmatprep.subr.mxu0 0.0
        %2526 = vmatpush1.msra.mxu0 %v2408
        %2527 = vmatprep.subr.mxu0 0.0
        %2528 = vmatpush1.msra.mxu0 %v2409
        %2529 = vmatprep.subr.mxu0 0.0
        %2530 = vmatpush1.msra.mxu0 %v2410
        %2531 = vmatprep.subr.mxu0 0.0
        %2532 = vmatpush1.msra.mxu0 %v2411
        %2533 = vmatprep.subr.mxu0 0.0
        %2534 = vmatpush1.msra.mxu0 %v2412
        %2535 = vmatprep.subr.mxu0 0.0
        %2536 = vmatpush1.msra.mxu0 %v2413
        %2537 = vmatprep.subr.mxu0 0.0
        %2538 = vmatpush1.msra.mxu0 %v2414
        %2539 = vmatprep.subr.mxu0 0.0
        %2540 = vmatpush1.msra.mxu0 0.0
        %2541 = vmatprep.subr.mxu0 0.0
        %2542 = vmatpush1.msra.mxu0 0.0
        %2543 = vmatprep.subr.mxu0 0.0
        %2544 = vmatpush1.msra.mxu0 0.0
        %2545 = vmatprep.subr.mxu0 0.0
        %2546 = vmatpush1.msra.mxu0 0.0
        %2547 = vmatprep.subr.mxu0 0.0
        %2548 = vmatpush1.msra.mxu0 0.0
        %2549 = vmatprep.subr.mxu0 0.0
        %2550 = vmatpush1.msra.mxu0 0.0
        %2551 = vmatprep.subr.mxu0 0.0
        %2552 = vmatpush1.msra.mxu0 0.0
        %2553 = vmatprep.subr.mxu0 0.0
        %2554 = vmatpush1.msra.mxu0 0.0
        %2555 = vmatprep.subr.mxu0 0.0
        %2556 = vmatpush1.msra.mxu0 0.0
        %2557 = vmatprep.subr.mxu0 0.0
        %2558 = vmatpush1.msra.mxu0 0.0
        %2559 = vmatprep.subr.mxu0 0.0
        %2560 = vmatpush1.msra.mxu0 0.0
        %2561 = vmatprep.subr.mxu0 0.0
        %2562 = vmatpush1.msra.mxu0 0.0
        %2563 = vmatprep.subr.mxu0 0.0
        %2564 = vmatpush1.msra.mxu0 0.0
        %2565 = vmatprep.subr.mxu0 0.0
        %2566 = vmatpush1.msra.mxu0 0.0
        %2567 = vmatprep.subr.mxu0 0.0
        %2568 = vmatpush1.msra.mxu0 0.0
        %2569 = vmatprep.subr.mxu0 0.0
        %2570 = vmatpush1.msra.mxu0 0.0
        %2571 = vmatprep.mubr.f32.mxu0 0.0
        %2572 = vmatmul.mubr.f32.gmra.mrb[0].mxu0 %v2392
        %v2573 = vpop.f32.mrb[0].mxu0
        %v2574 = vadd.f32 %v2499, %v2573
        %v2575 = vpop.f32.mrb[0].mxu0
        %2576 = vmatprep.mubr.f32.mxu0 0.0
        %2577 = vmatmul.mubr.f32.gmra.mrb[0].mxu0 %v2393
        %v2578 = vpop.f32.mrb[0].mxu0
        %v2579 = vadd.f32 %v2504, %v2578
        %v2580 = vpop.f32.mrb[0].mxu0
        %2581 = vdwg.mxu0
        %s2582 = scalar_lea.vmem [#allocation13], 256
        %v2583 = vld [vmem:[%s2582] sm:$0xff]
        %v2584 = vld [vmem:[%s2582 + $0x8] sm:$0xff]
        %v2585 = vld [vmem:[%s2582 + $0x10] sm:$0xff]
        %v2586 = vld [vmem:[%s2582 + $0x18] sm:$0xff]
        %v2587 = vld [vmem:[%s2582 + $0x20] sm:$0xff]
        %v2588 = vld [vmem:[%s2582 + $0x28] sm:$0xff]
        %v2589 = vld [vmem:[%s2582 + $0x30] sm:$0xff]
        %v2590 = vld [vmem:[%s2582 + $0x38] sm:$0xff]
        %v2591 = vld [vmem:[%s2582 + $0x40] sm:$0xff]
        %v2592 = vld [vmem:[%s2582 + $0x48] sm:$0xff]
        %v2593 = vld [vmem:[%s2582 + $0x50] sm:$0xff]
        %v2594 = vld [vmem:[%s2582 + $0x58] sm:$0xff]
        %v2595 = vld [vmem:[%s2582 + $0x60] sm:$0xff]
        %v2596 = vld [vmem:[%s2582 + $0x68] sm:$0xff]
        %v2597 = vld [vmem:[%s2582 + $0x70] sm:$0xff]
        %v2598 = vld [vmem:[%s2582 + $0x78] sm:$0xff]
        %v2599 = vld [vmem:[#allocation13] sm:$0xff]
        %v2600 = vld [vmem:[#allocation13 + $0x8] sm:$0xff]
        %v2601 = vld [vmem:[#allocation13 + $0x10] sm:$0xff]
        %v2602 = vld [vmem:[#allocation13 + $0x18] sm:$0xff]
        %v2603 = vld [vmem:[#allocation13 + $0x20] sm:$0xff]
        %v2604 = vld [vmem:[#allocation13 + $0x28] sm:$0xff]
        %v2605 = vld [vmem:[#allocation13 + $0x30] sm:$0xff]
        %v2606 = vld [vmem:[#allocation13 + $0x38] sm:$0xff]
        %v2607 = vld [vmem:[#allocation13 + $0x40] sm:$0xff]
        %v2608 = vld [vmem:[#allocation13 + $0x48] sm:$0xff]
        %v2609 = vld [vmem:[#allocation13 + $0x50] sm:$0xff]
        %v2610 = vld [vmem:[#allocation13 + $0x58] sm:$0xff]
        %v2611 = vld [vmem:[#allocation13 + $0x60] sm:$0xff]
        %v2612 = vld [vmem:[#allocation13 + $0x68] sm:$0xff]
        %v2613 = vld [vmem:[#allocation13 + $0x70] sm:$0xff]
        %v2614 = vld [vmem:[#allocation13 + $0x78] sm:$0xff]
        %2615 = vmatprep.subr.mxu0 0.0
        %2616 = vmatpush1.msra.mxu0 %v2599
        %2617 = vmatprep.subr.mxu0 0.0
        %2618 = vmatpush1.msra.mxu0 %v2600
        %2619 = vmatprep.subr.mxu0 0.0
        %2620 = vmatpush1.msra.mxu0 %v2601
        %2621 = vmatprep.subr.mxu0 0.0
        %2622 = vmatpush1.msra.mxu0 %v2602
        %2623 = vmatprep.subr.mxu0 0.0
        %2624 = vmatpush1.msra.mxu0 %v2603
        %2625 = vmatprep.subr.mxu0 0.0
        %2626 = vmatpush1.msra.mxu0 %v2604
        %2627 = vmatprep.subr.mxu0 0.0
        %2628 = vmatpush1.msra.mxu0 %v2605
        %2629 = vmatprep.subr.mxu0 0.0
        %2630 = vmatpush1.msra.mxu0 %v2606
        %2631 = vmatprep.subr.mxu0 0.0
        %2632 = vmatpush1.msra.mxu0 %v2607
        %2633 = vmatprep.subr.mxu0 0.0
        %2634 = vmatpush1.msra.mxu0 %v2608
        %2635 = vmatprep.subr.mxu0 0.0
        %2636 = vmatpush1.msra.mxu0 %v2609
        %2637 = vmatprep.subr.mxu0 0.0
        %2638 = vmatpush1.msra.mxu0 %v2610
        %2639 = vmatprep.subr.mxu0 0.0
        %2640 = vmatpush1.msra.mxu0 %v2611
        %2641 = vmatprep.subr.mxu0 0.0
        %2642 = vmatpush1.msra.mxu0 %v2612
        %2643 = vmatprep.subr.mxu0 0.0
        %2644 = vmatpush1.msra.mxu0 %v2613
        %2645 = vmatprep.subr.mxu0 0.0
        %2646 = vmatpush1.msra.mxu0 %v2614
        %2647 = vmatprep.subr.mxu0 0.0
        %2648 = vmatpush1.msra.mxu0 0.0
        %2649 = vmatprep.subr.mxu0 0.0
        %2650 = vmatpush1.msra.mxu0 0.0
        %2651 = vmatprep.subr.mxu0 0.0
        %2652 = vmatpush1.msra.mxu0 0.0
        %2653 = vmatprep.subr.mxu0 0.0
        %2654 = vmatpush1.msra.mxu0 0.0
        %2655 = vmatprep.subr.mxu0 0.0
        %2656 = vmatpush1.msra.mxu0 0.0
        %2657 = vmatprep.subr.mxu0 0.0
        %2658 = vmatpush1.msra.mxu0 0.0
        %2659 = vmatprep.subr.mxu0 0.0
        %2660 = vmatpush1.msra.mxu0 0.0
        %2661 = vmatprep.subr.mxu0 0.0
        %2662 = vmatpush1.msra.mxu0 0.0
        %2663 = vmatprep.subr.mxu0 0.0
        %2664 = vmatpush1.msra.mxu0 0.0
        %2665 = vmatprep.subr.mxu0 0.0
        %2666 = vmatpush1.msra.mxu0 0.0
        %2667 = vmatprep.subr.mxu0 0.0
        %2668 = vmatpush1.msra.mxu0 0.0
        %2669 = vmatprep.subr.mxu0 0.0
        %2670 = vmatpush1.msra.mxu0 0.0
        %2671 = vmatprep.subr.mxu0 0.0
        %2672 = vmatpush1.msra.mxu0 0.0
        %2673 = vmatprep.subr.mxu0 0.0
        %2674 = vmatpush1.msra.mxu0 0.0
        %2675 = vmatprep.subr.mxu0 0.0
        %2676 = vmatpush1.msra.mxu0 0.0
        %2677 = vmatprep.subr.mxu0 0.0
        %2678 = vmatpush1.msra.mxu0 0.0
        %2679 = vmatprep.mubr.f32.mxu0 0.0
        %2680 = vmatmul.mubr.f32.gmra.mrb[0].mxu0 %v2396
        %v2681 = vpop.f32.mrb[0].mxu0
        %v2682 = vadd.f32 0.0, %v2681
        %v2683 = vpop.f32.mrb[0].mxu0
        %2684 = vmatprep.mubr.f32.mxu0 0.0
        %2685 = vmatmul.mubr.f32.gmra.mrb[0].mxu0 %v2397
        %v2686 = vpop.f32.mrb[0].mxu0
        %v2687 = vadd.f32 0.0, %v2686
        %v2688 = vpop.f32.mrb[0].mxu0
        %2689 = vdwg.mxu0
        %2690 = vmatprep.subr.mxu0 0.0
        %2691 = vmatpush1.msra.mxu0 %v2583
        %2692 = vmatprep.subr.mxu0 0.0
        %2693 = vmatpush1.msra.mxu0 %v2584
        %2694 = vmatprep.subr.mxu0 0.0
        %2695 = vmatpush1.msra.mxu0 %v2585
        %2696 = vmatprep.subr.mxu0 0.0
        %2697 = vmatpush1.msra.mxu0 %v2586
        %2698 = vmatprep.subr.mxu0 0.0
        %2699 = vmatpush1.msra.mxu0 %v2587
        %2700 = vmatprep.subr.mxu0 0.0
        %2701 = vmatpush1.msra.mxu0 %v2588
        %2702 = vmatprep.subr.mxu0 0.0
        %2703 = vmatpush1.msra.mxu0 %v2589
        %2704 = vmatprep.subr.mxu0 0.0
        %2705 = vmatpush1.msra.mxu0 %v2590
        %2706 = vmatprep.subr.mxu0 0.0
        %2707 = vmatpush1.msra.mxu0 %v2591
        %2708 = vmatprep.subr.mxu0 0.0
        %2709 = vmatpush1.msra.mxu0 %v2592
        %2710 = vmatprep.subr.mxu0 0.0
        %2711 = vmatpush1.msra.mxu0 %v2593
        %2712 = vmatprep.subr.mxu0 0.0
        %2713 = vmatpush1.msra.mxu0 %v2594
        %2714 = vmatprep.subr.mxu0 0.0
        %2715 = vmatpush1.msra.mxu0 %v2595
        %2716 = vmatprep.subr.mxu0 0.0
        %2717 = vmatpush1.msra.mxu0 %v2596
        %2718 = vmatprep.subr.mxu0 0.0
        %2719 = vmatpush1.msra.mxu0 %v2597
        %2720 = vmatprep.subr.mxu0 0.0
        %2721 = vmatpush1.msra.mxu0 %v2598
        %2722 = vmatprep.subr.mxu0 0.0
        %2723 = vmatpush1.msra.mxu0 0.0
        %2724 = vmatprep.subr.mxu0 0.0
        %2725 = vmatpush1.msra.mxu0 0.0
        %2726 = vmatprep.subr.mxu0 0.0
        %2727 = vmatpush1.msra.mxu0 0.0
        %2728 = vmatprep.subr.mxu0 0.0
        %2729 = vmatpush1.msra.mxu0 0.0
        %2730 = vmatprep.subr.mxu0 0.0
        %2731 = vmatpush1.msra.mxu0 0.0
        %2732 = vmatprep.subr.mxu0 0.0
        %2733 = vmatpush1.msra.mxu0 0.0
        %2734 = vmatprep.subr.mxu0 0.0
        %2735 = vmatpush1.msra.mxu0 0.0
        %2736 = vmatprep.subr.mxu0 0.0
        %2737 = vmatpush1.msra.mxu0 0.0
        %2738 = vmatprep.subr.mxu0 0.0
        %2739 = vmatpush1.msra.mxu0 0.0
        %2740 = vmatprep.subr.mxu0 0.0
        %2741 = vmatpush1.msra.mxu0 0.0
        %2742 = vmatprep.subr.mxu0 0.0
        %2743 = vmatpush1.msra.mxu0 0.0
        %2744 = vmatprep.subr.mxu0 0.0
        %2745 = vmatpush1.msra.mxu0 0.0
        %2746 = vmatprep.subr.mxu0 0.0
        %2747 = vmatpush1.msra.mxu0 0.0
        %2748 = vmatprep.subr.mxu0 0.0
        %2749 = vmatpush1.msra.mxu0 0.0
        %2750 = vmatprep.subr.mxu0 0.0
        %2751 = vmatpush1.msra.mxu0 0.0
        %2752 = vmatprep.subr.mxu0 0.0
        %2753 = vmatpush1.msra.mxu0 0.0
        %2754 = vmatprep.mubr.f32.mxu0 0.0
        %2755 = vmatmul.mubr.f32.gmra.mrb[0].mxu0 %v2392
        %v2756 = vpop.f32.mrb[0].mxu0
        %v2757 = vadd.f32 %v2682, %v2756
        %v2758 = vpop.f32.mrb[0].mxu0
        %2759 = vmatprep.mubr.f32.mxu0 0.0
        %2760 = vmatmul.mubr.f32.gmra.mrb[0].mxu0 %v2393
        %v2761 = vpop.f32.mrb[0].mxu0
        %v2762 = vadd.f32 %v2687, %v2761
        %v2763 = vpop.f32.mrb[0].mxu0
        %2764 = vdwg.mxu0
        %v2766 = vlaneseq
        %v2767 = vshrl.u32 %v2766, 7
        %v2768 = vsub.s32 0, %v2767
        %v2769 = vrot.slane %v2391, %v2768
        %v2771 = vadd.f32 %v2574, %v2769
        %v2772 = vadd.f32 %v2579, %v2769
        %v2773 = vmax.f32 %v2771, 0.0
        %v2774 = vmax.f32 %v2772, 0.0
        %v2775 = vadd.f32 %v2757, %v2769
        %v2776 = vadd.f32 %v2762, %v2769
        %v2777 = vmax.f32 %v2775, 0.0
        %v2778 = vmax.f32 %v2776, 0.0
        %2779 = vst [vmem:[#allocation6] sm:$0x1] 0.0
        %2780 = vst [vmem:[#allocation6 + $0x21] sm:$0x1] 0.0
        %v2781 = vadd.s32 %v1176, 16
        %v2782 = vadd.s32 %v1176, 24
        %vm2783 = vcmp.eq.s32.totalorder %v2781, %v1179
        %vm2784 = vcmp.eq.s32.totalorder %v2782, %v1179
        %v2785 = vsel %vm2783, 1, 0
        %v2786 = vsel %vm2784, 1, 0
        %v2787 = vcvt.s32.f32 %v2785
        %v2788 = vcvt.s32.f32 %v2786
        %vm2789 = vcmp.eq.s32.totalorder %v2781, %v1183
        %vm2790 = vcmp.eq.s32.totalorder %v2782, %v1183
        %v2791 = vsel %vm2789, 1, 0
        %v2792 = vsel %vm2790, 1, 0
        %v2793 = vcvt.s32.f32 %v2791
        %v2794 = vcvt.s32.f32 %v2792
        %vm2795 = vcmask 130048
        %v2796 = vsel %vm2795, %v1186, 0
        %v2798 = vsel %vm2795, %v2227, 0
        %v2801 = vsel %vm2795, %v2793, 0
        %v2804 = vsel %vm2795, %v2794, 0
        %2806 = vmatprep.subr.mxu0 0.0
        %2807 = vmatpush1.msra.mxu0 %v2777
        %2808 = vmatprep.subr.mxu0 0.0
        %2809 = vmatpush1.msra.mxu0 %v2778
        %2810 = vmatprep.subr.mxu0 0.0
        %2811 = vmatpush1.msra.mxu0 0.0
        %2812 = vmatprep.subr.mxu0 0.0
        %2813 = vmatpush1.msra.mxu0 0.0
        %2814 = vmatprep.subr.mxu0 0.0
        %2815 = vmatpush1.msra.mxu0 0.0
        %2816 = vmatprep.subr.mxu0 0.0
        %2817 = vmatpush1.msra.mxu0 0.0
        %2818 = vmatprep.subr.mxu0 0.0
        %2819 = vmatpush1.msra.mxu0 0.0
        %2820 = vmatprep.subr.mxu0 0.0
        %2821 = vmatpush1.msra.mxu0 0.0
        %2822 = vmatprep.subr.mxu0 0.0
        %2823 = vmatpush1.msra.mxu0 0.0
        %2824 = vmatprep.subr.mxu0 0.0
        %2825 = vmatpush1.msra.mxu0 0.0
        %2826 = vmatprep.subr.mxu0 0.0
        %2827 = vmatpush1.msra.mxu0 0.0
        %2828 = vmatprep.subr.mxu0 0.0
        %2829 = vmatpush1.msra.mxu0 0.0
        %2830 = vmatprep.subr.mxu0 0.0
        %2831 = vmatpush1.msra.mxu0 0.0
        %2832 = vmatprep.subr.mxu0 0.0
        %2833 = vmatpush1.msra.mxu0 0.0
        %2834 = vmatprep.subr.mxu0 0.0
        %2835 = vmatpush1.msra.mxu0 0.0
        %2836 = vmatprep.subr.mxu0 0.0
        %2837 = vmatpush1.msra.mxu0 0.0
        %2838 = vmatprep.subr.mxu0 0.0
        %2839 = vmatpush1.msra.mxu0 0.0
        %2840 = vmatprep.subr.mxu0 0.0
        %2841 = vmatpush1.msra.mxu0 0.0
        %2842 = vmatprep.subr.mxu0 0.0
        %2843 = vmatpush1.msra.mxu0 0.0
        %2844 = vmatprep.subr.mxu0 0.0
        %2845 = vmatpush1.msra.mxu0 0.0
        %2846 = vmatprep.subr.mxu0 0.0
        %2847 = vmatpush1.msra.mxu0 0.0
        %2848 = vmatprep.subr.mxu0 0.0
        %2849 = vmatpush1.msra.mxu0 0.0
        %2850 = vmatprep.subr.mxu0 0.0
        %2851 = vmatpush1.msra.mxu0 0.0
        %2852 = vmatprep.subr.mxu0 0.0
        %2853 = vmatpush1.msra.mxu0 0.0
        %2854 = vmatprep.subr.mxu0 0.0
        %2855 = vmatpush1.msra.mxu0 0.0
        %2856 = vmatprep.subr.mxu0 0.0
        %2857 = vmatpush1.msra.mxu0 0.0
        %2858 = vmatprep.subr.mxu0 0.0
        %2859 = vmatpush1.msra.mxu0 0.0
        %2860 = vmatprep.subr.mxu0 0.0
        %2861 = vmatpush1.msra.mxu0 0.0
        %2862 = vmatprep.subr.mxu0 0.0
        %2863 = vmatpush1.msra.mxu0 0.0
        %2864 = vmatprep.subr.mxu0 0.0
        %2865 = vmatpush1.msra.mxu0 0.0
        %2866 = vmatprep.subr.mxu0 0.0
        %2867 = vmatpush1.msra.mxu0 0.0
        %2868 = vmatprep.subr.mxu0 0.0
        %2869 = vmatpush1.msra.mxu0 0.0
        %2870 = vmatprep.mubr.f32.mxu0 0.0
        %2871 = vmatmul.mubr.f32.gmra.mrb[0].mxu0 %v2796
        %v2872 = vpop.f32.mrb[0].mxu0
        %v2873 = vadd.f32 0.0, %v2872
        %v2874 = vpop.f32.mrb[0].mxu0
        %2875 = vmatprep.mubr.f32.mxu0 0.0
        %2876 = vmatmul.mubr.f32.gmra.mrb[0].mxu0 %v2798
        %v2877 = vpop.f32.mrb[0].mxu0
        %v2878 = vadd.f32 0.0, %v2877
        %v2879 = vpop.f32.mrb[0].mxu0
        %2880 = vmatprep.mubr.f32.mxu0 0.0
        %2881 = vmatmul.mubr.f32.gmra.mrb[0].mxu0 %v2801
        %v2882 = vpop.f32.mrb[0].mxu0
        %v2883 = vadd.f32 0.0, %v2882
        %v2884 = vpop.f32.mrb[0].mxu0
        %2885 = vmatprep.mubr.f32.mxu0 0.0
        %2886 = vmatmul.mubr.f32.gmra.mrb[0].mxu0 %v2804
        %v2887 = vpop.f32.mrb[0].mxu0
        %v2888 = vadd.f32 0.0, %v2887
        %v2889 = vpop.f32.mrb[0].mxu0
        %2890 = vdwg.mxu0
        %v2891 = vsel %vm2795, %v1182, 0
        %v2893 = vsel %vm2795, %v2224, 0
        %v2896 = vsel %vm2795, %v2787, 0
        %v2899 = vsel %vm2795, %v2788, 0
        %2901 = vmatprep.subr.mxu0 0.0
        %2902 = vmatpush1.msra.mxu0 %v2773
        %2903 = vmatprep.subr.mxu0 0.0
        %2904 = vmatpush1.msra.mxu0 %v2774
        %2905 = vmatprep.subr.mxu0 0.0
        %2906 = vmatpush1.msra.mxu0 0.0
        %2907 = vmatprep.subr.mxu0 0.0
        %2908 = vmatpush1.msra.mxu0 0.0
        %2909 = vmatprep.subr.mxu0 0.0
        %2910 = vmatpush1.msra.mxu0 0.0
        %2911 = vmatprep.subr.mxu0 0.0
        %2912 = vmatpush1.msra.mxu0 0.0
        %2913 = vmatprep.subr.mxu0 0.0
        %2914 = vmatpush1.msra.mxu0 0.0
        %2915 = vmatprep.subr.mxu0 0.0
        %2916 = vmatpush1.msra.mxu0 0.0
        %2917 = vmatprep.subr.mxu0 0.0
        %2918 = vmatpush1.msra.mxu0 0.0
        %2919 = vmatprep.subr.mxu0 0.0
        %2920 = vmatpush1.msra.mxu0 0.0
        %2921 = vmatprep.subr.mxu0 0.0
        %2922 = vmatpush1.msra.mxu0 0.0
        %2923 = vmatprep.subr.mxu0 0.0
        %2924 = vmatpush1.msra.mxu0 0.0
        %2925 = vmatprep.subr.mxu0 0.0
        %2926 = vmatpush1.msra.mxu0 0.0
        %2927 = vmatprep.subr.mxu0 0.0
        %2928 = vmatpush1.msra.mxu0 0.0
        %2929 = vmatprep.subr.mxu0 0.0
        %2930 = vmatpush1.msra.mxu0 0.0
        %2931 = vmatprep.subr.mxu0 0.0
        %2932 = vmatpush1.msra.mxu0 0.0
        %2933 = vmatprep.subr.mxu0 0.0
        %2934 = vmatpush1.msra.mxu0 0.0
        %2935 = vmatprep.subr.mxu0 0.0
        %2936 = vmatpush1.msra.mxu0 0.0
        %2937 = vmatprep.subr.mxu0 0.0
        %2938 = vmatpush1.msra.mxu0 0.0
        %2939 = vmatprep.subr.mxu0 0.0
        %2940 = vmatpush1.msra.mxu0 0.0
        %2941 = vmatprep.subr.mxu0 0.0
        %2942 = vmatpush1.msra.mxu0 0.0
        %2943 = vmatprep.subr.mxu0 0.0
        %2944 = vmatpush1.msra.mxu0 0.0
        %2945 = vmatprep.subr.mxu0 0.0
        %2946 = vmatpush1.msra.mxu0 0.0
        %2947 = vmatprep.subr.mxu0 0.0
        %2948 = vmatpush1.msra.mxu0 0.0
        %2949 = vmatprep.subr.mxu0 0.0
        %2950 = vmatpush1.msra.mxu0 0.0
        %2951 = vmatprep.subr.mxu0 0.0
        %2952 = vmatpush1.msra.mxu0 0.0
        %2953 = vmatprep.subr.mxu0 0.0
        %2954 = vmatpush1.msra.mxu0 0.0
        %2955 = vmatprep.subr.mxu0 0.0
        %2956 = vmatpush1.msra.mxu0 0.0
        %2957 = vmatprep.subr.mxu0 0.0
        %2958 = vmatpush1.msra.mxu0 0.0
        %2959 = vmatprep.subr.mxu0 0.0
        %2960 = vmatpush1.msra.mxu0 0.0
        %2961 = vmatprep.subr.mxu0 0.0
        %2962 = vmatpush1.msra.mxu0 0.0
        %2963 = vmatprep.subr.mxu0 0.0
        %2964 = vmatpush1.msra.mxu0 0.0
        %2965 = vmatprep.mubr.f32.mxu0 0.0
        %2966 = vmatmul.mubr.f32.gmra.mrb[0].mxu0 %v2891
        %v2967 = vpop.f32.mrb[0].mxu0
        %v2968 = vadd.f32 %v2873, %v2967
        %v2969 = vpop.f32.mrb[0].mxu0
        %2970 = vmatprep.mubr.f32.mxu0 0.0
        %2971 = vmatmul.mubr.f32.gmra.mrb[0].mxu0 %v2893
        %v2972 = vpop.f32.mrb[0].mxu0
        %v2973 = vadd.f32 %v2878, %v2972
        %v2974 = vpop.f32.mrb[0].mxu0
        %2975 = vmatprep.mubr.f32.mxu0 0.0
        %2976 = vmatmul.mubr.f32.gmra.mrb[0].mxu0 %v2896
        %v2977 = vpop.f32.mrb[0].mxu0
        %v2978 = vadd.f32 %v2883, %v2977
        %v2979 = vpop.f32.mrb[0].mxu0
        %2980 = vmatprep.mubr.f32.mxu0 0.0
        %2981 = vmatmul.mubr.f32.gmra.mrb[0].mxu0 %v2899
        %v2982 = vpop.f32.mrb[0].mxu0
        %v2983 = vadd.f32 %v2888, %v2982
        %v2984 = vpop.f32.mrb[0].mxu0
        %2985 = vdwg.mxu0
        %2986 = vst [vmem:[#allocation6 + $0x1] sm:$0xff] %v2968
        %2987 = vst [vmem:[#allocation6 + $0x9] sm:$0xff] %v2973
        %2988 = vst [vmem:[#allocation6 + $0x11] sm:$0xff] %v2978
        %2989 = vst [vmem:[#allocation6 + $0x19] sm:$0xff] %v2983
        %v2990 = vld [vmem:[%s14] sm:$0x1]
        %v2991 = vld [vmem:[#allocation6 + $0x1] sm:$0xff]
        %v2992 = vld [vmem:[#allocation6 + $0x9] sm:$0xff]
        %v2993 = vld [vmem:[#allocation6 + $0x11] sm:$0xff]
        %v2994 = vld [vmem:[#allocation6 + $0x19] sm:$0xff]
        %v2995 = vld [vmem:[#allocation6] sm:$0xff]
        %v2996 = vld [vmem:[#allocation6 + $0x8] sm:$0xff]
        %v2997 = vld [vmem:[#allocation6 + $0x10] sm:$0xff]
        %v2998 = vld [vmem:[#allocation6 + $0x18] sm:$0xff]
        %v2999 = vld [vmem:[#allocation6 + $0x2] sm:$0xff]
        %v3000 = vld [vmem:[#allocation6 + $0xa] sm:$0xff]
        %v3001 = vld [vmem:[#allocation6 + $0x12] sm:$0xff]
        %v3002 = vld [vmem:[#allocation6 + $0x1a] sm:$0xff]
        %s3003 = scalar_lea.vmem %s13, 128
        %v3004 = vld [vmem:[%s3003] sm:$0xff]
        %v3005 = vld [vmem:[%s3003 + $0x8] sm:$0xff]
        %v3006 = vld [vmem:[%s3003 + $0x10] sm:$0xff]
        %v3007 = vld [vmem:[%s3003 + $0x18] sm:$0xff]
        %v3008 = vld [vmem:[%s3003 + $0x20] sm:$0xff]
        %v3009 = vld [vmem:[%s3003 + $0x28] sm:$0xff]
        %v3010 = vld [vmem:[%s3003 + $0x30] sm:$0xff]
        %v3011 = vld [vmem:[%s3003 + $0x38] sm:$0xff]
        %v3012 = vld [vmem:[%s3003 + $0x40] sm:$0xff]
        %v3013 = vld [vmem:[%s3003 + $0x48] sm:$0xff]
        %v3014 = vld [vmem:[%s3003 + $0x50] sm:$0xff]
        %v3015 = vld [vmem:[%s3003 + $0x58] sm:$0xff]
        %v3016 = vld [vmem:[%s3003 + $0x60] sm:$0xff]
        %v3017 = vld [vmem:[%s3003 + $0x68] sm:$0xff]
        %v3018 = vld [vmem:[%s3003 + $0x70] sm:$0xff]
        %v3019 = vld [vmem:[%s3003 + $0x78] sm:$0xff]
        %s3020 = scalar_lea.vmem %s13, 384
        %v3021 = vld [vmem:[%s3020] sm:$0xff]
        %v3022 = vld [vmem:[%s3020 + $0x8] sm:$0xff]
        %v3023 = vld [vmem:[%s3020 + $0x10] sm:$0xff]
        %v3024 = vld [vmem:[%s3020 + $0x18] sm:$0xff]
        %v3025 = vld [vmem:[%s3020 + $0x20] sm:$0xff]
        %v3026 = vld [vmem:[%s3020 + $0x28] sm:$0xff]
        %v3027 = vld [vmem:[%s3020 + $0x30] sm:$0xff]
        %v3028 = vld [vmem:[%s3020 + $0x38] sm:$0xff]
        %v3029 = vld [vmem:[%s3020 + $0x40] sm:$0xff]
        %v3030 = vld [vmem:[%s3020 + $0x48] sm:$0xff]
        %v3031 = vld [vmem:[%s3020 + $0x50] sm:$0xff]
        %v3032 = vld [vmem:[%s3020 + $0x58] sm:$0xff]
        %v3033 = vld [vmem:[%s3020 + $0x60] sm:$0xff]
        %v3034 = vld [vmem:[%s3020 + $0x68] sm:$0xff]
        %v3035 = vld [vmem:[%s3020 + $0x70] sm:$0xff]
        %v3036 = vld [vmem:[%s3020 + $0x78] sm:$0xff]
        %3037 = vmatprep.subr.mxu0 0.0
        %3038 = vmatpush1.msra.mxu0 %v3021
        %3039 = vmatprep.subr.mxu0 0.0
        %3040 = vmatpush1.msra.mxu0 %v3022
        %3041 = vmatprep.subr.mxu0 0.0
        %3042 = vmatpush1.msra.mxu0 %v3023
        %3043 = vmatprep.subr.mxu0 0.0
        %3044 = vmatpush1.msra.mxu0 %v3024
        %3045 = vmatprep.subr.mxu0 0.0
        %3046 = vmatpush1.msra.mxu0 %v3025
        %3047 = vmatprep.subr.mxu0 0.0
        %3048 = vmatpush1.msra.mxu0 %v3026
        %3049 = vmatprep.subr.mxu0 0.0
        %3050 = vmatpush1.msra.mxu0 %v3027
        %3051 = vmatprep.subr.mxu0 0.0
        %3052 = vmatpush1.msra.mxu0 %v3028
        %3053 = vmatprep.subr.mxu0 0.0
        %3054 = vmatpush1.msra.mxu0 %v3029
        %3055 = vmatprep.subr.mxu0 0.0
        %3056 = vmatpush1.msra.mxu0 %v3030
        %3057 = vmatprep.subr.mxu0 0.0
        %3058 = vmatpush1.msra.mxu0 %v3031
        %3059 = vmatprep.subr.mxu0 0.0
        %3060 = vmatpush1.msra.mxu0 %v3032
        %3061 = vmatprep.subr.mxu0 0.0
        %3062 = vmatpush1.msra.mxu0 %v3033
        %3063 = vmatprep.subr.mxu0 0.0
        %3064 = vmatpush1.msra.mxu0 %v3034
        %3065 = vmatprep.subr.mxu0 0.0
        %3066 = vmatpush1.msra.mxu0 %v3035
        %3067 = vmatprep.subr.mxu0 0.0
        %3068 = vmatpush1.msra.mxu0 %v3036
        %3069 = vmatprep.subr.mxu0 0.0
        %3070 = vmatpush1.msra.mxu0 0.0
        %3071 = vmatprep.subr.mxu0 0.0
        %3072 = vmatpush1.msra.mxu0 0.0
        %3073 = vmatprep.subr.mxu0 0.0
        %3074 = vmatpush1.msra.mxu0 0.0
        %3075 = vmatprep.subr.mxu0 0.0
        %3076 = vmatpush1.msra.mxu0 0.0
        %3077 = vmatprep.subr.mxu0 0.0
        %3078 = vmatpush1.msra.mxu0 0.0
        %3079 = vmatprep.subr.mxu0 0.0
        %3080 = vmatpush1.msra.mxu0 0.0
        %3081 = vmatprep.subr.mxu0 0.0
        %3082 = vmatpush1.msra.mxu0 0.0
        %3083 = vmatprep.subr.mxu0 0.0
        %3084 = vmatpush1.msra.mxu0 0.0
        %3085 = vmatprep.subr.mxu0 0.0
        %3086 = vmatpush1.msra.mxu0 0.0
        %3087 = vmatprep.subr.mxu0 0.0
        %3088 = vmatpush1.msra.mxu0 0.0
        %3089 = vmatprep.subr.mxu0 0.0
        %3090 = vmatpush1.msra.mxu0 0.0
        %3091 = vmatprep.subr.mxu0 0.0
        %3092 = vmatpush1.msra.mxu0 0.0
        %3093 = vmatprep.subr.mxu0 0.0
        %3094 = vmatpush1.msra.mxu0 0.0
        %3095 = vmatprep.subr.mxu0 0.0
        %3096 = vmatpush1.msra.mxu0 0.0
        %3097 = vmatprep.subr.mxu0 0.0
        %3098 = vmatpush1.msra.mxu0 0.0
        %3099 = vmatprep.subr.mxu0 0.0
        %3100 = vmatpush1.msra.mxu0 0.0
        %3101 = vmatprep.mubr.f32.mxu0 0.0
        %3102 = vmatmul.mubr.f32.gmra.mrb[0].mxu0 %v2995
        %v3103 = vpop.f32.mrb[0].mxu0
        %v3104 = vadd.f32 0.0, %v3103
        %v3105 = vpop.f32.mrb[0].mxu0
        %3106 = vmatprep.mubr.f32.mxu0 0.0
        %3107 = vmatmul.mubr.f32.gmra.mrb[0].mxu0 %v2996
        %v3108 = vpop.f32.mrb[0].mxu0
        %v3109 = vadd.f32 0.0, %v3108
        %v3110 = vpop.f32.mrb[0].mxu0
        %3111 = vmatprep.mubr.f32.mxu0 0.0
        %3112 = vmatmul.mubr.f32.gmra.mrb[0].mxu0 %v2997
        %v3113 = vpop.f32.mrb[0].mxu0
        %v3114 = vadd.f32 0.0, %v3113
        %v3115 = vpop.f32.mrb[0].mxu0
        %3116 = vmatprep.mubr.f32.mxu0 0.0
        %3117 = vmatmul.mubr.f32.gmra.mrb[0].mxu0 %v2998
        %v3118 = vpop.f32.mrb[0].mxu0
        %v3119 = vadd.f32 0.0, %v3118
        %v3120 = vpop.f32.mrb[0].mxu0
        %3121 = vdwg.mxu0
        %3122 = vmatprep.subr.mxu0 0.0
        %3123 = vmatpush1.msra.mxu0 %v3004
        %3124 = vmatprep.subr.mxu0 0.0
        %3125 = vmatpush1.msra.mxu0 %v3005
        %3126 = vmatprep.subr.mxu0 0.0
        %3127 = vmatpush1.msra.mxu0 %v3006
        %3128 = vmatprep.subr.mxu0 0.0
        %3129 = vmatpush1.msra.mxu0 %v3007
        %3130 = vmatprep.subr.mxu0 0.0
        %3131 = vmatpush1.msra.mxu0 %v3008
        %3132 = vmatprep.subr.mxu0 0.0
        %3133 = vmatpush1.msra.mxu0 %v3009
        %3134 = vmatprep.subr.mxu0 0.0
        %3135 = vmatpush1.msra.mxu0 %v3010
        %3136 = vmatprep.subr.mxu0 0.0
        %3137 = vmatpush1.msra.mxu0 %v3011
        %3138 = vmatprep.subr.mxu0 0.0
        %3139 = vmatpush1.msra.mxu0 %v3012
        %3140 = vmatprep.subr.mxu0 0.0
        %3141 = vmatpush1.msra.mxu0 %v3013
        %3142 = vmatprep.subr.mxu0 0.0
        %3143 = vmatpush1.msra.mxu0 %v3014
        %3144 = vmatprep.subr.mxu0 0.0
        %3145 = vmatpush1.msra.mxu0 %v3015
        %3146 = vmatprep.subr.mxu0 0.0
        %3147 = vmatpush1.msra.mxu0 %v3016
        %3148 = vmatprep.subr.mxu0 0.0
        %3149 = vmatpush1.msra.mxu0 %v3017
        %3150 = vmatprep.subr.mxu0 0.0
        %3151 = vmatpush1.msra.mxu0 %v3018
        %3152 = vmatprep.subr.mxu0 0.0
        %3153 = vmatpush1.msra.mxu0 %v3019
        %3154 = vmatprep.subr.mxu0 0.0
        %3155 = vmatpush1.msra.mxu0 0.0
        %3156 = vmatprep.subr.mxu0 0.0
        %3157 = vmatpush1.msra.mxu0 0.0
        %3158 = vmatprep.subr.mxu0 0.0
        %3159 = vmatpush1.msra.mxu0 0.0
        %3160 = vmatprep.subr.mxu0 0.0
        %3161 = vmatpush1.msra.mxu0 0.0
        %3162 = vmatprep.subr.mxu0 0.0
        %3163 = vmatpush1.msra.mxu0 0.0
        %3164 = vmatprep.subr.mxu0 0.0
        %3165 = vmatpush1.msra.mxu0 0.0
        %3166 = vmatprep.subr.mxu0 0.0
        %3167 = vmatpush1.msra.mxu0 0.0
        %3168 = vmatprep.subr.mxu0 0.0
        %3169 = vmatpush1.msra.mxu0 0.0
        %3170 = vmatprep.subr.mxu0 0.0
        %3171 = vmatpush1.msra.mxu0 0.0
        %3172 = vmatprep.subr.mxu0 0.0
        %3173 = vmatpush1.msra.mxu0 0.0
        %3174 = vmatprep.subr.mxu0 0.0
        %3175 = vmatpush1.msra.mxu0 0.0
        %3176 = vmatprep.subr.mxu0 0.0
        %3177 = vmatpush1.msra.mxu0 0.0
        %3178 = vmatprep.subr.mxu0 0.0
        %3179 = vmatpush1.msra.mxu0 0.0
        %3180 = vmatprep.subr.mxu0 0.0
        %3181 = vmatpush1.msra.mxu0 0.0
        %3182 = vmatprep.subr.mxu0 0.0
        %3183 = vmatpush1.msra.mxu0 0.0
        %3184 = vmatprep.subr.mxu0 0.0
        %3185 = vmatpush1.msra.mxu0 0.0
        %3186 = vmatprep.mubr.f32.mxu0 0.0
        %3187 = vmatmul.mubr.f32.gmra.mrb[0].mxu0 %v2991
        %v3188 = vpop.f32.mrb[0].mxu0
        %v3189 = vadd.f32 %v3104, %v3188
        %v3190 = vpop.f32.mrb[0].mxu0
        %3191 = vmatprep.mubr.f32.mxu0 0.0
        %3192 = vmatmul.mubr.f32.gmra.mrb[0].mxu0 %v2992
        %v3193 = vpop.f32.mrb[0].mxu0
        %v3194 = vadd.f32 %v3109, %v3193
        %v3195 = vpop.f32.mrb[0].mxu0
        %3196 = vmatprep.mubr.f32.mxu0 0.0
        %3197 = vmatmul.mubr.f32.gmra.mrb[0].mxu0 %v2993
        %v3198 = vpop.f32.mrb[0].mxu0
        %v3199 = vadd.f32 %v3114, %v3198
        %v3200 = vpop.f32.mrb[0].mxu0
        %3201 = vmatprep.mubr.f32.mxu0 0.0
        %3202 = vmatmul.mubr.f32.gmra.mrb[0].mxu0 %v2994
        %v3203 = vpop.f32.mrb[0].mxu0
        %v3204 = vadd.f32 %v3119, %v3203
        %v3205 = vpop.f32.mrb[0].mxu0
        %3206 = vdwg.mxu0
        %s3207 = scalar_lea.vmem %s13, 256
        %v3208 = vld [vmem:[%s3207] sm:$0xff]
        %v3209 = vld [vmem:[%s3207 + $0x8] sm:$0xff]
        %v3210 = vld [vmem:[%s3207 + $0x10] sm:$0xff]
        %v3211 = vld [vmem:[%s3207 + $0x18] sm:$0xff]
        %v3212 = vld [vmem:[%s3207 + $0x20] sm:$0xff]
        %v3213 = vld [vmem:[%s3207 + $0x28] sm:$0xff]
        %v3214 = vld [vmem:[%s3207 + $0x30] sm:$0xff]
        %v3215 = vld [vmem:[%s3207 + $0x38] sm:$0xff]
        %v3216 = vld [vmem:[%s3207 + $0x40] sm:$0xff]
        %v3217 = vld [vmem:[%s3207 + $0x48] sm:$0xff]
        %v3218 = vld [vmem:[%s3207 + $0x50] sm:$0xff]
        %v3219 = vld [vmem:[%s3207 + $0x58] sm:$0xff]
        %v3220 = vld [vmem:[%s3207 + $0x60] sm:$0xff]
        %v3221 = vld [vmem:[%s3207 + $0x68] sm:$0xff]
        %v3222 = vld [vmem:[%s3207 + $0x70] sm:$0xff]
        %v3223 = vld [vmem:[%s3207 + $0x78] sm:$0xff]
        %v3224 = vld [vmem:[%s13] sm:$0xff]
        %v3225 = vld [vmem:[%s13 + $0x8] sm:$0xff]
        %v3226 = vld [vmem:[%s13 + $0x10] sm:$0xff]
        %v3227 = vld [vmem:[%s13 + $0x18] sm:$0xff]
        %v3228 = vld [vmem:[%s13 + $0x20] sm:$0xff]
        %v3229 = vld [vmem:[%s13 + $0x28] sm:$0xff]
        %v3230 = vld [vmem:[%s13 + $0x30] sm:$0xff]
        %v3231 = vld [vmem:[%s13 + $0x38] sm:$0xff]
        %v3232 = vld [vmem:[%s13 + $0x40] sm:$0xff]
        %v3233 = vld [vmem:[%s13 + $0x48] sm:$0xff]
        %v3234 = vld [vmem:[%s13 + $0x50] sm:$0xff]
        %v3235 = vld [vmem:[%s13 + $0x58] sm:$0xff]
        %v3236 = vld [vmem:[%s13 + $0x60] sm:$0xff]
        %v3237 = vld [vmem:[%s13 + $0x68] sm:$0xff]
        %v3238 = vld [vmem:[%s13 + $0x70] sm:$0xff]
        %v3239 = vld [vmem:[%s13 + $0x78] sm:$0xff]
        %3240 = vmatprep.subr.mxu0 0.0
        %3241 = vmatpush1.msra.mxu0 %v3224
        %3242 = vmatprep.subr.mxu0 0.0
        %3243 = vmatpush1.msra.mxu0 %v3225
        %3244 = vmatprep.subr.mxu0 0.0
        %3245 = vmatpush1.msra.mxu0 %v3226
        %3246 = vmatprep.subr.mxu0 0.0
        %3247 = vmatpush1.msra.mxu0 %v3227
        %3248 = vmatprep.subr.mxu0 0.0
        %3249 = vmatpush1.msra.mxu0 %v3228
        %3250 = vmatprep.subr.mxu0 0.0
        %3251 = vmatpush1.msra.mxu0 %v3229
        %3252 = vmatprep.subr.mxu0 0.0
        %3253 = vmatpush1.msra.mxu0 %v3230
        %3254 = vmatprep.subr.mxu0 0.0
        %3255 = vmatpush1.msra.mxu0 %v3231
        %3256 = vmatprep.subr.mxu0 0.0
        %3257 = vmatpush1.msra.mxu0 %v3232
        %3258 = vmatprep.subr.mxu0 0.0
        %3259 = vmatpush1.msra.mxu0 %v3233
        %3260 = vmatprep.subr.mxu0 0.0
        %3261 = vmatpush1.msra.mxu0 %v3234
        %3262 = vmatprep.subr.mxu0 0.0
        %3263 = vmatpush1.msra.mxu0 %v3235
        %3264 = vmatprep.subr.mxu0 0.0
        %3265 = vmatpush1.msra.mxu0 %v3236
        %3266 = vmatprep.subr.mxu0 0.0
        %3267 = vmatpush1.msra.mxu0 %v3237
        %3268 = vmatprep.subr.mxu0 0.0
        %3269 = vmatpush1.msra.mxu0 %v3238
        %3270 = vmatprep.subr.mxu0 0.0
        %3271 = vmatpush1.msra.mxu0 %v3239
        %3272 = vmatprep.subr.mxu0 0.0
        %3273 = vmatpush1.msra.mxu0 0.0
        %3274 = vmatprep.subr.mxu0 0.0
        %3275 = vmatpush1.msra.mxu0 0.0
        %3276 = vmatprep.subr.mxu0 0.0
        %3277 = vmatpush1.msra.mxu0 0.0
        %3278 = vmatprep.subr.mxu0 0.0
        %3279 = vmatpush1.msra.mxu0 0.0
        %3280 = vmatprep.subr.mxu0 0.0
        %3281 = vmatpush1.msra.mxu0 0.0
        %3282 = vmatprep.subr.mxu0 0.0
        %3283 = vmatpush1.msra.mxu0 0.0
        %3284 = vmatprep.subr.mxu0 0.0
        %3285 = vmatpush1.msra.mxu0 0.0
        %3286 = vmatprep.subr.mxu0 0.0
        %3287 = vmatpush1.msra.mxu0 0.0
        %3288 = vmatprep.subr.mxu0 0.0
        %3289 = vmatpush1.msra.mxu0 0.0
        %3290 = vmatprep.subr.mxu0 0.0
        %3291 = vmatpush1.msra.mxu0 0.0
        %3292 = vmatprep.subr.mxu0 0.0
        %3293 = vmatpush1.msra.mxu0 0.0
        %3294 = vmatprep.subr.mxu0 0.0
        %3295 = vmatpush1.msra.mxu0 0.0
        %3296 = vmatprep.subr.mxu0 0.0
        %3297 = vmatpush1.msra.mxu0 0.0
        %3298 = vmatprep.subr.mxu0 0.0
        %3299 = vmatpush1.msra.mxu0 0.0
        %3300 = vmatprep.subr.mxu0 0.0
        %3301 = vmatpush1.msra.mxu0 0.0
        %3302 = vmatprep.subr.mxu0 0.0
        %3303 = vmatpush1.msra.mxu0 0.0
        %3304 = vmatprep.mubr.f32.mxu0 0.0
        %3305 = vmatmul.mubr.f32.gmra.mrb[0].mxu0 %v2999
        %v3306 = vpop.f32.mrb[0].mxu0
        %v3307 = vadd.f32 0.0, %v3306
        %v3308 = vpop.f32.mrb[0].mxu0
        %3309 = vmatprep.mubr.f32.mxu0 0.0
        %3310 = vmatmul.mubr.f32.gmra.mrb[0].mxu0 %v3000
        %v3311 = vpop.f32.mrb[0].mxu0
        %v3312 = vadd.f32 0.0, %v3311
        %v3313 = vpop.f32.mrb[0].mxu0
        %3314 = vmatprep.mubr.f32.mxu0 0.0
        %3315 = vmatmul.mubr.f32.gmra.mrb[0].mxu0 %v3001
        %v3316 = vpop.f32.mrb[0].mxu0
        %v3317 = vadd.f32 0.0, %v3316
        %v3318 = vpop.f32.mrb[0].mxu0
        %3319 = vmatprep.mubr.f32.mxu0 0.0
        %3320 = vmatmul.mubr.f32.gmra.mrb[0].mxu0 %v3002
        %v3321 = vpop.f32.mrb[0].mxu0
        %v3322 = vadd.f32 0.0, %v3321
        %v3323 = vpop.f32.mrb[0].mxu0
        %3324 = vdwg.mxu0
        %3325 = vmatprep.subr.mxu0 0.0
        %3326 = vmatpush1.msra.mxu0 %v3208
        %3327 = vmatprep.subr.mxu0 0.0
        %3328 = vmatpush1.msra.mxu0 %v3209
        %3329 = vmatprep.subr.mxu0 0.0
        %3330 = vmatpush1.msra.mxu0 %v3210
        %3331 = vmatprep.subr.mxu0 0.0
        %3332 = vmatpush1.msra.mxu0 %v3211
        %3333 = vmatprep.subr.mxu0 0.0
        %3334 = vmatpush1.msra.mxu0 %v3212
        %3335 = vmatprep.subr.mxu0 0.0
        %3336 = vmatpush1.msra.mxu0 %v3213
        %3337 = vmatprep.subr.mxu0 0.0
        %3338 = vmatpush1.msra.mxu0 %v3214
        %3339 = vmatprep.subr.mxu0 0.0
        %3340 = vmatpush1.msra.mxu0 %v3215
        %3341 = vmatprep.subr.mxu0 0.0
        %3342 = vmatpush1.msra.mxu0 %v3216
        %3343 = vmatprep.subr.mxu0 0.0
        %3344 = vmatpush1.msra.mxu0 %v3217
        %3345 = vmatprep.subr.mxu0 0.0
        %3346 = vmatpush1.msra.mxu0 %v3218
        %3347 = vmatprep.subr.mxu0 0.0
        %3348 = vmatpush1.msra.mxu0 %v3219
        %3349 = vmatprep.subr.mxu0 0.0
        %3350 = vmatpush1.msra.mxu0 %v3220
        %3351 = vmatprep.subr.mxu0 0.0
        %3352 = vmatpush1.msra.mxu0 %v3221
        %3353 = vmatprep.subr.mxu0 0.0
        %3354 = vmatpush1.msra.mxu0 %v3222
        %3355 = vmatprep.subr.mxu0 0.0
        %3356 = vmatpush1.msra.mxu0 %v3223
        %3357 = vmatprep.subr.mxu0 0.0
        %3358 = vmatpush1.msra.mxu0 0.0
        %3359 = vmatprep.subr.mxu0 0.0
        %3360 = vmatpush1.msra.mxu0 0.0
        %3361 = vmatprep.subr.mxu0 0.0
        %3362 = vmatpush1.msra.mxu0 0.0
        %3363 = vmatprep.subr.mxu0 0.0
        %3364 = vmatpush1.msra.mxu0 0.0
        %3365 = vmatprep.subr.mxu0 0.0
        %3366 = vmatpush1.msra.mxu0 0.0
        %3367 = vmatprep.subr.mxu0 0.0
        %3368 = vmatpush1.msra.mxu0 0.0
        %3369 = vmatprep.subr.mxu0 0.0
        %3370 = vmatpush1.msra.mxu0 0.0
        %3371 = vmatprep.subr.mxu0 0.0
        %3372 = vmatpush1.msra.mxu0 0.0
        %3373 = vmatprep.subr.mxu0 0.0
        %3374 = vmatpush1.msra.mxu0 0.0
        %3375 = vmatprep.subr.mxu0 0.0
        %3376 = vmatpush1.msra.mxu0 0.0
        %3377 = vmatprep.subr.mxu0 0.0
        %3378 = vmatpush1.msra.mxu0 0.0
        %3379 = vmatprep.subr.mxu0 0.0
        %3380 = vmatpush1.msra.mxu0 0.0
        %3381 = vmatprep.subr.mxu0 0.0
        %3382 = vmatpush1.msra.mxu0 0.0
        %3383 = vmatprep.subr.mxu0 0.0
        %3384 = vmatpush1.msra.mxu0 0.0
        %3385 = vmatprep.subr.mxu0 0.0
        %3386 = vmatpush1.msra.mxu0 0.0
        %3387 = vmatprep.subr.mxu0 0.0
        %3388 = vmatpush1.msra.mxu0 0.0
        %3389 = vmatprep.mubr.f32.mxu0 0.0
        %3390 = vmatmul.mubr.f32.gmra.mrb[0].mxu0 %v2991
        %v3391 = vpop.f32.mrb[0].mxu0
        %v3392 = vadd.f32 %v3307, %v3391
        %v3393 = vpop.f32.mrb[0].mxu0
        %3394 = vmatprep.mubr.f32.mxu0 0.0
        %3395 = vmatmul.mubr.f32.gmra.mrb[0].mxu0 %v2992
        %v3396 = vpop.f32.mrb[0].mxu0
        %v3397 = vadd.f32 %v3312, %v3396
        %v3398 = vpop.f32.mrb[0].mxu0
        %3399 = vmatprep.mubr.f32.mxu0 0.0
        %3400 = vmatmul.mubr.f32.gmra.mrb[0].mxu0 %v2993
        %v3401 = vpop.f32.mrb[0].mxu0
        %v3402 = vadd.f32 %v3317, %v3401
        %v3403 = vpop.f32.mrb[0].mxu0
        %3404 = vmatprep.mubr.f32.mxu0 0.0
        %3405 = vmatmul.mubr.f32.gmra.mrb[0].mxu0 %v2994
        %v3406 = vpop.f32.mrb[0].mxu0
        %v3407 = vadd.f32 %v3322, %v3406
        %v3408 = vpop.f32.mrb[0].mxu0
        %3409 = vdwg.mxu0
        %v3411 = vlaneseq
        %v3412 = vshrl.u32 %v3411, 7
        %v3413 = vsub.s32 0, %v3412
        %v3414 = vrot.slane %v2990, %v3413
        %v3416 = vadd.f32 %v3189, %v3414
        %v3417 = vadd.f32 %v3194, %v3414
        %v3418 = vadd.f32 %v3199, %v3414
        %v3419 = vadd.f32 %v3204, %v3414
        %v3420 = vmax.f32 %v3416, 0.0
        %v3421 = vmax.f32 %v3417, 0.0
        %v3422 = vmax.f32 %v3418, 0.0
        %v3423 = vmax.f32 %v3419, 0.0
        %v3424 = vadd.f32 %v3392, %v3414
        %v3425 = vadd.f32 %v3397, %v3414
        %v3426 = vadd.f32 %v3402, %v3414
        %v3427 = vadd.f32 %v3407, %v3414
        %v3428 = vmax.f32 %v3424, 0.0
        %v3429 = vmax.f32 %v3425, 0.0
        %v3430 = vmax.f32 %v3426, 0.0
        %v3431 = vmax.f32 %v3427, 0.0
        %v3432 = vadd.s32 %v1176, 32
        %v3433 = vadd.s32 %v1176, 40
        %v3434 = vadd.s32 %v1176, 48
        %v3435 = vadd.s32 %v1176, 56
        %vm3436 = vcmp.eq.s32.totalorder %v3432, %v1179
        %vm3437 = vcmp.eq.s32.totalorder %v3433, %v1179
        %vm3438 = vcmp.eq.s32.totalorder %v3434, %v1179
        %vm3439 = vcmp.eq.s32.totalorder %v3435, %v1179
        %v3440 = vsel %vm3436, 1, 0
        %v3441 = vsel %vm3437, 1, 0
        %v3442 = vsel %vm3438, 1, 0
        %v3443 = vsel %vm3439, 1, 0
        %v3444 = vcvt.s32.f32 %v3440
        %v3445 = vcvt.s32.f32 %v3441
        %v3446 = vcvt.s32.f32 %v3442
        %v3447 = vcvt.s32.f32 %v3443
        %vm3448 = vcmp.eq.s32.totalorder %v3432, %v1183
        %vm3449 = vcmp.eq.s32.totalorder %v3433, %v1183
        %vm3450 = vcmp.eq.s32.totalorder %v3434, %v1183
        %vm3451 = vcmp.eq.s32.totalorder %v3435, %v1183
        %v3452 = vsel %vm3448, 1, 0
        %v3453 = vsel %vm3449, 1, 0
        %v3454 = vsel %vm3450, 1, 0
        %v3455 = vsel %vm3451, 1, 0
        %v3456 = vcvt.s32.f32 %v3452
        %v3457 = vcvt.s32.f32 %v3453
        %v3458 = vcvt.s32.f32 %v3454
        %v3459 = vcvt.s32.f32 %v3455
        %vm3460 = vcmask 261120
        %v3461 = vsel %vm3460, %v1186, 0
        %v3463 = vsel %vm3460, %v2227, 0
        %v3465 = vsel %vm3460, %v2793, 0
        %v3467 = vsel %vm3460, %v2794, 0
        %v3470 = vsel %vm3460, %v3456, 0
        %v3473 = vsel %vm3460, %v3457, 0
        %v3476 = vsel %vm3460, %v3458, 0
        %v3479 = vsel %vm3460, %v3459, 0
        %3481 = vmatprep.subr.mxu0 0.0
        %3482 = vmatpush1.msra.mxu0 %v3428
        %3483 = vmatprep.subr.mxu0 0.0
        %3484 = vmatpush1.msra.mxu0 %v3429
        %3485 = vmatprep.subr.mxu0 0.0
        %3486 = vmatpush1.msra.mxu0 %v3430
        %3487 = vmatprep.subr.mxu0 0.0
        %3488 = vmatpush1.msra.mxu0 %v3431
        %3489 = vmatprep.subr.mxu0 0.0
        %3490 = vmatpush1.msra.mxu0 0.0
        %3491 = vmatprep.subr.mxu0 0.0
        %3492 = vmatpush1.msra.mxu0 0.0
        %3493 = vmatprep.subr.mxu0 0.0
        %3494 = vmatpush1.msra.mxu0 0.0
        %3495 = vmatprep.subr.mxu0 0.0
        %3496 = vmatpush1.msra.mxu0 0.0
        %3497 = vmatprep.subr.mxu0 0.0
        %3498 = vmatpush1.msra.mxu0 0.0
        %3499 = vmatprep.subr.mxu0 0.0
        %3500 = vmatpush1.msra.mxu0 0.0
        %3501 = vmatprep.subr.mxu0 0.0
        %3502 = vmatpush1.msra.mxu0 0.0
        %3503 = vmatprep.subr.mxu0 0.0
        %3504 = vmatpush1.msra.mxu0 0.0
        %3505 = vmatprep.subr.mxu0 0.0
        %3506 = vmatpush1.msra.mxu0 0.0
        %3507 = vmatprep.subr.mxu0 0.0
        %3508 = vmatpush1.msra.mxu0 0.0
        %3509 = vmatprep.subr.mxu0 0.0
        %3510 = vmatpush1.msra.mxu0 0.0
        %3511 = vmatprep.subr.mxu0 0.0
        %3512 = vmatpush1.msra.mxu0 0.0
        %3513 = vmatprep.subr.mxu0 0.0
        %3514 = vmatpush1.msra.mxu0 0.0
        %3515 = vmatprep.subr.mxu0 0.0
        %3516 = vmatpush1.msra.mxu0 0.0
        %3517 = vmatprep.subr.mxu0 0.0
        %3518 = vmatpush1.msra.mxu0 0.0
        %3519 = vmatprep.subr.mxu0 0.0
        %3520 = vmatpush1.msra.mxu0 0.0
        %3521 = vmatprep.subr.mxu0 0.0
        %3522 = vmatpush1.msra.mxu0 0.0
        %3523 = vmatprep.subr.mxu0 0.0
        %3524 = vmatpush1.msra.mxu0 0.0
        %3525 = vmatprep.subr.mxu0 0.0
        %3526 = vmatpush1.msra.mxu0 0.0
        %3527 = vmatprep.subr.mxu0 0.0
        %3528 = vmatpush1.msra.mxu0 0.0
        %3529 = vmatprep.subr.mxu0 0.0
        %3530 = vmatpush1.msra.mxu0 0.0
        %3531 = vmatprep.subr.mxu0 0.0
        %3532 = vmatpush1.msra.mxu0 0.0
        %3533 = vmatprep.subr.mxu0 0.0
        %3534 = vmatpush1.msra.mxu0 0.0
        %3535 = vmatprep.subr.mxu0 0.0
        %3536 = vmatpush1.msra.mxu0 0.0
        %3537 = vmatprep.subr.mxu0 0.0
        %3538 = vmatpush1.msra.mxu0 0.0
        %3539 = vmatprep.subr.mxu0 0.0
        %3540 = vmatpush1.msra.mxu0 0.0
        %3541 = vmatprep.subr.mxu0 0.0
        %3542 = vmatpush1.msra.mxu0 0.0
        %3543 = vmatprep.subr.mxu0 0.0
        %3544 = vmatpush1.msra.mxu0 0.0
        %3545 = vmatprep.mubr.f32.mxu0 0.0
        %3546 = vmatmul.mubr.f32.gmra.mrb[0].mxu0 %v3461
        %v3547 = vpop.f32.mrb[0].mxu0
        %v3548 = vadd.f32 0.0, %v3547
        %v3549 = vpop.f32.mrb[0].mxu0
        %3550 = vmatprep.mubr.f32.mxu0 0.0
        %3551 = vmatmul.mubr.f32.gmra.mrb[0].mxu0 %v3463
        %v3552 = vpop.f32.mrb[0].mxu0
        %v3553 = vadd.f32 0.0, %v3552
        %v3554 = vpop.f32.mrb[0].mxu0
        %3555 = vmatprep.mubr.f32.mxu0 0.0
        %3556 = vmatmul.mubr.f32.gmra.mrb[0].mxu0 %v3465
        %v3557 = vpop.f32.mrb[0].mxu0
        %v3558 = vadd.f32 0.0, %v3557
        %v3559 = vpop.f32.mrb[0].mxu0
        %3560 = vmatprep.mubr.f32.mxu0 0.0
        %3561 = vmatmul.mubr.f32.gmra.mrb[0].mxu0 %v3467
        %v3562 = vpop.f32.mrb[0].mxu0
        %v3563 = vadd.f32 0.0, %v3562
        %v3564 = vpop.f32.mrb[0].mxu0
        %3565 = vmatprep.mubr.f32.mxu0 0.0
        %3566 = vmatmul.mubr.f32.gmra.mrb[0].mxu0 %v3470
        %v3567 = vpop.f32.mrb[0].mxu0
        %v3568 = vadd.f32 0.0, %v3567
        %v3569 = vpop.f32.mrb[0].mxu0
        %3570 = vmatprep.mubr.f32.mxu0 0.0
        %3571 = vmatmul.mubr.f32.gmra.mrb[0].mxu0 %v3473
        %v3572 = vpop.f32.mrb[0].mxu0
        %v3573 = vadd.f32 0.0, %v3572
        %v3574 = vpop.f32.mrb[0].mxu0
        %3575 = vmatprep.mubr.f32.mxu0 0.0
        %3576 = vmatmul.mubr.f32.gmra.mrb[0].mxu0 %v3476
        %v3577 = vpop.f32.mrb[0].mxu0
        %v3578 = vadd.f32 0.0, %v3577
        %v3579 = vpop.f32.mrb[0].mxu0
        %3580 = vmatprep.mubr.f32.mxu0 0.0
        %3581 = vmatmul.mubr.f32.gmra.mrb[0].mxu0 %v3479
        %v3582 = vpop.f32.mrb[0].mxu0
        %v3583 = vadd.f32 0.0, %v3582
        %v3584 = vpop.f32.mrb[0].mxu0
        %3585 = vdwg.mxu0
        %v3586 = vsel %vm3460, %v1182, 0
        %v3588 = vsel %vm3460, %v2224, 0
        %v3590 = vsel %vm3460, %v2787, 0
        %v3592 = vsel %vm3460, %v2788, 0
        %v3595 = vsel %vm3460, %v3444, 0
        %v3598 = vsel %vm3460, %v3445, 0
        %v3601 = vsel %vm3460, %v3446, 0
        %v3604 = vsel %vm3460, %v3447, 0
        %3606 = vmatprep.subr.mxu0 0.0
        %3607 = vmatpush1.msra.mxu0 %v3420
        %3608 = vmatprep.subr.mxu0 0.0
        %3609 = vmatpush1.msra.mxu0 %v3421
        %3610 = vmatprep.subr.mxu0 0.0
        %3611 = vmatpush1.msra.mxu0 %v3422
        %3612 = vmatprep.subr.mxu0 0.0
        %3613 = vmatpush1.msra.mxu0 %v3423
        %3614 = vmatprep.subr.mxu0 0.0
        %3615 = vmatpush1.msra.mxu0 0.0
        %3616 = vmatprep.subr.mxu0 0.0
        %3617 = vmatpush1.msra.mxu0 0.0
        %3618 = vmatprep.subr.mxu0 0.0
        %3619 = vmatpush1.msra.mxu0 0.0
        %3620 = vmatprep.subr.mxu0 0.0
        %3621 = vmatpush1.msra.mxu0 0.0
        %3622 = vmatprep.subr.mxu0 0.0
        %3623 = vmatpush1.msra.mxu0 0.0
        %3624 = vmatprep.subr.mxu0 0.0
        %3625 = vmatpush1.msra.mxu0 0.0
        %3626 = vmatprep.subr.mxu0 0.0
        %3627 = vmatpush1.msra.mxu0 0.0
        %3628 = vmatprep.subr.mxu0 0.0
        %3629 = vmatpush1.msra.mxu0 0.0
        %3630 = vmatprep.subr.mxu0 0.0
        %3631 = vmatpush1.msra.mxu0 0.0
        %3632 = vmatprep.subr.mxu0 0.0
        %3633 = vmatpush1.msra.mxu0 0.0
        %3634 = vmatprep.subr.mxu0 0.0
        %3635 = vmatpush1.msra.mxu0 0.0
        %3636 = vmatprep.subr.mxu0 0.0
        %3637 = vmatpush1.msra.mxu0 0.0
        %3638 = vmatprep.subr.mxu0 0.0
        %3639 = vmatpush1.msra.mxu0 0.0
        %3640 = vmatprep.subr.mxu0 0.0
        %3641 = vmatpush1.msra.mxu0 0.0
        %3642 = vmatprep.subr.mxu0 0.0
        %3643 = vmatpush1.msra.mxu0 0.0
        %3644 = vmatprep.subr.mxu0 0.0
        %3645 = vmatpush1.msra.mxu0 0.0
        %3646 = vmatprep.subr.mxu0 0.0
        %3647 = vmatpush1.msra.mxu0 0.0
        %3648 = vmatprep.subr.mxu0 0.0
        %3649 = vmatpush1.msra.mxu0 0.0
        %3650 = vmatprep.subr.mxu0 0.0
        %3651 = vmatpush1.msra.mxu0 0.0
        %3652 = vmatprep.subr.mxu0 0.0
        %3653 = vmatpush1.msra.mxu0 0.0
        %3654 = vmatprep.subr.mxu0 0.0
        %3655 = vmatpush1.msra.mxu0 0.0
        %3656 = vmatprep.subr.mxu0 0.0
        %3657 = vmatpush1.msra.mxu0 0.0
        %3658 = vmatprep.subr.mxu0 0.0
        %3659 = vmatpush1.msra.mxu0 0.0
        %3660 = vmatprep.subr.mxu0 0.0
        %3661 = vmatpush1.msra.mxu0 0.0
        %3662 = vmatprep.subr.mxu0 0.0
        %3663 = vmatpush1.msra.mxu0 0.0
        %3664 = vmatprep.subr.mxu0 0.0
        %3665 = vmatpush1.msra.mxu0 0.0
        %3666 = vmatprep.subr.mxu0 0.0
        %3667 = vmatpush1.msra.mxu0 0.0
        %3668 = vmatprep.subr.mxu0 0.0
        %3669 = vmatpush1.msra.mxu0 0.0
        %3670 = vmatprep.mubr.f32.mxu0 0.0
        %3671 = vmatmul.mubr.f32.gmra.mrb[0].mxu0 %v3586
        %v3672 = vpop.f32.mrb[0].mxu0
        %v3673 = vadd.f32 %v3548, %v3672
        %v3674 = vpop.f32.mrb[0].mxu0
        %3675 = vmatprep.mubr.f32.mxu0 0.0
        %3676 = vmatmul.mubr.f32.gmra.mrb[0].mxu0 %v3588
        %v3677 = vpop.f32.mrb[0].mxu0
        %v3678 = vadd.f32 %v3553, %v3677
        %v3679 = vpop.f32.mrb[0].mxu0
        %3680 = vmatprep.mubr.f32.mxu0 0.0
        %3681 = vmatmul.mubr.f32.gmra.mrb[0].mxu0 %v3590
        %v3682 = vpop.f32.mrb[0].mxu0
        %v3683 = vadd.f32 %v3558, %v3682
        %v3684 = vpop.f32.mrb[0].mxu0
        %3685 = vmatprep.mubr.f32.mxu0 0.0
        %3686 = vmatmul.mubr.f32.gmra.mrb[0].mxu0 %v3592
        %v3687 = vpop.f32.mrb[0].mxu0
        %v3688 = vadd.f32 %v3563, %v3687
        %v3689 = vpop.f32.mrb[0].mxu0
        %3690 = vmatprep.mubr.f32.mxu0 0.0
        %3691 = vmatmul.mubr.f32.gmra.mrb[0].mxu0 %v3595
        %v3692 = vpop.f32.mrb[0].mxu0
        %v3693 = vadd.f32 %v3568, %v3692
        %v3694 = vpop.f32.mrb[0].mxu0
        %3695 = vmatprep.mubr.f32.mxu0 0.0
        %3696 = vmatmul.mubr.f32.gmra.mrb[0].mxu0 %v3598
        %v3697 = vpop.f32.mrb[0].mxu0
        %v3698 = vadd.f32 %v3573, %v3697
        %v3699 = vpop.f32.mrb[0].mxu0
        %3700 = vmatprep.mubr.f32.mxu0 0.0
        %3701 = vmatmul.mubr.f32.gmra.mrb[0].mxu0 %v3601
        %v3702 = vpop.f32.mrb[0].mxu0
        %v3703 = vadd.f32 %v3578, %v3702
        %v3704 = vpop.f32.mrb[0].mxu0
        %3705 = vmatprep.mubr.f32.mxu0 0.0
        %3706 = vmatmul.mubr.f32.gmra.mrb[0].mxu0 %v3604
        %v3707 = vpop.f32.mrb[0].mxu0
        %v3708 = vadd.f32 %v3583, %v3707
        %v3709 = vpop.f32.mrb[0].mxu0
        %3710 = vdwg.mxu0
        %3711 = vst.msk [vmem:[%s542] sm:$0xff] %vm556, %v3673
        %3712 = vst.msk [vmem:[%s542 + $0x8] sm:$0xff] %vm556, %v3678
        %3713 = vst.msk [vmem:[%s542 + $0x10] sm:$0xff] %vm556, %v3683
        %3714 = vst.msk [vmem:[%s542 + $0x18] sm:$0xff] %vm556, %v3688
        %3715 = vst.msk [vmem:[%s542 + $0x20] sm:$0xff] %vm556, %v3693
        %3716 = vst.msk [vmem:[%s542 + $0x28] sm:$0xff] %vm556, %v3698
        %3717 = vst.msk [vmem:[%s542 + $0x30] sm:$0xff] %vm556, %v3703
        %3718 = vst.msk [vmem:[%s542 + $0x38] sm:$0xff] %vm556, %v3708
        %s3719 = sand.u32 %s360, 1
        %s3720 = scalar_lea.sflag [#allocation9], %s3719
        %s3721 = sand.u32 %s360, 1
        %s3722 = smul.addr %s3721, 64
        %s3723 = scalar_lea.vmem [#allocation15], %s3722
        // Predicated region
        $region97: #{decoder_forward.1} parent=79 // pred_check
          %p3724 = pneg %p370
        $region98: #{decoder_forward.1} parent=79 // pred_check_branch
          %3726 = sbr.rel (%p3724) target = $region100
        $region99: #{decoder_forward.1} parent=79 // pred_region
          %s3728 = ssub.s32 1024, 1024
          %3729 = vsyncadd %s3720, %s3728
          %s3730 = smul.addr %s32, 8
          %s3731 = smul.addr %s3730, 128
          %s3732 = scalar_lea.hbm %s15, %s3731
          %s3733 = sshll.u32 %s3723, 4
          %s3734 = int_to_ptr.vmem [resolvable:$true] %s3733
          %3739 = dma.vmem_to_hbm [thread:$0]  %s3734, 1024, %s3732, %s3720, 128, 128, 8
        $region100: #{decoder_forward.1} parent=79 // pred_fallthru
          _
      $region80: #{decoder_forward.1} parent=5 // pred_fallthru
        _
      %p3740 = scmp.le.s32.totalorder 2, %s27
      // Predicated region
      $region101: #{decoder_forward.1} parent=5 // pred_check
        %p3741 = pneg %p3740
      $region102: #{decoder_forward.1} parent=5 // pred_check_branch
        %3743 = sbr.rel (%p3741) target = $region104
      $region103: #{decoder_forward.1} parent=5 // pred_region
        %s3744 = ssub.s32 %s27, 2
        // Predicated region
        $region105: #{decoder_forward.1} parent=103 // pred_check
          %p3745 = pneg %p376
        $region106: #{decoder_forward.1} parent=103 // pred_check_branch
          %3747 = sbr.rel (%p3745) target = $region108
        $region107: #{decoder_forward.1} parent=103 // pred_region
          %s3748 = sand.u32 %s361, 1
          %s3749 = scalar_lea.sflag [#allocation9], %s3748
          %s3750 = sand.u32 %s361, 1
          %s3751 = smul.addr %s3750, 64
          %s3752 = scalar_lea.vmem [#allocation15], %s3751
          %3753 = dma.done %s3749, 1024
        $region108: #{decoder_forward.1} parent=103 // pred_fallthru
          _
      $region104: #{decoder_forward.1} parent=5 // pred_fallthru
        _
    $region6: #{decoder_forward.1} parent=1 // loop_footer
      %s31 = sadd.s32 1, %s27
    $region7: #{decoder_forward.1} parent=1 // loop_footer_branch
      %26 = sbr.rel target = $region3
    $region8: #{decoder_forward.1} parent=1 // loop_exit
      _
    %3754 = vsyncpa [#allocation8], 1
    %s3755 = scalar_lea.sflag [#allocation8], 1
    %3756 = vsyncpa %s3755, 1
    %3757 = vsyncpa [#allocation11], 1
    %3758 = vsyncpa [#allocation14], 1
    %3759 = vsyncpa [#allocation9], 1
    %s3760 = scalar_lea.sflag [#allocation9], 1
    %3761 = vsyncpa %s3760, 1

</llo_original>
